<compile_context>
chip_gen: v7x
topology: tpu7x:2x2x1
jax: 0.10.0
libtpu: 0.0.40
codegen_flags: <defaults>
</compile_context>

<pallas_src>
import functools

import numpy as np
import jax
import jax.numpy as jnp
from jax.experimental import pallas as pl
from jax.experimental.pallas import tpu as pltpu

WINDOW_SIZE = 11
SIGMA = 1.5
C1 = 0.01 ** 2
C2 = 0.03 ** 2


def _gaussian_1d(window_size=WINDOW_SIZE, sigma=SIGMA):
    x = np.arange(window_size, dtype=np.float64)
    g = np.exp(-((x - window_size // 2) ** 2) / (2.0 * sigma ** 2))
    return (g / g.sum()).astype(np.float32)


def _blur_matrix(size):
    # B[i, j] = g[j - i + pad]; zeros outside => exactly F.conv2d zero padding.
    g = _gaussian_1d()
    pad = WINDOW_SIZE // 2
    B = np.zeros((size, size), dtype=np.float32)
    for i in range(size):
        for k in range(WINDOW_SIZE):
            j = i + k - pad
            if 0 <= j < size:
                B[i, j] = g[k]
    return B


def _l_recon_kernel(x1_ref, x2_ref, bh_ref, bw_ref, out_ref, stk_ref, *, inv_count):
    step = pl.program_id(0)
    last = pl.num_programs(0) - 1

    @pl.when(step == 0)
    def _init():
        out_ref[0, 0] = jnp.float32(0.0)   # sum |x1 - x2|
        out_ref[0, 1] = jnp.float32(0.0)   # sum ssim_map

    x1 = x1_ref[...].astype(jnp.float32)   # (TN, H, W)
    x2 = x2_ref[...].astype(jnp.float32)   # (TN, H, W)
    bh = bh_ref[...]                       # (H, H) banded Gaussian
    bw = bw_ref[...]                       # (W, W) banded Gaussian
    tn = x1.shape[0]

    # ----- L1 partial sum -----
    l1_sum = jnp.sum(jnp.abs(x1 - x2))

    # ----- stack the 5 blur operands -> one batched MXU pass -----
    stk_ref[0 * tn:1 * tn] = x1
    stk_ref[1 * tn:2 * tn] = x2
    stk_ref[2 * tn:3 * tn] = x1 * x1
    stk_ref[3 * tn:4 * tn] = x2 * x2
    stk_ref[4 * tn:5 * tn] = x1 * x2
    stacked = stk_ref[...]                 # (5*TN, H, W)

    # ----- separable blur: lane-minor contractions, XLU transposes -----
    # contract W (last dim): t[n, h, l] = sum_k stacked[n, h, k] * bw[l, k]
    t = jax.lax.dot_general(stacked, bw, (((2,), (1,)), ((), ())),
                            preferred_element_type=jnp.float32)      # (5TN,H,W)
    tt = jnp.transpose(t, (0, 2, 1))                                 # (5TN,W,H)
    # contract H (now last dim): u[n, l, i] = sum_j tt[n, l, j] * bh[i, j]
    u = jax.lax.dot_general(tt, bh, (((2,), (1,)), ((), ())),
                            preferred_element_type=jnp.float32)      # (5TN,W,H)
    blurred = jnp.transpose(u, (0, 2, 1))                            # (5TN,H,W)

    mu1 = blurred[0 * tn:1 * tn]
    mu2 = blurred[1 * tn:2 * tn]
    e11 = blurred[2 * tn:3 * tn]
    e22 = blurred[3 * tn:4 * tn]
    e12 = blurred[4 * tn:5 * tn]

    mu1_mu2 = mu1 * mu2
    mu1_sq = mu1 * mu1
    mu2_sq = mu2 * mu2

    num = (2.0 * mu1_mu2 + C1) * (2.0 * (e12 - mu1_mu2) + C2)
    den = (mu1_sq + mu2_sq + C1) * ((e11 - mu1_sq) + (e22 - mu2_sq) + C2)
    ssim_sum = jnp.sum(num * pl.reciprocal(den, approx=False))

    out_ref[0, 0] = out_ref[0, 0] + l1_sum
    out_ref[0, 1] = out_ref[0, 1] + ssim_sum

    @pl.when(step == last)
    def _finalize():
        out_ref[0, 0] = out_ref[0, 0] * inv_count
        out_ref[0, 1] = jnp.float32(1.0) - out_ref[0, 1] * inv_count


def _choose_tile_n(N, H, W, compute_budget_bytes=20 << 20):
    """Largest divisor of N whose tile keeps ~24 live (TN,H,W) f32 buffers
    (inputs x2 double-buffered, 5-way stacked operands, blur temps/transposes,
    SSIM maps) under the budget -> safe on v7x's 64 MiB VMEM."""
    per_img = H * W * 4
    max_tn = max(1, compute_budget_bytes // (24 * per_img))
    tn = 1
    for d in range(1, min(N, max_tn) + 1):
        if N % d == 0:
            tn = d
    return tn


def l_recon(r_low, high):
    """Returns (L1, L2) exactly like L_recon.forward (scalars, float32)."""
    B, C, H, W = r_low.shape
    N = B * C
    x1 = r_low.reshape(N, H, W)
    x2 = high.reshape(N, H, W)
    bh = jnp.asarray(_blur_matrix(H))
    bw = jnp.asarray(_blur_matrix(W))

    tn = _choose_tile_n(N, H, W)
    grid = (N // tn,)
    kernel = functools.partial(_l_recon_kernel,
                               inv_count=float(1.0 / (N * H * W)))

    out = pl.pallas_call(
        kernel,
        out_shape=jax.ShapeDtypeStruct((1, 2), jnp.float32),
        grid_spec=pltpu.PrefetchScalarGridSpec(
            num_scalar_prefetch=0,
            grid=grid,
            in_specs=[
                pl.BlockSpec((tn, H, W), lambda i: (i, 0, 0)),   # x1 tile
                pl.BlockSpec((tn, H, W), lambda i: (i, 0, 0)),   # x2 tile
                pl.BlockSpec((H, H), lambda i: (0, 0)),          # bh resident
                pl.BlockSpec((W, W), lambda i: (0, 0)),          # bw resident
            ],
            out_specs=pl.BlockSpec((1, 2), lambda i: (0, 0),
                                   memory_space=pltpu.MemorySpace.SMEM),
            scratch_shapes=[pltpu.VMEM((5 * tn, H, W), jnp.float32)],
        ),
        compiler_params=pltpu.CompilerParams(
            dimension_semantics=("arbitrary",),        # grid axis carries accumulator
            vmem_limit_bytes=48 * 1024 * 1024,
        ),
    )(x1, x2, bh, bw)
    return out[0, 0], out[0, 1]


def _l_recon_ref(r_low, high):
    """Pure-JAX reference replicating pytorch_ssim.SSIM (size_average=True)."""
    B, C, H, W = r_low.shape
    g = _gaussian_1d()
    w2d = np.outer(g, g).astype(np.float32)
    kernel = jnp.asarray(np.tile(w2d[None, None], (C, 1, 1, 1)))  # (C,1,11,11)

    def blur(x):
        return jax.lax.conv_general_dilated(
            x, kernel, window_strides=(1, 1), padding=[(5, 5), (5, 5)],
            dimension_numbers=('NCHW', 'OIHW', 'NCHW'), feature_group_count=C)

    x1 = r_low.astype(jnp.float32)
    x2 = high.astype(jnp.float32)
    l1 = jnp.mean(jnp.abs(x1 - x2))
    mu1, mu2 = blur(x1), blur(x2)
    mu1_sq, mu2_sq, mu1_mu2 = mu1 * mu1, mu2 * mu2, mu1 * mu2
    s1 = blur(x1 * x1) - mu1_sq
    s2 = blur(x2 * x2) - mu2_sq
    s12 = blur(x1 * x2) - mu1_mu2
    ssim_map = ((2 * mu1_mu2 + C1) * (2 * s12 + C2)) / \
               ((mu1_sq + mu2_sq + C1) * (s1 + s2 + C2))
    return l1, 1.0 - jnp.mean(ssim_map)


if __name__ == "__main__":
    key = jax.random.PRNGKey(0)
    k1, k2 = jax.random.split(key)
    B, C, H, W = 2, 4, 16, 16
    r_low = jax.random.uniform(k1, (B, C, H, W), dtype=jnp.float32)
    high = jax.random.uniform(k2, (B, C, H, W), dtype=jnp.float32)

    l1, l2 = l_recon(r_low, high)
    jax.block_until_ready((l1, l2))

    l1_ref, l2_ref = _l_recon_ref(r_low, high)
    np.testing.assert_allclose(np.asarray(l1), np.asarray(l1_ref), rtol=1e-5, atol=1e-5)
    np.testing.assert_allclose(np.asarray(l2), np.asarray(l2_ref), rtol=1e-5, atol=1e-5)

    print("KERNEL_OK")
</pallas_src>

<mosaic_0001>
module attributes {stable_mosaic.version = 11 : i64} {
  func.func @_l_recon_kernel(%arg0: i32, %arg1: memref<8x16x16xf32, #tpu.memory_space<vmem>>, %arg2: memref<8x16x16xf32, #tpu.memory_space<vmem>>, %arg3: memref<16x16xf32, #tpu.memory_space<vmem>>, %arg4: memref<16x16xf32, #tpu.memory_space<vmem>>, %arg5: memref<1x2xf32, #tpu.memory_space<smem>>, %arg6: memref<40x16x16xf32, #tpu.memory_space<vmem>>) attributes {dimension_semantics = [#tpu.dimension_semantics<arbitrary>], iteration_bounds = array<i64: 1>, scalar_prefetch = 0 : i64, scratch_operands = 1 : i64, tpu.core_type = #tpu.core_type<tc>, window_params = [{transform_indices = @transform_0, window_bounds = array<i64: 8, 16, 16>}, {transform_indices = @transform_1, window_bounds = array<i64: 8, 16, 16>}, {pipeline_mode = #tpu.pipeline_mode<synchronous>, transform_indices = @transform_2, window_bounds = array<i64: 16, 16>}, {pipeline_mode = #tpu.pipeline_mode<synchronous>, transform_indices = @transform_3, window_bounds = array<i64: 16, 16>}, {transform_indices = @transform_4, window_bounds = array<i64: 1, 2>}]} {
    %c0_i32 = arith.constant 0 : i32
    %0 = arith.cmpi eq, %arg0, %c0_i32 : i32
    %1 = arith.extui %0 : i1 to i32
    %c0_i32_0 = arith.constant 0 : i32
    %2 = arith.cmpi ne, %1, %c0_i32_0 : i32
    scf.if %2 {
      %cst_42 = arith.constant 0.000000e+00 : f32
      %c0_43 = arith.constant 0 : index
      %c0_44 = arith.constant 0 : index
      %68 = memref.load %arg5[%c0_43, %c0_44] : memref<1x2xf32, #tpu.memory_space<smem>>
      memref.store %cst_42, %arg5[%c0_43, %c0_44] : memref<1x2xf32, #tpu.memory_space<smem>>
      %cst_45 = arith.constant 0.000000e+00 : f32
      %c0_46 = arith.constant 0 : index
      %c1_47 = arith.constant 1 : index
      %69 = memref.load %arg5[%c0_46, %c1_47] : memref<1x2xf32, #tpu.memory_space<smem>>
      memref.store %cst_45, %arg5[%c0_46, %c1_47] : memref<1x2xf32, #tpu.memory_space<smem>>
    } else {
    }
    %c0 = arith.constant 0 : index
    %c0_1 = arith.constant 0 : index
    %c0_2 = arith.constant 0 : index
    %3 = vector.load %arg1[%c0, %c0_1, %c0_2] : memref<8x16x16xf32, #tpu.memory_space<vmem>>, vector<8x16x16xf32>
    %c0_3 = arith.constant 0 : index
    %c0_4 = arith.constant 0 : index
    %c0_5 = arith.constant 0 : index
    %4 = vector.load %arg2[%c0_3, %c0_4, %c0_5] : memref<8x16x16xf32, #tpu.memory_space<vmem>>, vector<8x16x16xf32>
    %c0_6 = arith.constant 0 : index
    %c0_7 = arith.constant 0 : index
    %5 = vector.load %arg3[%c0_6, %c0_7] : memref<16x16xf32, #tpu.memory_space<vmem>>, vector<16x16xf32>
    %c0_8 = arith.constant 0 : index
    %c0_9 = arith.constant 0 : index
    %6 = vector.load %arg4[%c0_8, %c0_9] : memref<16x16xf32, #tpu.memory_space<vmem>>, vector<16x16xf32>
    %7 = arith.subf %3, %4 : vector<8x16x16xf32>
    %8 = math.absf %7 : vector<8x16x16xf32>
    %9 = vector.shape_cast %8 : vector<8x16x16xf32> to vector<1x8x16x16xf32>
    %cst = arith.constant dense<0.000000e+00> : vector<1xf32>
    %10 = vector.multi_reduction <add>, %9, %cst [1, 2, 3] : vector<1x8x16x16xf32> to vector<1xf32>
    %11 = vector.shape_cast %10 : vector<1xf32> to vector<1x1x1x1xf32>
    %12 = vector.extract %11[0, 0, 0, 0] : f32 from vector<1x1x1x1xf32>
    %c0_10 = arith.constant 0 : index
    %c0_11 = arith.constant 0 : index
    %c0_12 = arith.constant 0 : index
    %13 = vector.load %arg6[%c0_10, %c0_11, %c0_12] : memref<40x16x16xf32, #tpu.memory_space<vmem>>, vector<8x16x16xf32>
    tpu.vector_store %arg6[%c0_10, %c0_11, %c0_12], %3 {strides = array<i32>} : memref<40x16x16xf32, #tpu.memory_space<vmem>>, vector<8x16x16xf32>,
    %c8 = arith.constant 8 : index
    %c0_13 = arith.constant 0 : index
    %c0_14 = arith.constant 0 : index
    %14 = vector.load %arg6[%c8, %c0_13, %c0_14] : memref<40x16x16xf32, #tpu.memory_space<vmem>>, vector<8x16x16xf32>
    tpu.vector_store %arg6[%c8, %c0_13, %c0_14], %4 {strides = array<i32>} : memref<40x16x16xf32, #tpu.memory_space<vmem>>, vector<8x16x16xf32>,
    %15 = arith.mulf %3, %3 : vector<8x16x16xf32>
    %c16 = arith.constant 16 : index
    %c0_15 = arith.constant 0 : index
    %c0_16 = arith.constant 0 : index
    %16 = vector.load %arg6[%c16, %c0_15, %c0_16] : memref<40x16x16xf32, #tpu.memory_space<vmem>>, vector<8x16x16xf32>
    tpu.vector_store %arg6[%c16, %c0_15, %c0_16], %15 {strides = array<i32>} : memref<40x16x16xf32, #tpu.memory_space<vmem>>, vector<8x16x16xf32>,
    %17 = arith.mulf %4, %4 : vector<8x16x16xf32>
    %c24 = arith.constant 24 : index
    %c0_17 = arith.constant 0 : index
    %c0_18 = arith.constant 0 : index
    %18 = vector.load %arg6[%c24, %c0_17, %c0_18] : memref<40x16x16xf32, #tpu.memory_space<vmem>>, vector<8x16x16xf32>
    tpu.vector_store %arg6[%c24, %c0_17, %c0_18], %17 {strides = array<i32>} : memref<40x16x16xf32, #tpu.memory_space<vmem>>, vector<8x16x16xf32>,
    %19 = arith.mulf %3, %4 : vector<8x16x16xf32>
    %c32 = arith.constant 32 : index
    %c0_19 = arith.constant 0 : index
    %c0_20 = arith.constant 0 : index
    %20 = vector.load %arg6[%c32, %c0_19, %c0_20] : memref<40x16x16xf32, #tpu.memory_space<vmem>>, vector<8x16x16xf32>
    tpu.vector_store %arg6[%c32, %c0_19, %c0_20], %19 {strides = array<i32>} : memref<40x16x16xf32, #tpu.memory_space<vmem>>, vector<8x16x16xf32>,
    %c0_21 = arith.constant 0 : index
    %c0_22 = arith.constant 0 : index
    %c0_23 = arith.constant 0 : index
    %21 = vector.load %arg6[%c0_21, %c0_22, %c0_23] : memref<40x16x16xf32, #tpu.memory_space<vmem>>, vector<40x16x16xf32>
    %cst_24 = arith.constant dense<0.000000e+00> : vector<40x16x16xf32>
    %22 = tpu.matmul %21, %6, %cst_24 {dimension_numbers = #tpu.dot_dimension_numbers<[2], [1], [0, 1], [0], [0, 0, 0, 1, 1, 0], [], []>} : vector<40x16x16xf32>, vector<16x16xf32>, vector<40x16x16xf32> -> vector<40x16x16xf32>
    %23 = tpu.transpose %22, [0, 2, 1] : vector<40x16x16xf32> -> vector<40x16x16xf32>
    %cst_25 = arith.constant dense<0.000000e+00> : vector<40x16x16xf32>
    %24 = tpu.matmul %23, %5, %cst_25 {dimension_numbers = #tpu.dot_dimension_numbers<[2], [1], [0, 1], [0], [0, 0, 0, 1, 1, 0], [], []>} : vector<40x16x16xf32>, vector<16x16xf32>, vector<40x16x16xf32> -> vector<40x16x16xf32>
    %25 = tpu.transpose %24, [0, 2, 1] : vector<40x16x16xf32> -> vector<40x16x16xf32>
    %26 = vector.extract_strided_slice %25 {offsets = [0, 0, 0], sizes = [8, 16, 16], strides = [1, 1, 1]} : vector<40x16x16xf32> to vector<8x16x16xf32>
    %27 = vector.extract_strided_slice %25 {offsets = [8, 0, 0], sizes = [8, 16, 16], strides = [1, 1, 1]} : vector<40x16x16xf32> to vector<8x16x16xf32>
    %28 = vector.extract_strided_slice %25 {offsets = [16, 0, 0], sizes = [8, 16, 16], strides = [1, 1, 1]} : vector<40x16x16xf32> to vector<8x16x16xf32>
    %29 = vector.extract_strided_slice %25 {offsets = [24, 0, 0], sizes = [8, 16, 16], strides = [1, 1, 1]} : vector<40x16x16xf32> to vector<8x16x16xf32>
    %30 = vector.extract_strided_slice %25 {offsets = [32, 0, 0], sizes = [8, 16, 16], strides = [1, 1, 1]} : vector<40x16x16xf32> to vector<8x16x16xf32>
    %31 = arith.mulf %26, %27 : vector<8x16x16xf32>
    %32 = arith.mulf %26, %26 : vector<8x16x16xf32>
    %33 = arith.mulf %27, %27 : vector<8x16x16xf32>
    %cst_26 = arith.constant 2.000000e+00 : f32
    %34 = vector.broadcast %cst_26 : f32 to vector<8x16x16xf32>
    %35 = arith.mulf %34, %31 : vector<8x16x16xf32>
    %cst_27 = arith.constant 9.99999974E-5 : f32
    %36 = vector.broadcast %cst_27 : f32 to vector<8x16x16xf32>
    %37 = arith.addf %35, %36 : vector<8x16x16xf32>
    %38 = arith.subf %30, %31 : vector<8x16x16xf32>
    %cst_28 = arith.constant 2.000000e+00 : f32
    %39 = vector.broadcast %cst_28 : f32 to vector<8x16x16xf32>
    %40 = arith.mulf %39, %38 : vector<8x16x16xf32>
    %cst_29 = arith.constant 8.99999984E-4 : f32
    %41 = vector.broadcast %cst_29 : f32 to vector<8x16x16xf32>
    %42 = arith.addf %40, %41 : vector<8x16x16xf32>
    %43 = arith.mulf %37, %42 : vector<8x16x16xf32>
    %44 = arith.addf %32, %33 : vector<8x16x16xf32>
    %cst_30 = arith.constant 9.99999974E-5 : f32
    %45 = vector.broadcast %cst_30 : f32 to vector<8x16x16xf32>
    %46 = arith.addf %44, %45 : vector<8x16x16xf32>
    %47 = arith.subf %28, %32 : vector<8x16x16xf32>
    %48 = arith.subf %29, %33 : vector<8x16x16xf32>
    %49 = arith.addf %47, %48 : vector<8x16x16xf32>
    %cst_31 = arith.constant 8.99999984E-4 : f32
    %50 = vector.broadcast %cst_31 : f32 to vector<8x16x16xf32>
    %51 = arith.addf %49, %50 : vector<8x16x16xf32>
    %52 = arith.mulf %46, %51 : vector<8x16x16xf32>
    %53 = tpu.reciprocal %52 : vector<8x16x16xf32> -> vector<8x16x16xf32>
    %54 = arith.mulf %43, %53 : vector<8x16x16xf32>
    %55 = vector.shape_cast %54 : vector<8x16x16xf32> to vector<1x8x16x16xf32>
    %cst_32 = arith.constant dense<0.000000e+00> : vector<1xf32>
    %56 = vector.multi_reduction <add>, %55, %cst_32 [1, 2, 3] : vector<1x8x16x16xf32> to vector<1xf32>
    %57 = vector.shape_cast %56 : vector<1xf32> to vector<1x1x1x1xf32>
    %58 = vector.extract %57[0, 0, 0, 0] : f32 from vector<1x1x1x1xf32>
    %c0_33 = arith.constant 0 : index
    %c0_34 = arith.constant 0 : index
    %59 = memref.load %arg5[%c0_33, %c0_34] : memref<1x2xf32, #tpu.memory_space<smem>>
    %60 = arith.addf %59, %12 : f32
    %c0_35 = arith.constant 0 : index
    %c0_36 = arith.constant 0 : index
    %61 = memref.load %arg5[%c0_35, %c0_36] : memref<1x2xf32, #tpu.memory_space<smem>>
    memref.store %60, %arg5[%c0_35, %c0_36] : memref<1x2xf32, #tpu.memory_space<smem>>
    %c0_37 = arith.constant 0 : index
    %c1 = arith.constant 1 : index
    %62 = memref.load %arg5[%c0_37, %c1] : memref<1x2xf32, #tpu.memory_space<smem>>
    %63 = arith.addf %62, %58 : f32
    %c0_38 = arith.constant 0 : index
    %c1_39 = arith.constant 1 : index
    %64 = memref.load %arg5[%c0_38, %c1_39] : memref<1x2xf32, #tpu.memory_space<smem>>
    memref.store %63, %arg5[%c0_38, %c1_39] : memref<1x2xf32, #tpu.memory_space<smem>>
    %c0_i32_40 = arith.constant 0 : i32
    %65 = arith.cmpi eq, %arg0, %c0_i32_40 : i32
    %66 = arith.extui %65 : i1 to i32
    %c0_i32_41 = arith.constant 0 : i32
    %67 = arith.cmpi ne, %66, %c0_i32_41 : i32
    scf.if %67 {
      %c0_42 = arith.constant 0 : index
      %c0_43 = arith.constant 0 : index
      %68 = memref.load %arg5[%c0_42, %c0_43] : memref<1x2xf32, #tpu.memory_space<smem>>
      %cst_44 = arith.constant 4.8828125E-4 : f32
      %69 = arith.mulf %68, %cst_44 : f32
      %c0_45 = arith.constant 0 : index
      %c0_46 = arith.constant 0 : index
      %70 = memref.load %arg5[%c0_45, %c0_46] : memref<1x2xf32, #tpu.memory_space<smem>>
      memref.store %69, %arg5[%c0_45, %c0_46] : memref<1x2xf32, #tpu.memory_space<smem>>
      %c0_47 = arith.constant 0 : index
      %c1_48 = arith.constant 1 : index
      %71 = memref.load %arg5[%c0_47, %c1_48] : memref<1x2xf32, #tpu.memory_space<smem>>
      %cst_49 = arith.constant 4.8828125E-4 : f32
      %72 = arith.mulf %71, %cst_49 : f32
      %cst_50 = arith.constant 1.000000e+00 : f32
      %73 = arith.subf %cst_50, %72 : f32
      %c0_51 = arith.constant 0 : index
      %c1_52 = arith.constant 1 : index
      %74 = memref.load %arg5[%c0_51, %c1_52] : memref<1x2xf32, #tpu.memory_space<smem>>
      memref.store %73, %arg5[%c0_51, %c1_52] : memref<1x2xf32, #tpu.memory_space<smem>>
    } else {
    }
    return
  }
  func.func @transform_0(%arg0: i32) -> (i32, i32, i32) {
    %c0_i32 = arith.constant 0 : i32
    %c0_i32_0 = arith.constant 0 : i32
    %c0_i32_1 = arith.constant 0 : i32
    return %arg0, %c0_i32, %c0_i32_0 : i32, i32, i32
  }
  func.func @transform_1(%arg0: i32) -> (i32, i32, i32) {
    %c0_i32 = arith.constant 0 : i32
    %c0_i32_0 = arith.constant 0 : i32
    %c0_i32_1 = arith.constant 0 : i32
    return %arg0, %c0_i32, %c0_i32_0 : i32, i32, i32
  }
  func.func @transform_2(%arg0: i32) -> (i32, i32) {
    %c0_i32 = arith.constant 0 : i32
    %c0_i32_0 = arith.constant 0 : i32
    %c0_i32_1 = arith.constant 0 : i32
    return %c0_i32, %c0_i32_0 : i32, i32
  }
  func.func @transform_3(%arg0: i32) -> (i32, i32) {
    %c0_i32 = arith.constant 0 : i32
    %c0_i32_0 = arith.constant 0 : i32
    %c0_i32_1 = arith.constant 0 : i32
    return %c0_i32, %c0_i32_0 : i32, i32
  }
  func.func @transform_4(%arg0: i32) -> (i32, i32) {
    %c0_i32 = arith.constant 0 : i32
    %c0_i32_0 = arith.constant 0 : i32
    %c0_i32_1 = arith.constant 0 : i32
    return %c0_i32, %c0_i32_0 : i32, i32
  }
}

</mosaic_0001>

<llo_original>
// kernel: tpu_custom_call.1
$region0: #{tpu_custom_call.1}
  #allocation0 [shape = 'u32[]', space=smem, size = 0x4, offset = 0x4, fixed_abs, tag = 'smem constant byte address 0x4 - core index']
  #allocation1 [shape = 'u32[144,128]{1,0:T(1,128)}', space=vmem, size = 0x12000, scoped, tag = 'internal scratch']
  #allocation2 [shape = 'f32[40,16,16]{2,1,0:T(8,128)}', space=vmem, size = 0x50000, scoped, tag = 'scratch operand']
  %s0 = inlined_call_operand.hbm [shape: f32[8,16,16], index: 0, kind: input, shape index: {}]
  %s1 = inlined_call_operand.hbm [shape: f32[8,16,16], index: 1, kind: input, shape index: {}]
  %s2 = inlined_call_operand.hbm [shape: f32[16,16], index: 2, kind: input, shape index: {}]
  %s3 = inlined_call_operand.hbm [shape: f32[16,16], index: 3, kind: input, shape index: {}]
  %s4 = inlined_call_operand.hbm [shape: f32[1,2], index: 4, kind: output, shape index: {}]
  %s5 = sld [smem:[#allocation0]]
  $region50: #{tpu_custom_call.1} parent=0
    _
  %s7 = ssub.s32 1, %s5
  %s8 = scalar_select 0, %s7, %s5
  $region1: #{tpu_custom_call.1} parent=0
    #allocation3 [shape = 'u8[65536]{0}', space=vmem, size = 0x10000, scoped, tag = 'input window, operand 0, single buffered']
    #allocation4 [shape = 's32[1]{0}', space=sflag, size = 0x4, scoped, tag = 'scoped memory for tpu_custom_call.1']
    #allocation5 [shape = 's32[1]{0}', space=sflag, size = 0x4, scoped, tag = 'scoped memory for tpu_custom_call.1']
    #allocation6 [shape = 'u8[65536]{0}', space=vmem, size = 0x10000, scoped, tag = 'input window, operand 1, single buffered']
    #allocation7 [shape = 's32[1]{0}', space=sflag, size = 0x4, scoped, tag = 'scoped memory for tpu_custom_call.1']
    #allocation8 [shape = 'u8[8192]{0}', space=vmem, size = 0x2000, scoped, tag = 'input window, operand 2, single buffered']
    #allocation9 [shape = 'u8[8192]{0}', space=vmem, size = 0x2000, scoped, tag = 'input window, operand 3, single buffered']
    #allocation10 [shape = 's32[1]{0}', space=sflag, size = 0x4, scoped, tag = 'scoped memory for tpu_custom_call.1']
    #allocation11 [shape = 'u8[512]{0}', space=smem, size = 0x200, scoped, tag = 'output window, operand 0, single buffered']
    %9 = vsyncpa [#allocation4], 0
    %10 = vsyncpa [#allocation7], 0
    %11 = vsyncpa [#allocation10], 0
    %12 = vsyncpa [#allocation5], 0
    // Predicated region
    $region2: #{tpu_custom_call.1} parent=1 // pred_check
      _
    $region3: #{tpu_custom_call.1} parent=1 // pred_check_branch
      %14 = sbr.rel (0) target = $region5
    $region4: #{tpu_custom_call.1} parent=1 // pred_region
      %s16 = ssub.s32 2048, 2048
      %17 = vsyncadd [#allocation4], %s16
      %s18 = sshll.u32 [#allocation3], 4
      %s19 = int_to_ptr.vmem [resolvable:$true] %s18
      %24 = dma.hbm_to_vmem [thread:$0]  %s0, 2048, %s19, [#allocation4], 128, 128, 8
    $region5: #{tpu_custom_call.1} parent=1 // pred_fallthru
      _
    // Predicated region
    $region6: #{tpu_custom_call.1} parent=1 // pred_check
      _
    $region7: #{tpu_custom_call.1} parent=1 // pred_check_branch
      %26 = sbr.rel (0) target = $region9
    $region8: #{tpu_custom_call.1} parent=1 // pred_region
      %s28 = ssub.s32 2048, 2048
      %29 = vsyncadd [#allocation7], %s28
      %s30 = sshll.u32 [#allocation6], 4
      %s31 = int_to_ptr.vmem [resolvable:$true] %s30
      %36 = dma.hbm_to_vmem [thread:$0]  %s1, 2048, %s31, [#allocation7], 128, 128, 8
    $region9: #{tpu_custom_call.1} parent=1 // pred_fallthru
      _
    // Predicated region
    $region10: #{tpu_custom_call.1} parent=1 // pred_check
      _
    $region11: #{tpu_custom_call.1} parent=1 // pred_check_branch
      %38 = sbr.rel (0) target = $region13
    $region12: #{tpu_custom_call.1} parent=1 // pred_region
      %s40 = ssub.s32 256, 256
      %41 = vsyncadd [#allocation7], %s40
      %s42 = sshll.u32 [#allocation8], 4
      %s43 = int_to_ptr.vmem [resolvable:$true] %s42
      %48 = dma.hbm_to_vmem [thread:$0]  %s2, 256, %s43, [#allocation7], 128, 128, 8
    $region13: #{tpu_custom_call.1} parent=1 // pred_fallthru
      _
    // Predicated region
    $region14: #{tpu_custom_call.1} parent=1 // pred_check
      _
    $region15: #{tpu_custom_call.1} parent=1 // pred_check_branch
      %50 = sbr.rel (0) target = $region17
    $region16: #{tpu_custom_call.1} parent=1 // pred_region
      %s52 = ssub.s32 256, 256
      %53 = vsyncadd [#allocation10], %s52
      %s54 = sshll.u32 [#allocation9], 4
      %s55 = int_to_ptr.vmem [resolvable:$true] %s54
      %60 = dma.hbm_to_vmem [thread:$0]  %s3, 256, %s55, [#allocation10], 128, 128, 8
    $region17: #{tpu_custom_call.1} parent=1 // pred_fallthru
      _
    // Predicated region
    $region18: #{tpu_custom_call.1} parent=1 // pred_check
      _
    $region19: #{tpu_custom_call.1} parent=1 // pred_check_branch
      %62 = sbr.rel (0) target = $region21
    $region20: #{tpu_custom_call.1} parent=1 // pred_region
      %63 = dma.done [#allocation4], 2048
    $region21: #{tpu_custom_call.1} parent=1 // pred_fallthru
      _
    // Predicated region
    $region22: #{tpu_custom_call.1} parent=1 // pred_check
      _
    $region23: #{tpu_custom_call.1} parent=1 // pred_check_branch
      %65 = sbr.rel (0) target = $region25
    $region24: #{tpu_custom_call.1} parent=1 // pred_region
      %66 = dma.done [#allocation7], 2048
    $region25: #{tpu_custom_call.1} parent=1 // pred_fallthru
      _
    // Predicated region
    $region26: #{tpu_custom_call.1} parent=1 // pred_check
      _
    $region27: #{tpu_custom_call.1} parent=1 // pred_check_branch
      %68 = sbr.rel (0) target = $region29
    $region28: #{tpu_custom_call.1} parent=1 // pred_region
      %69 = dma.done [#allocation7], 256
    $region29: #{tpu_custom_call.1} parent=1 // pred_fallthru
      _
    // Predicated region
    $region30: #{tpu_custom_call.1} parent=1 // pred_check
      _
    $region31: #{tpu_custom_call.1} parent=1 // pred_check_branch
      %71 = sbr.rel (0) target = $region33
    $region32: #{tpu_custom_call.1} parent=1 // pred_region
      %72 = dma.done [#allocation10], 256
    $region33: #{tpu_custom_call.1} parent=1 // pred_fallthru
      _
    %p73 = scmp.eq.s32.totalorder 0, 0
    // Predicated region
    $region34: #{tpu_custom_call.1} parent=1 // pred_check
      %p74 = pneg %p73
    $region35: #{tpu_custom_call.1} parent=1 // pred_check_branch
      %76 = sbr.rel (%p74) target = $region37
    $region36: #{tpu_custom_call.1} parent=1 // pred_region
      %s77 = scalar_lea.smem [#allocation11], 0
      %78 = sst [smem:[%s77]] 0.0
      %s79 = scalar_lea.smem [#allocation11], 1
      %80 = sst [smem:[%s79]] 0.0
    $region37: #{tpu_custom_call.1} parent=1 // pred_fallthru
      _
    %v81 = vld [vmem:[#allocation3] sm:$0xff]
    %v82 = vld [vmem:[#allocation3 + $0x8] sm:$0xff]
    %v83 = vld [vmem:[#allocation3 + $0x10] sm:$0xff]
    %v84 = vld [vmem:[#allocation3 + $0x18] sm:$0xff]
    %v85 = vld [vmem:[#allocation3 + $0x20] sm:$0xff]
    %v86 = vld [vmem:[#allocation3 + $0x28] sm:$0xff]
    %v87 = vld [vmem:[#allocation3 + $0x30] sm:$0xff]
    %v88 = vld [vmem:[#allocation3 + $0x38] sm:$0xff]
    %v89 = vld [vmem:[#allocation3 + $0x40] sm:$0xff]
    %v90 = vld [vmem:[#allocation3 + $0x48] sm:$0xff]
    %v91 = vld [vmem:[#allocation3 + $0x50] sm:$0xff]
    %v92 = vld [vmem:[#allocation3 + $0x58] sm:$0xff]
    %v93 = vld [vmem:[#allocation3 + $0x60] sm:$0xff]
    %v94 = vld [vmem:[#allocation3 + $0x68] sm:$0xff]
    %v95 = vld [vmem:[#allocation3 + $0x70] sm:$0xff]
    %v96 = vld [vmem:[#allocation3 + $0x78] sm:$0xff]
    %v97 = vld [vmem:[#allocation6] sm:$0xff]
    %v98 = vld [vmem:[#allocation6 + $0x8] sm:$0xff]
    %v99 = vld [vmem:[#allocation6 + $0x10] sm:$0xff]
    %v100 = vld [vmem:[#allocation6 + $0x18] sm:$0xff]
    %v101 = vld [vmem:[#allocation6 + $0x20] sm:$0xff]
    %v102 = vld [vmem:[#allocation6 + $0x28] sm:$0xff]
    %v103 = vld [vmem:[#allocation6 + $0x30] sm:$0xff]
    %v104 = vld [vmem:[#allocation6 + $0x38] sm:$0xff]
    %v105 = vld [vmem:[#allocation6 + $0x40] sm:$0xff]
    %v106 = vld [vmem:[#allocation6 + $0x48] sm:$0xff]
    %v107 = vld [vmem:[#allocation6 + $0x50] sm:$0xff]
    %v108 = vld [vmem:[#allocation6 + $0x58] sm:$0xff]
    %v109 = vld [vmem:[#allocation6 + $0x60] sm:$0xff]
    %v110 = vld [vmem:[#allocation6 + $0x68] sm:$0xff]
    %v111 = vld [vmem:[#allocation6 + $0x70] sm:$0xff]
    %v112 = vld [vmem:[#allocation6 + $0x78] sm:$0xff]
    %v113 = vld [vmem:[#allocation8] sm:$0xff]
    %v114 = vld [vmem:[#allocation8 + $0x8] sm:$0xff]
    %v115 = vld [vmem:[#allocation9] sm:$0xff]
    %v116 = vld [vmem:[#allocation9 + $0x8] sm:$0xff]
    %v117 = vsub.f32 %v81, %v97
    %v118 = vsub.f32 %v82, %v98
    %v119 = vsub.f32 %v83, %v99
    %v120 = vsub.f32 %v84, %v100
    %v121 = vsub.f32 %v85, %v101
    %v122 = vsub.f32 %v86, %v102
    %v123 = vsub.f32 %v87, %v103
    %v124 = vsub.f32 %v88, %v104
    %v125 = vsub.f32 %v89, %v105
    %v126 = vsub.f32 %v90, %v106
    %v127 = vsub.f32 %v91, %v107
    %v128 = vsub.f32 %v92, %v108
    %v129 = vsub.f32 %v93, %v109
    %v130 = vsub.f32 %v94, %v110
    %v131 = vsub.f32 %v95, %v111
    %v132 = vsub.f32 %v96, %v112
    %v133 = vand.u32 2147483647, %v117
    %v134 = vand.u32 2147483647, %v118
    %v135 = vand.u32 2147483647, %v119
    %v136 = vand.u32 2147483647, %v120
    %v137 = vand.u32 2147483647, %v121
    %v138 = vand.u32 2147483647, %v122
    %v139 = vand.u32 2147483647, %v123
    %v140 = vand.u32 2147483647, %v124
    %v141 = vand.u32 2147483647, %v125
    %v142 = vand.u32 2147483647, %v126
    %v143 = vand.u32 2147483647, %v127
    %v144 = vand.u32 2147483647, %v128
    %v145 = vand.u32 2147483647, %v129
    %v146 = vand.u32 2147483647, %v130
    %v147 = vand.u32 2147483647, %v131
    %v148 = vand.u32 2147483647, %v132
    %vm149 = vcmask 130048
    %v150 = vsel %vm149, %v133, 0.0
    %v151 = vsel %vm149, %v134, 0.0
    %v152 = vadd.f32 %v150, %v151
    %v153 = vsel %vm149, %v135, 0.0
    %v154 = vadd.f32 %v152, %v153
    %v155 = vsel %vm149, %v136, 0.0
    %v156 = vadd.f32 %v154, %v155
    %v157 = vsel %vm149, %v137, 0.0
    %v158 = vadd.f32 %v156, %v157
    %v159 = vsel %vm149, %v138, 0.0
    %v160 = vadd.f32 %v158, %v159
    %v161 = vsel %vm149, %v139, 0.0
    %v162 = vadd.f32 %v160, %v161
    %v163 = vsel %vm149, %v140, 0.0
    %v164 = vadd.f32 %v162, %v163
    %v165 = vsel %vm149, %v141, 0.0
    %v166 = vadd.f32 %v164, %v165
    %v167 = vsel %vm149, %v142, 0.0
    %v168 = vadd.f32 %v166, %v167
    %v169 = vsel %vm149, %v143, 0.0
    %v170 = vadd.f32 %v168, %v169
    %v171 = vsel %vm149, %v144, 0.0
    %v172 = vadd.f32 %v170, %v171
    %v173 = vsel %vm149, %v145, 0.0
    %v174 = vadd.f32 %v172, %v173
    %v175 = vsel %vm149, %v146, 0.0
    %v176 = vadd.f32 %v174, %v175
    %v177 = vsel %vm149, %v147, 0.0
    %v178 = vadd.f32 %v176, %v177
    %v179 = vsel %vm149, %v148, 0.0
    %v180 = vadd.f32 %v178, %v179
    %181 = vadd.xlane.f32.xlu0 %v180
    %v182 = vpop.xlane.xlu0 %181
    %v183 = vrot.slane %v182, 4
    %v184 = vadd.f32 %v182, %v183
    %v185 = vrot.slane %v184, 2
    %v186 = vadd.f32 %v184, %v185
    %v187 = vrot.slane %v186, 1
    %v188 = vadd.f32 %v186, %v187
    %s189 = vtos %v188
    %190 = vst.msk [vmem:[#allocation2] sm:$0xff] %vm149, %v81
    %191 = vst.msk [vmem:[#allocation2 + $0x8] sm:$0xff] %vm149, %v82
    %192 = vst.msk [vmem:[#allocation2 + $0x10] sm:$0xff] %vm149, %v83
    %193 = vst.msk [vmem:[#allocation2 + $0x18] sm:$0xff] %vm149, %v84
    %194 = vst.msk [vmem:[#allocation2 + $0x20] sm:$0xff] %vm149, %v85
    %195 = vst.msk [vmem:[#allocation2 + $0x28] sm:$0xff] %vm149, %v86
    %196 = vst.msk [vmem:[#allocation2 + $0x30] sm:$0xff] %vm149, %v87
    %197 = vst.msk [vmem:[#allocation2 + $0x38] sm:$0xff] %vm149, %v88
    %198 = vst.msk [vmem:[#allocation2 + $0x40] sm:$0xff] %vm149, %v89
    %199 = vst.msk [vmem:[#allocation2 + $0x48] sm:$0xff] %vm149, %v90
    %200 = vst.msk [vmem:[#allocation2 + $0x50] sm:$0xff] %vm149, %v91
    %201 = vst.msk [vmem:[#allocation2 + $0x58] sm:$0xff] %vm149, %v92
    %202 = vst.msk [vmem:[#allocation2 + $0x60] sm:$0xff] %vm149, %v93
    %203 = vst.msk [vmem:[#allocation2 + $0x68] sm:$0xff] %vm149, %v94
    %204 = vst.msk [vmem:[#allocation2 + $0x70] sm:$0xff] %vm149, %v95
    %205 = vst.msk [vmem:[#allocation2 + $0x78] sm:$0xff] %vm149, %v96
    %s206 = scalar_lea.vmem [#allocation2], 128
    %207 = vst.msk [vmem:[%s206] sm:$0xff] %vm149, %v97
    %208 = vst.msk [vmem:[%s206 + $0x8] sm:$0xff] %vm149, %v98
    %209 = vst.msk [vmem:[%s206 + $0x10] sm:$0xff] %vm149, %v99
    %210 = vst.msk [vmem:[%s206 + $0x18] sm:$0xff] %vm149, %v100
    %211 = vst.msk [vmem:[%s206 + $0x20] sm:$0xff] %vm149, %v101
    %212 = vst.msk [vmem:[%s206 + $0x28] sm:$0xff] %vm149, %v102
    %213 = vst.msk [vmem:[%s206 + $0x30] sm:$0xff] %vm149, %v103
    %214 = vst.msk [vmem:[%s206 + $0x38] sm:$0xff] %vm149, %v104
    %215 = vst.msk [vmem:[%s206 + $0x40] sm:$0xff] %vm149, %v105
    %216 = vst.msk [vmem:[%s206 + $0x48] sm:$0xff] %vm149, %v106
    %217 = vst.msk [vmem:[%s206 + $0x50] sm:$0xff] %vm149, %v107
    %218 = vst.msk [vmem:[%s206 + $0x58] sm:$0xff] %vm149, %v108
    %219 = vst.msk [vmem:[%s206 + $0x60] sm:$0xff] %vm149, %v109
    %220 = vst.msk [vmem:[%s206 + $0x68] sm:$0xff] %vm149, %v110
    %221 = vst.msk [vmem:[%s206 + $0x70] sm:$0xff] %vm149, %v111
    %222 = vst.msk [vmem:[%s206 + $0x78] sm:$0xff] %vm149, %v112
    %v223 = vmul.f32 %v81, %v81
    %v224 = vmul.f32 %v82, %v82
    %v225 = vmul.f32 %v83, %v83
    %v226 = vmul.f32 %v84, %v84
    %v227 = vmul.f32 %v85, %v85
    %v228 = vmul.f32 %v86, %v86
    %v229 = vmul.f32 %v87, %v87
    %v230 = vmul.f32 %v88, %v88
    %v231 = vmul.f32 %v89, %v89
    %v232 = vmul.f32 %v90, %v90
    %v233 = vmul.f32 %v91, %v91
    %v234 = vmul.f32 %v92, %v92
    %v235 = vmul.f32 %v93, %v93
    %v236 = vmul.f32 %v94, %v94
    %v237 = vmul.f32 %v95, %v95
    %v238 = vmul.f32 %v96, %v96
    %s239 = scalar_lea.vmem [#allocation2], 256
    %240 = vst.msk [vmem:[%s239] sm:$0xff] %vm149, %v223
    %241 = vst.msk [vmem:[%s239 + $0x8] sm:$0xff] %vm149, %v224
    %242 = vst.msk [vmem:[%s239 + $0x10] sm:$0xff] %vm149, %v225
    %243 = vst.msk [vmem:[%s239 + $0x18] sm:$0xff] %vm149, %v226
    %244 = vst.msk [vmem:[%s239 + $0x20] sm:$0xff] %vm149, %v227
    %245 = vst.msk [vmem:[%s239 + $0x28] sm:$0xff] %vm149, %v228
    %246 = vst.msk [vmem:[%s239 + $0x30] sm:$0xff] %vm149, %v229
    %247 = vst.msk [vmem:[%s239 + $0x38] sm:$0xff] %vm149, %v230
    %248 = vst.msk [vmem:[%s239 + $0x40] sm:$0xff] %vm149, %v231
    %249 = vst.msk [vmem:[%s239 + $0x48] sm:$0xff] %vm149, %v232
    %250 = vst.msk [vmem:[%s239 + $0x50] sm:$0xff] %vm149, %v233
    %251 = vst.msk [vmem:[%s239 + $0x58] sm:$0xff] %vm149, %v234
    %252 = vst.msk [vmem:[%s239 + $0x60] sm:$0xff] %vm149, %v235
    %253 = vst.msk [vmem:[%s239 + $0x68] sm:$0xff] %vm149, %v236
    %254 = vst.msk [vmem:[%s239 + $0x70] sm:$0xff] %vm149, %v237
    %255 = vst.msk [vmem:[%s239 + $0x78] sm:$0xff] %vm149, %v238
    %v256 = vmul.f32 %v97, %v97
    %v257 = vmul.f32 %v98, %v98
    %v258 = vmul.f32 %v99, %v99
    %v259 = vmul.f32 %v100, %v100
    %v260 = vmul.f32 %v101, %v101
    %v261 = vmul.f32 %v102, %v102
    %v262 = vmul.f32 %v103, %v103
    %v263 = vmul.f32 %v104, %v104
    %v264 = vmul.f32 %v105, %v105
    %v265 = vmul.f32 %v106, %v106
    %v266 = vmul.f32 %v107, %v107
    %v267 = vmul.f32 %v108, %v108
    %v268 = vmul.f32 %v109, %v109
    %v269 = vmul.f32 %v110, %v110
    %v270 = vmul.f32 %v111, %v111
    %v271 = vmul.f32 %v112, %v112
    %s272 = scalar_lea.vmem [#allocation2], 384
    %273 = vst.msk [vmem:[%s272] sm:$0xff] %vm149, %v256
    %274 = vst.msk [vmem:[%s272 + $0x8] sm:$0xff] %vm149, %v257
    %275 = vst.msk [vmem:[%s272 + $0x10] sm:$0xff] %vm149, %v258
    %276 = vst.msk [vmem:[%s272 + $0x18] sm:$0xff] %vm149, %v259
    %277 = vst.msk [vmem:[%s272 + $0x20] sm:$0xff] %vm149, %v260
    %278 = vst.msk [vmem:[%s272 + $0x28] sm:$0xff] %vm149, %v261
    %279 = vst.msk [vmem:[%s272 + $0x30] sm:$0xff] %vm149, %v262
    %280 = vst.msk [vmem:[%s272 + $0x38] sm:$0xff] %vm149, %v263
    %281 = vst.msk [vmem:[%s272 + $0x40] sm:$0xff] %vm149, %v264
    %282 = vst.msk [vmem:[%s272 + $0x48] sm:$0xff] %vm149, %v265
    %283 = vst.msk [vmem:[%s272 + $0x50] sm:$0xff] %vm149, %v266
    %284 = vst.msk [vmem:[%s272 + $0x58] sm:$0xff] %vm149, %v267
    %285 = vst.msk [vmem:[%s272 + $0x60] sm:$0xff] %vm149, %v268
    %286 = vst.msk [vmem:[%s272 + $0x68] sm:$0xff] %vm149, %v269
    %287 = vst.msk [vmem:[%s272 + $0x70] sm:$0xff] %vm149, %v270
    %288 = vst.msk [vmem:[%s272 + $0x78] sm:$0xff] %vm149, %v271
    %v289 = vmul.f32 %v81, %v97
    %v290 = vmul.f32 %v82, %v98
    %v291 = vmul.f32 %v83, %v99
    %v292 = vmul.f32 %v84, %v100
    %v293 = vmul.f32 %v85, %v101
    %v294 = vmul.f32 %v86, %v102
    %v295 = vmul.f32 %v87, %v103
    %v296 = vmul.f32 %v88, %v104
    %v297 = vmul.f32 %v89, %v105
    %v298 = vmul.f32 %v90, %v106
    %v299 = vmul.f32 %v91, %v107
    %v300 = vmul.f32 %v92, %v108
    %v301 = vmul.f32 %v93, %v109
    %v302 = vmul.f32 %v94, %v110
    %v303 = vmul.f32 %v95, %v111
    %v304 = vmul.f32 %v96, %v112
    %s305 = scalar_lea.vmem [#allocation2], 512
    %306 = vst.msk [vmem:[%s305] sm:$0xff] %vm149, %v289
    %307 = vst.msk [vmem:[%s305 + $0x8] sm:$0xff] %vm149, %v290
    %308 = vst.msk [vmem:[%s305 + $0x10] sm:$0xff] %vm149, %v291
    %309 = vst.msk [vmem:[%s305 + $0x18] sm:$0xff] %vm149, %v292
    %310 = vst.msk [vmem:[%s305 + $0x20] sm:$0xff] %vm149, %v293
    %311 = vst.msk [vmem:[%s305 + $0x28] sm:$0xff] %vm149, %v294
    %312 = vst.msk [vmem:[%s305 + $0x30] sm:$0xff] %vm149, %v295
    %313 = vst.msk [vmem:[%s305 + $0x38] sm:$0xff] %vm149, %v296
    %314 = vst.msk [vmem:[%s305 + $0x40] sm:$0xff] %vm149, %v297
    %315 = vst.msk [vmem:[%s305 + $0x48] sm:$0xff] %vm149, %v298
    %316 = vst.msk [vmem:[%s305 + $0x50] sm:$0xff] %vm149, %v299
    %317 = vst.msk [vmem:[%s305 + $0x58] sm:$0xff] %vm149, %v300
    %318 = vst.msk [vmem:[%s305 + $0x60] sm:$0xff] %vm149, %v301
    %319 = vst.msk [vmem:[%s305 + $0x68] sm:$0xff] %vm149, %v302
    %320 = vst.msk [vmem:[%s305 + $0x70] sm:$0xff] %vm149, %v303
    %321 = vst.msk [vmem:[%s305 + $0x78] sm:$0xff] %vm149, %v304
    %v322 = vld [vmem:[#allocation2] sm:$0xff]
    %v323 = vld [vmem:[#allocation2 + $0x8] sm:$0xff]
    %v324 = vld [vmem:[#allocation2 + $0x10] sm:$0xff]
    %v325 = vld [vmem:[#allocation2 + $0x18] sm:$0xff]
    %v326 = vld [vmem:[#allocation2 + $0x20] sm:$0xff]
    %v327 = vld [vmem:[#allocation2 + $0x28] sm:$0xff]
    %v328 = vld [vmem:[#allocation2 + $0x30] sm:$0xff]
    %v329 = vld [vmem:[#allocation2 + $0x38] sm:$0xff]
    %v330 = vld [vmem:[#allocation2 + $0x40] sm:$0xff]
    %v331 = vld [vmem:[#allocation2 + $0x48] sm:$0xff]
    %v332 = vld [vmem:[#allocation2 + $0x50] sm:$0xff]
    %v333 = vld [vmem:[#allocation2 + $0x58] sm:$0xff]
    %v334 = vld [vmem:[#allocation2 + $0x60] sm:$0xff]
    %v335 = vld [vmem:[#allocation2 + $0x68] sm:$0xff]
    %v336 = vld [vmem:[#allocation2 + $0x70] sm:$0xff]
    %v337 = vld [vmem:[#allocation2 + $0x78] sm:$0xff]
    %v338 = vld [vmem:[#allocation2 + $0x80] sm:$0xff]
    %v339 = vld [vmem:[#allocation2 + $0x88] sm:$0xff]
    %v340 = vld [vmem:[#allocation2 + $0x90] sm:$0xff]
    %v341 = vld [vmem:[#allocation2 + $0x98] sm:$0xff]
    %v342 = vld [vmem:[#allocation2 + $0xa0] sm:$0xff]
    %v343 = vld [vmem:[#allocation2 + $0xa8] sm:$0xff]
    %v344 = vld [vmem:[#allocation2 + $0xb0] sm:$0xff]
    %v345 = vld [vmem:[#allocation2 + $0xb8] sm:$0xff]
    %v346 = vld [vmem:[#allocation2 + $0xc0] sm:$0xff]
    %v347 = vld [vmem:[#allocation2 + $0xc8] sm:$0xff]
    %v348 = vld [vmem:[#allocation2 + $0xd0] sm:$0xff]
    %v349 = vld [vmem:[#allocation2 + $0xd8] sm:$0xff]
    %v350 = vld [vmem:[#allocation2 + $0xe0] sm:$0xff]
    %v351 = vld [vmem:[#allocation2 + $0xe8] sm:$0xff]
    %v352 = vld [vmem:[#allocation2 + $0xf0] sm:$0xff]
    %v353 = vld [vmem:[#allocation2 + $0xf8] sm:$0xff]
    %v354 = vld [vmem:[#allocation2 + $0x100] sm:$0xff]
    %v355 = vld [vmem:[#allocation2 + $0x108] sm:$0xff]
    %v356 = vld [vmem:[#allocation2 + $0x110] sm:$0xff]
    %v357 = vld [vmem:[#allocation2 + $0x118] sm:$0xff]
    %v358 = vld [vmem:[#allocation2 + $0x120] sm:$0xff]
    %v359 = vld [vmem:[#allocation2 + $0x128] sm:$0xff]
    %v360 = vld [vmem:[#allocation2 + $0x130] sm:$0xff]
    %v361 = vld [vmem:[#allocation2 + $0x138] sm:$0xff]
    %v362 = vld [vmem:[#allocation2 + $0x140] sm:$0xff]
    %v363 = vld [vmem:[#allocation2 + $0x148] sm:$0xff]
    %v364 = vld [vmem:[#allocation2 + $0x150] sm:$0xff]
    %v365 = vld [vmem:[#allocation2 + $0x158] sm:$0xff]
    %v366 = vld [vmem:[#allocation2 + $0x160] sm:$0xff]
    %v367 = vld [vmem:[#allocation2 + $0x168] sm:$0xff]
    %v368 = vld [vmem:[#allocation2 + $0x170] sm:$0xff]
    %v369 = vld [vmem:[#allocation2 + $0x178] sm:$0xff]
    %v370 = vld [vmem:[#allocation2 + $0x180] sm:$0xff]
    %v371 = vld [vmem:[#allocation2 + $0x188] sm:$0xff]
    %v372 = vld [vmem:[#allocation2 + $0x190] sm:$0xff]
    %v373 = vld [vmem:[#allocation2 + $0x198] sm:$0xff]
    %v374 = vld [vmem:[#allocation2 + $0x1a0] sm:$0xff]
    %v375 = vld [vmem:[#allocation2 + $0x1a8] sm:$0xff]
    %v376 = vld [vmem:[#allocation2 + $0x1b0] sm:$0xff]
    %v377 = vld [vmem:[#allocation2 + $0x1b8] sm:$0xff]
    %v378 = vld [vmem:[#allocation2 + $0x1c0] sm:$0xff]
    %v379 = vld [vmem:[#allocation2 + $0x1c8] sm:$0xff]
    %v380 = vld [vmem:[#allocation2 + $0x1d0] sm:$0xff]
    %v381 = vld [vmem:[#allocation2 + $0x1d8] sm:$0xff]
    %v382 = vld [vmem:[#allocation2 + $0x1e0] sm:$0xff]
    %v383 = vld [vmem:[#allocation2 + $0x1e8] sm:$0xff]
    %v384 = vld [vmem:[#allocation2 + $0x1f0] sm:$0xff]
    %v385 = vld [vmem:[#allocation2 + $0x1f8] sm:$0xff]
    %v386 = vld [vmem:[#allocation2 + $0x200] sm:$0xff]
    %v387 = vld [vmem:[#allocation2 + $0x208] sm:$0xff]
    %v388 = vld [vmem:[#allocation2 + $0x210] sm:$0xff]
    %v389 = vld [vmem:[#allocation2 + $0x218] sm:$0xff]
    %v390 = vld [vmem:[#allocation2 + $0x220] sm:$0xff]
    %v391 = vld [vmem:[#allocation2 + $0x228] sm:$0xff]
    %v392 = vld [vmem:[#allocation2 + $0x230] sm:$0xff]
    %v393 = vld [vmem:[#allocation2 + $0x238] sm:$0xff]
    %v394 = vld [vmem:[#allocation2 + $0x240] sm:$0xff]
    %v395 = vld [vmem:[#allocation2 + $0x248] sm:$0xff]
    %v396 = vld [vmem:[#allocation2 + $0x250] sm:$0xff]
    %v397 = vld [vmem:[#allocation2 + $0x258] sm:$0xff]
    %v398 = vld [vmem:[#allocation2 + $0x260] sm:$0xff]
    %v399 = vld [vmem:[#allocation2 + $0x268] sm:$0xff]
    %v400 = vld [vmem:[#allocation2 + $0x270] sm:$0xff]
    %v401 = vld [vmem:[#allocation2 + $0x278] sm:$0xff]
    %v403 = vsel %vm149, %v322, 0
    %v406 = vsel %vm149, %v323, 0
    %v409 = vsel %vm149, %v324, 0
    %v412 = vsel %vm149, %v325, 0
    %v415 = vsel %vm149, %v326, 0
    %v418 = vsel %vm149, %v327, 0
    %v421 = vsel %vm149, %v328, 0
    %v424 = vsel %vm149, %v329, 0
    %v427 = vsel %vm149, %v330, 0
    %v430 = vsel %vm149, %v331, 0
    %v433 = vsel %vm149, %v332, 0
    %v436 = vsel %vm149, %v333, 0
    %v439 = vsel %vm149, %v334, 0
    %v442 = vsel %vm149, %v335, 0
    %v445 = vsel %vm149, %v336, 0
    %v448 = vsel %vm149, %v337, 0
    %v451 = vsel %vm149, %v338, 0
    %v454 = vsel %vm149, %v339, 0
    %v457 = vsel %vm149, %v340, 0
    %v460 = vsel %vm149, %v341, 0
    %v463 = vsel %vm149, %v342, 0
    %v466 = vsel %vm149, %v343, 0
    %v469 = vsel %vm149, %v344, 0
    %v472 = vsel %vm149, %v345, 0
    %v475 = vsel %vm149, %v346, 0
    %v478 = vsel %vm149, %v347, 0
    %v481 = vsel %vm149, %v348, 0
    %v484 = vsel %vm149, %v349, 0
    %v487 = vsel %vm149, %v350, 0
    %v490 = vsel %vm149, %v351, 0
    %v493 = vsel %vm149, %v352, 0
    %v496 = vsel %vm149, %v353, 0
    %v499 = vsel %vm149, %v354, 0
    %v502 = vsel %vm149, %v355, 0
    %v505 = vsel %vm149, %v356, 0
    %v508 = vsel %vm149, %v357, 0
    %v511 = vsel %vm149, %v358, 0
    %v514 = vsel %vm149, %v359, 0
    %v517 = vsel %vm149, %v360, 0
    %v520 = vsel %vm149, %v361, 0
    %v523 = vsel %vm149, %v362, 0
    %v526 = vsel %vm149, %v363, 0
    %v529 = vsel %vm149, %v364, 0
    %v532 = vsel %vm149, %v365, 0
    %v535 = vsel %vm149, %v366, 0
    %v538 = vsel %vm149, %v367, 0
    %v541 = vsel %vm149, %v368, 0
    %v544 = vsel %vm149, %v369, 0
    %v547 = vsel %vm149, %v370, 0
    %v550 = vsel %vm149, %v371, 0
    %v553 = vsel %vm149, %v372, 0
    %v556 = vsel %vm149, %v373, 0
    %v559 = vsel %vm149, %v374, 0
    %v562 = vsel %vm149, %v375, 0
    %v565 = vsel %vm149, %v376, 0
    %v568 = vsel %vm149, %v377, 0
    %v571 = vsel %vm149, %v378, 0
    %v574 = vsel %vm149, %v379, 0
    %v577 = vsel %vm149, %v380, 0
    %v580 = vsel %vm149, %v381, 0
    %v583 = vsel %vm149, %v382, 0
    %v586 = vsel %vm149, %v383, 0
    %v589 = vsel %vm149, %v384, 0
    %v592 = vsel %vm149, %v385, 0
    %v595 = vsel %vm149, %v386, 0
    %v598 = vsel %vm149, %v387, 0
    %v601 = vsel %vm149, %v388, 0
    %v604 = vsel %vm149, %v389, 0
    %v607 = vsel %vm149, %v390, 0
    %v610 = vsel %vm149, %v391, 0
    %v613 = vsel %vm149, %v392, 0
    %v616 = vsel %vm149, %v393, 0
    %v619 = vsel %vm149, %v394, 0
    %v622 = vsel %vm149, %v395, 0
    %v625 = vsel %vm149, %v396, 0
    %v628 = vsel %vm149, %v397, 0
    %v631 = vsel %vm149, %v398, 0
    %v634 = vsel %vm149, %v399, 0
    %v637 = vsel %vm149, %v400, 0
    %v640 = vsel %vm149, %v401, 0
    %v643 = vsel %vm149, %v115, 0
    %v646 = vsel %vm149, %v116, 0
    %648 = vmatprep.subr.mxu0 0.0
    %649 = vmatpush1.xpose.msra.mxu0 %v643
    %650 = vmatprep.subr.mxu0 0.0
    %651 = vmatpush1.xpose.msra.mxu0 %v646
    %652 = vmatprep.subr.mxu0 0.0
    %653 = vmatpush1.xpose.msra.mxu0 0.0
    %654 = vmatprep.subr.mxu0 0.0
    %655 = vmatpush1.xpose.msra.mxu0 0.0
    %656 = vmatprep.subr.mxu0 0.0
    %657 = vmatpush1.xpose.msra.mxu0 0.0
    %658 = vmatprep.subr.mxu0 0.0
    %659 = vmatpush1.xpose.msra.mxu0 0.0
    %660 = vmatprep.subr.mxu0 0.0
    %661 = vmatpush1.xpose.msra.mxu0 0.0
    %662 = vmatprep.subr.mxu0 0.0
    %663 = vmatpush1.xpose.msra.mxu0 0.0
    %664 = vmatprep.subr.mxu0 0.0
    %665 = vmatpush1.xpose.msra.mxu0 0.0
    %666 = vmatprep.subr.mxu0 0.0
    %667 = vmatpush1.xpose.msra.mxu0 0.0
    %668 = vmatprep.subr.mxu0 0.0
    %669 = vmatpush1.xpose.msra.mxu0 0.0
    %670 = vmatprep.subr.mxu0 0.0
    %671 = vmatpush1.xpose.msra.mxu0 0.0
    %672 = vmatprep.subr.mxu0 0.0
    %673 = vmatpush1.xpose.msra.mxu0 0.0
    %674 = vmatprep.subr.mxu0 0.0
    %675 = vmatpush1.xpose.msra.mxu0 0.0
    %676 = vmatprep.subr.mxu0 0.0
    %677 = vmatpush1.xpose.msra.mxu0 0.0
    %678 = vmatprep.subr.mxu0 0.0
    %679 = vmatpush1.xpose.msra.mxu0 0.0
    %680 = vmatprep.subr.mxu0 0.0
    %681 = vmatpush1.xpose.msra.mxu0 0.0
    %682 = vmatprep.subr.mxu0 0.0
    %683 = vmatpush1.xpose.msra.mxu0 0.0
    %684 = vmatprep.subr.mxu0 0.0
    %685 = vmatpush1.xpose.msra.mxu0 0.0
    %686 = vmatprep.subr.mxu0 0.0
    %687 = vmatpush1.xpose.msra.mxu0 0.0
    %688 = vmatprep.subr.mxu0 0.0
    %689 = vmatpush1.xpose.msra.mxu0 0.0
    %690 = vmatprep.subr.mxu0 0.0
    %691 = vmatpush1.xpose.msra.mxu0 0.0
    %692 = vmatprep.subr.mxu0 0.0
    %693 = vmatpush1.xpose.msra.mxu0 0.0
    %694 = vmatprep.subr.mxu0 0.0
    %695 = vmatpush1.xpose.msra.mxu0 0.0
    %696 = vmatprep.subr.mxu0 0.0
    %697 = vmatpush1.xpose.msra.mxu0 0.0
    %698 = vmatprep.subr.mxu0 0.0
    %699 = vmatpush1.xpose.msra.mxu0 0.0
    %700 = vmatprep.subr.mxu0 0.0
    %701 = vmatpush1.xpose.msra.mxu0 0.0
    %702 = vmatprep.subr.mxu0 0.0
    %703 = vmatpush1.xpose.msra.mxu0 0.0
    %704 = vmatprep.subr.mxu0 0.0
    %705 = vmatpush1.xpose.msra.mxu0 0.0
    %706 = vmatprep.subr.mxu0 0.0
    %707 = vmatpush1.xpose.msra.mxu0 0.0
    %708 = vmatprep.subr.mxu0 0.0
    %709 = vmatpush1.xpose.msra.mxu0 0.0
    %710 = vmatprep.subr.mxu0 0.0
    %711 = vmatpush1.xpose.msra.mxu0 0.0
    %712 = vmatprep.mubr.f32.mxu0 0.0
    %713 = vmatmul.mubr.f32.gmra.mrb[0].mxu0 %v403
    %v714 = vpop.f32.mrb[0].mxu0
    %v715 = vadd.f32 0.0, %v714
    %v716 = vpop.f32.mrb[0].mxu0
    %717 = vmatprep.mubr.f32.mxu0 0.0
    %718 = vmatmul.mubr.f32.gmra.mrb[0].mxu0 %v406
    %v719 = vpop.f32.mrb[0].mxu0
    %v720 = vadd.f32 0.0, %v719
    %v721 = vpop.f32.mrb[0].mxu0
    %722 = vmatprep.mubr.f32.mxu0 0.0
    %723 = vmatmul.mubr.f32.gmra.mrb[0].mxu0 %v409
    %v724 = vpop.f32.mrb[0].mxu0
    %v725 = vadd.f32 0.0, %v724
    %v726 = vpop.f32.mrb[0].mxu0
    %727 = vmatprep.mubr.f32.mxu0 0.0
    %728 = vmatmul.mubr.f32.gmra.mrb[0].mxu0 %v412
    %v729 = vpop.f32.mrb[0].mxu0
    %v730 = vadd.f32 0.0, %v729
    %v731 = vpop.f32.mrb[0].mxu0
    %732 = vmatprep.mubr.f32.mxu0 0.0
    %733 = vmatmul.mubr.f32.gmra.mrb[0].mxu0 %v415
    %v734 = vpop.f32.mrb[0].mxu0
    %v735 = vadd.f32 0.0, %v734
    %v736 = vpop.f32.mrb[0].mxu0
    %737 = vmatprep.mubr.f32.mxu0 0.0
    %738 = vmatmul.mubr.f32.gmra.mrb[0].mxu0 %v418
    %v739 = vpop.f32.mrb[0].mxu0
    %v740 = vadd.f32 0.0, %v739
    %v741 = vpop.f32.mrb[0].mxu0
    %742 = vmatprep.mubr.f32.mxu0 0.0
    %743 = vmatmul.mubr.f32.gmra.mrb[0].mxu0 %v421
    %v744 = vpop.f32.mrb[0].mxu0
    %v745 = vadd.f32 0.0, %v744
    %v746 = vpop.f32.mrb[0].mxu0
    %747 = vmatprep.mubr.f32.mxu0 0.0
    %748 = vmatmul.mubr.f32.gmra.mrb[0].mxu0 %v424
    %v749 = vpop.f32.mrb[0].mxu0
    %v750 = vadd.f32 0.0, %v749
    %v751 = vpop.f32.mrb[0].mxu0
    %752 = vmatprep.mubr.f32.mxu0 0.0
    %753 = vmatmul.mubr.f32.gmra.mrb[0].mxu0 %v427
    %v754 = vpop.f32.mrb[0].mxu0
    %v755 = vadd.f32 0.0, %v754
    %v756 = vpop.f32.mrb[0].mxu0
    %757 = vmatprep.mubr.f32.mxu0 0.0
    %758 = vmatmul.mubr.f32.gmra.mrb[0].mxu0 %v430
    %v759 = vpop.f32.mrb[0].mxu0
    %v760 = vadd.f32 0.0, %v759
    %v761 = vpop.f32.mrb[0].mxu0
    %762 = vmatprep.mubr.f32.mxu0 0.0
    %763 = vmatmul.mubr.f32.gmra.mrb[0].mxu0 %v433
    %v764 = vpop.f32.mrb[0].mxu0
    %v765 = vadd.f32 0.0, %v764
    %v766 = vpop.f32.mrb[0].mxu0
    %767 = vmatprep.mubr.f32.mxu0 0.0
    %768 = vmatmul.mubr.f32.gmra.mrb[0].mxu0 %v436
    %v769 = vpop.f32.mrb[0].mxu0
    %v770 = vadd.f32 0.0, %v769
    %v771 = vpop.f32.mrb[0].mxu0
    %772 = vmatprep.mubr.f32.mxu0 0.0
    %773 = vmatmul.mubr.f32.gmra.mrb[0].mxu0 %v439
    %v774 = vpop.f32.mrb[0].mxu0
    %v775 = vadd.f32 0.0, %v774
    %v776 = vpop.f32.mrb[0].mxu0
    %777 = vmatprep.mubr.f32.mxu0 0.0
    %778 = vmatmul.mubr.f32.gmra.mrb[0].mxu0 %v442
    %v779 = vpop.f32.mrb[0].mxu0
    %v780 = vadd.f32 0.0, %v779
    %v781 = vpop.f32.mrb[0].mxu0
    %782 = vmatprep.mubr.f32.mxu0 0.0
    %783 = vmatmul.mubr.f32.gmra.mrb[0].mxu0 %v445
    %v784 = vpop.f32.mrb[0].mxu0
    %v785 = vadd.f32 0.0, %v784
    %v786 = vpop.f32.mrb[0].mxu0
    %787 = vmatprep.mubr.f32.mxu0 0.0
    %788 = vmatmul.mubr.f32.gmra.mrb[0].mxu0 %v448
    %v789 = vpop.f32.mrb[0].mxu0
    %v790 = vadd.f32 0.0, %v789
    %v791 = vpop.f32.mrb[0].mxu0
    %792 = vmatprep.mubr.f32.mxu0 0.0
    %793 = vmatmul.mubr.f32.gmra.mrb[0].mxu0 %v451
    %v794 = vpop.f32.mrb[0].mxu0
    %v795 = vadd.f32 0.0, %v794
    %v796 = vpop.f32.mrb[0].mxu0
    %797 = vmatprep.mubr.f32.mxu0 0.0
    %798 = vmatmul.mubr.f32.gmra.mrb[0].mxu0 %v454
    %v799 = vpop.f32.mrb[0].mxu0
    %v800 = vadd.f32 0.0, %v799
    %v801 = vpop.f32.mrb[0].mxu0
    %802 = vmatprep.mubr.f32.mxu0 0.0
    %803 = vmatmul.mubr.f32.gmra.mrb[0].mxu0 %v457
    %v804 = vpop.f32.mrb[0].mxu0
    %v805 = vadd.f32 0.0, %v804
    %v806 = vpop.f32.mrb[0].mxu0
    %807 = vmatprep.mubr.f32.mxu0 0.0
    %808 = vmatmul.mubr.f32.gmra.mrb[0].mxu0 %v460
    %v809 = vpop.f32.mrb[0].mxu0
    %v810 = vadd.f32 0.0, %v809
    %v811 = vpop.f32.mrb[0].mxu0
    %812 = vmatprep.mubr.f32.mxu0 0.0
    %813 = vmatmul.mubr.f32.gmra.mrb[0].mxu0 %v463
    %v814 = vpop.f32.mrb[0].mxu0
    %v815 = vadd.f32 0.0, %v814
    %v816 = vpop.f32.mrb[0].mxu0
    %817 = vmatprep.mubr.f32.mxu0 0.0
    %818 = vmatmul.mubr.f32.gmra.mrb[0].mxu0 %v466
    %v819 = vpop.f32.mrb[0].mxu0
    %v820 = vadd.f32 0.0, %v819
    %v821 = vpop.f32.mrb[0].mxu0
    %822 = vmatprep.mubr.f32.mxu0 0.0
    %823 = vmatmul.mubr.f32.gmra.mrb[0].mxu0 %v469
    %v824 = vpop.f32.mrb[0].mxu0
    %v825 = vadd.f32 0.0, %v824
    %v826 = vpop.f32.mrb[0].mxu0
    %827 = vmatprep.mubr.f32.mxu0 0.0
    %828 = vmatmul.mubr.f32.gmra.mrb[0].mxu0 %v472
    %v829 = vpop.f32.mrb[0].mxu0
    %v830 = vadd.f32 0.0, %v829
    %v831 = vpop.f32.mrb[0].mxu0
    %832 = vmatprep.mubr.f32.mxu0 0.0
    %833 = vmatmul.mubr.f32.gmra.mrb[0].mxu0 %v475
    %v834 = vpop.f32.mrb[0].mxu0
    %v835 = vadd.f32 0.0, %v834
    %v836 = vpop.f32.mrb[0].mxu0
    %837 = vmatprep.mubr.f32.mxu0 0.0
    %838 = vmatmul.mubr.f32.gmra.mrb[0].mxu0 %v478
    %v839 = vpop.f32.mrb[0].mxu0
    %v840 = vadd.f32 0.0, %v839
    %v841 = vpop.f32.mrb[0].mxu0
    %842 = vmatprep.mubr.f32.mxu0 0.0
    %843 = vmatmul.mubr.f32.gmra.mrb[0].mxu0 %v481
    %v844 = vpop.f32.mrb[0].mxu0
    %v845 = vadd.f32 0.0, %v844
    %v846 = vpop.f32.mrb[0].mxu0
    %847 = vmatprep.mubr.f32.mxu0 0.0
    %848 = vmatmul.mubr.f32.gmra.mrb[0].mxu0 %v484
    %v849 = vpop.f32.mrb[0].mxu0
    %v850 = vadd.f32 0.0, %v849
    %v851 = vpop.f32.mrb[0].mxu0
    %852 = vmatprep.mubr.f32.mxu0 0.0
    %853 = vmatmul.mubr.f32.gmra.mrb[0].mxu0 %v487
    %v854 = vpop.f32.mrb[0].mxu0
    %v855 = vadd.f32 0.0, %v854
    %v856 = vpop.f32.mrb[0].mxu0
    %857 = vmatprep.mubr.f32.mxu0 0.0
    %858 = vmatmul.mubr.f32.gmra.mrb[0].mxu0 %v490
    %v859 = vpop.f32.mrb[0].mxu0
    %v860 = vadd.f32 0.0, %v859
    %v861 = vpop.f32.mrb[0].mxu0
    %862 = vmatprep.mubr.f32.mxu0 0.0
    %863 = vmatmul.mubr.f32.gmra.mrb[0].mxu0 %v493
    %v864 = vpop.f32.mrb[0].mxu0
    %v865 = vadd.f32 0.0, %v864
    %v866 = vpop.f32.mrb[0].mxu0
    %867 = vmatprep.mubr.f32.mxu0 0.0
    %868 = vmatmul.mubr.f32.gmra.mrb[0].mxu0 %v496
    %v869 = vpop.f32.mrb[0].mxu0
    %v870 = vadd.f32 0.0, %v869
    %v871 = vpop.f32.mrb[0].mxu0
    %872 = vmatprep.mubr.f32.mxu0 0.0
    %873 = vmatmul.mubr.f32.gmra.mrb[0].mxu0 %v499
    %v874 = vpop.f32.mrb[0].mxu0
    %v875 = vadd.f32 0.0, %v874
    %v876 = vpop.f32.mrb[0].mxu0
    %877 = vmatprep.mubr.f32.mxu0 0.0
    %878 = vmatmul.mubr.f32.gmra.mrb[0].mxu0 %v502
    %v879 = vpop.f32.mrb[0].mxu0
    %v880 = vadd.f32 0.0, %v879
    %v881 = vpop.f32.mrb[0].mxu0
    %882 = vmatprep.mubr.f32.mxu0 0.0
    %883 = vmatmul.mubr.f32.gmra.mrb[0].mxu0 %v505
    %v884 = vpop.f32.mrb[0].mxu0
    %v885 = vadd.f32 0.0, %v884
    %v886 = vpop.f32.mrb[0].mxu0
    %887 = vmatprep.mubr.f32.mxu0 0.0
    %888 = vmatmul.mubr.f32.gmra.mrb[0].mxu0 %v508
    %v889 = vpop.f32.mrb[0].mxu0
    %v890 = vadd.f32 0.0, %v889
    %v891 = vpop.f32.mrb[0].mxu0
    %892 = vmatprep.mubr.f32.mxu0 0.0
    %893 = vmatmul.mubr.f32.gmra.mrb[0].mxu0 %v511
    %v894 = vpop.f32.mrb[0].mxu0
    %v895 = vadd.f32 0.0, %v894
    %v896 = vpop.f32.mrb[0].mxu0
    %897 = vmatprep.mubr.f32.mxu0 0.0
    %898 = vmatmul.mubr.f32.gmra.mrb[0].mxu0 %v514
    %v899 = vpop.f32.mrb[0].mxu0
    %v900 = vadd.f32 0.0, %v899
    %v901 = vpop.f32.mrb[0].mxu0
    %902 = vmatprep.mubr.f32.mxu0 0.0
    %903 = vmatmul.mubr.f32.gmra.mrb[0].mxu0 %v517
    %v904 = vpop.f32.mrb[0].mxu0
    %v905 = vadd.f32 0.0, %v904
    %v906 = vpop.f32.mrb[0].mxu0
    %907 = vmatprep.mubr.f32.mxu0 0.0
    %908 = vmatmul.mubr.f32.gmra.mrb[0].mxu0 %v520
    %v909 = vpop.f32.mrb[0].mxu0
    %v910 = vadd.f32 0.0, %v909
    %v911 = vpop.f32.mrb[0].mxu0
    %912 = vmatprep.mubr.f32.mxu0 0.0
    %913 = vmatmul.mubr.f32.gmra.mrb[0].mxu0 %v523
    %v914 = vpop.f32.mrb[0].mxu0
    %v915 = vadd.f32 0.0, %v914
    %v916 = vpop.f32.mrb[0].mxu0
    %917 = vmatprep.mubr.f32.mxu0 0.0
    %918 = vmatmul.mubr.f32.gmra.mrb[0].mxu0 %v526
    %v919 = vpop.f32.mrb[0].mxu0
    %v920 = vadd.f32 0.0, %v919
    %v921 = vpop.f32.mrb[0].mxu0
    %922 = vmatprep.mubr.f32.mxu0 0.0
    %923 = vmatmul.mubr.f32.gmra.mrb[0].mxu0 %v529
    %v924 = vpop.f32.mrb[0].mxu0
    %v925 = vadd.f32 0.0, %v924
    %v926 = vpop.f32.mrb[0].mxu0
    %927 = vmatprep.mubr.f32.mxu0 0.0
    %928 = vmatmul.mubr.f32.gmra.mrb[0].mxu0 %v532
    %v929 = vpop.f32.mrb[0].mxu0
    %v930 = vadd.f32 0.0, %v929
    %v931 = vpop.f32.mrb[0].mxu0
    %932 = vmatprep.mubr.f32.mxu0 0.0
    %933 = vmatmul.mubr.f32.gmra.mrb[0].mxu0 %v535
    %v934 = vpop.f32.mrb[0].mxu0
    %v935 = vadd.f32 0.0, %v934
    %v936 = vpop.f32.mrb[0].mxu0
    %937 = vmatprep.mubr.f32.mxu0 0.0
    %938 = vmatmul.mubr.f32.gmra.mrb[0].mxu0 %v538
    %v939 = vpop.f32.mrb[0].mxu0
    %v940 = vadd.f32 0.0, %v939
    %v941 = vpop.f32.mrb[0].mxu0
    %942 = vmatprep.mubr.f32.mxu0 0.0
    %943 = vmatmul.mubr.f32.gmra.mrb[0].mxu0 %v541
    %v944 = vpop.f32.mrb[0].mxu0
    %v945 = vadd.f32 0.0, %v944
    %v946 = vpop.f32.mrb[0].mxu0
    %947 = vmatprep.mubr.f32.mxu0 0.0
    %948 = vmatmul.mubr.f32.gmra.mrb[0].mxu0 %v544
    %v949 = vpop.f32.mrb[0].mxu0
    %v950 = vadd.f32 0.0, %v949
    %v951 = vpop.f32.mrb[0].mxu0
    %952 = vmatprep.mubr.f32.mxu0 0.0
    %953 = vmatmul.mubr.f32.gmra.mrb[0].mxu0 %v547
    %v954 = vpop.f32.mrb[0].mxu0
    %v955 = vadd.f32 0.0, %v954
    %v956 = vpop.f32.mrb[0].mxu0
    %957 = vmatprep.mubr.f32.mxu0 0.0
    %958 = vmatmul.mubr.f32.gmra.mrb[0].mxu0 %v550
    %v959 = vpop.f32.mrb[0].mxu0
    %v960 = vadd.f32 0.0, %v959
    %v961 = vpop.f32.mrb[0].mxu0
    %962 = vmatprep.mubr.f32.mxu0 0.0
    %963 = vmatmul.mubr.f32.gmra.mrb[0].mxu0 %v553
    %v964 = vpop.f32.mrb[0].mxu0
    %v965 = vadd.f32 0.0, %v964
    %v966 = vpop.f32.mrb[0].mxu0
    %967 = vmatprep.mubr.f32.mxu0 0.0
    %968 = vmatmul.mubr.f32.gmra.mrb[0].mxu0 %v556
    %v969 = vpop.f32.mrb[0].mxu0
    %v970 = vadd.f32 0.0, %v969
    %v971 = vpop.f32.mrb[0].mxu0
    %972 = vmatprep.mubr.f32.mxu0 0.0
    %973 = vmatmul.mubr.f32.gmra.mrb[0].mxu0 %v559
    %v974 = vpop.f32.mrb[0].mxu0
    %v975 = vadd.f32 0.0, %v974
    %v976 = vpop.f32.mrb[0].mxu0
    %977 = vmatprep.mubr.f32.mxu0 0.0
    %978 = vmatmul.mubr.f32.gmra.mrb[0].mxu0 %v562
    %v979 = vpop.f32.mrb[0].mxu0
    %v980 = vadd.f32 0.0, %v979
    %v981 = vpop.f32.mrb[0].mxu0
    %982 = vmatprep.mubr.f32.mxu0 0.0
    %983 = vmatmul.mubr.f32.gmra.mrb[0].mxu0 %v565
    %v984 = vpop.f32.mrb[0].mxu0
    %v985 = vadd.f32 0.0, %v984
    %v986 = vpop.f32.mrb[0].mxu0
    %987 = vmatprep.mubr.f32.mxu0 0.0
    %988 = vmatmul.mubr.f32.gmra.mrb[0].mxu0 %v568
    %v989 = vpop.f32.mrb[0].mxu0
    %v990 = vadd.f32 0.0, %v989
    %v991 = vpop.f32.mrb[0].mxu0
    %992 = vmatprep.mubr.f32.mxu0 0.0
    %993 = vmatmul.mubr.f32.gmra.mrb[0].mxu0 %v571
    %v994 = vpop.f32.mrb[0].mxu0
    %v995 = vadd.f32 0.0, %v994
    %v996 = vpop.f32.mrb[0].mxu0
    %997 = vmatprep.mubr.f32.mxu0 0.0
    %998 = vmatmul.mubr.f32.gmra.mrb[0].mxu0 %v574
    %v999 = vpop.f32.mrb[0].mxu0
    %v1000 = vadd.f32 0.0, %v999
    %v1001 = vpop.f32.mrb[0].mxu0
    %1002 = vmatprep.mubr.f32.mxu0 0.0
    %1003 = vmatmul.mubr.f32.gmra.mrb[0].mxu0 %v577
    %v1004 = vpop.f32.mrb[0].mxu0
    %v1005 = vadd.f32 0.0, %v1004
    %v1006 = vpop.f32.mrb[0].mxu0
    %1007 = vmatprep.mubr.f32.mxu0 0.0
    %1008 = vmatmul.mubr.f32.gmra.mrb[0].mxu0 %v580
    %v1009 = vpop.f32.mrb[0].mxu0
    %v1010 = vadd.f32 0.0, %v1009
    %v1011 = vpop.f32.mrb[0].mxu0
    %1012 = vmatprep.mubr.f32.mxu0 0.0
    %1013 = vmatmul.mubr.f32.gmra.mrb[0].mxu0 %v583
    %v1014 = vpop.f32.mrb[0].mxu0
    %v1015 = vadd.f32 0.0, %v1014
    %v1016 = vpop.f32.mrb[0].mxu0
    %1017 = vmatprep.mubr.f32.mxu0 0.0
    %1018 = vmatmul.mubr.f32.gmra.mrb[0].mxu0 %v586
    %v1019 = vpop.f32.mrb[0].mxu0
    %v1020 = vadd.f32 0.0, %v1019
    %v1021 = vpop.f32.mrb[0].mxu0
    %1022 = vmatprep.mubr.f32.mxu0 0.0
    %1023 = vmatmul.mubr.f32.gmra.mrb[0].mxu0 %v589
    %v1024 = vpop.f32.mrb[0].mxu0
    %v1025 = vadd.f32 0.0, %v1024
    %v1026 = vpop.f32.mrb[0].mxu0
    %1027 = vmatprep.mubr.f32.mxu0 0.0
    %1028 = vmatmul.mubr.f32.gmra.mrb[0].mxu0 %v592
    %v1029 = vpop.f32.mrb[0].mxu0
    %v1030 = vadd.f32 0.0, %v1029
    %v1031 = vpop.f32.mrb[0].mxu0
    %1032 = vmatprep.mubr.f32.mxu0 0.0
    %1033 = vmatmul.mubr.f32.gmra.mrb[0].mxu0 %v595
    %v1034 = vpop.f32.mrb[0].mxu0
    %v1035 = vadd.f32 0.0, %v1034
    %v1036 = vpop.f32.mrb[0].mxu0
    %1037 = vmatprep.mubr.f32.mxu0 0.0
    %1038 = vmatmul.mubr.f32.gmra.mrb[0].mxu0 %v598
    %v1039 = vpop.f32.mrb[0].mxu0
    %v1040 = vadd.f32 0.0, %v1039
    %v1041 = vpop.f32.mrb[0].mxu0
    %1042 = vmatprep.mubr.f32.mxu0 0.0
    %1043 = vmatmul.mubr.f32.gmra.mrb[0].mxu0 %v601
    %v1044 = vpop.f32.mrb[0].mxu0
    %v1045 = vadd.f32 0.0, %v1044
    %v1046 = vpop.f32.mrb[0].mxu0
    %1047 = vmatprep.mubr.f32.mxu0 0.0
    %1048 = vmatmul.mubr.f32.gmra.mrb[0].mxu0 %v604
    %v1049 = vpop.f32.mrb[0].mxu0
    %v1050 = vadd.f32 0.0, %v1049
    %v1051 = vpop.f32.mrb[0].mxu0
    %1052 = vmatprep.mubr.f32.mxu0 0.0
    %1053 = vmatmul.mubr.f32.gmra.mrb[0].mxu0 %v607
    %v1054 = vpop.f32.mrb[0].mxu0
    %v1055 = vadd.f32 0.0, %v1054
    %v1056 = vpop.f32.mrb[0].mxu0
    %1057 = vmatprep.mubr.f32.mxu0 0.0
    %1058 = vmatmul.mubr.f32.gmra.mrb[0].mxu0 %v610
    %v1059 = vpop.f32.mrb[0].mxu0
    %v1060 = vadd.f32 0.0, %v1059
    %v1061 = vpop.f32.mrb[0].mxu0
    %1062 = vmatprep.mubr.f32.mxu0 0.0
    %1063 = vmatmul.mubr.f32.gmra.mrb[0].mxu0 %v613
    %v1064 = vpop.f32.mrb[0].mxu0
    %v1065 = vadd.f32 0.0, %v1064
    %v1066 = vpop.f32.mrb[0].mxu0
    %1067 = vmatprep.mubr.f32.mxu0 0.0
    %1068 = vmatmul.mubr.f32.gmra.mrb[0].mxu0 %v616
    %v1069 = vpop.f32.mrb[0].mxu0
    %v1070 = vadd.f32 0.0, %v1069
    %v1071 = vpop.f32.mrb[0].mxu0
    %1072 = vmatprep.mubr.f32.mxu0 0.0
    %1073 = vmatmul.mubr.f32.gmra.mrb[0].mxu0 %v619
    %v1074 = vpop.f32.mrb[0].mxu0
    %v1075 = vadd.f32 0.0, %v1074
    %v1076 = vpop.f32.mrb[0].mxu0
    %1077 = vmatprep.mubr.f32.mxu0 0.0
    %1078 = vmatmul.mubr.f32.gmra.mrb[0].mxu0 %v622
    %v1079 = vpop.f32.mrb[0].mxu0
    %v1080 = vadd.f32 0.0, %v1079
    %v1081 = vpop.f32.mrb[0].mxu0
    %1082 = vmatprep.mubr.f32.mxu0 0.0
    %1083 = vmatmul.mubr.f32.gmra.mrb[0].mxu0 %v625
    %v1084 = vpop.f32.mrb[0].mxu0
    %v1085 = vadd.f32 0.0, %v1084
    %v1086 = vpop.f32.mrb[0].mxu0
    %1087 = vmatprep.mubr.f32.mxu0 0.0
    %1088 = vmatmul.mubr.f32.gmra.mrb[0].mxu0 %v628
    %v1089 = vpop.f32.mrb[0].mxu0
    %v1090 = vadd.f32 0.0, %v1089
    %v1091 = vpop.f32.mrb[0].mxu0
    %1092 = vmatprep.mubr.f32.mxu0 0.0
    %1093 = vmatmul.mubr.f32.gmra.mrb[0].mxu0 %v631
    %v1094 = vpop.f32.mrb[0].mxu0
    %v1095 = vadd.f32 0.0, %v1094
    %v1096 = vpop.f32.mrb[0].mxu0
    %1097 = vmatprep.mubr.f32.mxu0 0.0
    %1098 = vmatmul.mubr.f32.gmra.mrb[0].mxu0 %v634
    %v1099 = vpop.f32.mrb[0].mxu0
    %v1100 = vadd.f32 0.0, %v1099
    %v1101 = vpop.f32.mrb[0].mxu0
    %1102 = vmatprep.mubr.f32.mxu0 0.0
    %1103 = vmatmul.mubr.f32.gmra.mrb[0].mxu0 %v637
    %v1104 = vpop.f32.mrb[0].mxu0
    %v1105 = vadd.f32 0.0, %v1104
    %v1106 = vpop.f32.mrb[0].mxu0
    %1107 = vmatprep.mubr.f32.mxu0 0.0
    %1108 = vmatmul.mubr.f32.gmra.mrb[0].mxu0 %v640
    %v1109 = vpop.f32.mrb[0].mxu0
    %v1110 = vadd.f32 0.0, %v1109
    %v1111 = vpop.f32.mrb[0].mxu0
    %1112 = vdwg.mxu0
    %1113 = vxpose.xlu0.b32.start [1/16] %v715, 128
    %1114 = vxpose.xlu0.b32.cont [2/16] %v720, 128
    %1115 = vxpose.xlu0.b32.cont [3/16] 0.0, 128
    %1116 = vxpose.xlu0.b32.cont [4/16] 0.0, 128
    %1117 = vxpose.xlu0.b32.cont [5/16] 0.0, 128
    %1118 = vxpose.xlu0.b32.cont [6/16] 0.0, 128
    %1119 = vxpose.xlu0.b32.cont [7/16] 0.0, 128
    %1120 = vxpose.xlu0.b32.cont [8/16] 0.0, 128
    %1121 = vxpose.xlu0.b32.cont [9/16] 0.0, 128
    %1122 = vxpose.xlu0.b32.cont [10/16] 0.0, 128
    %1123 = vxpose.xlu0.b32.cont [11/16] 0.0, 128
    %1124 = vxpose.xlu0.b32.cont [12/16] 0.0, 128
    %1125 = vxpose.xlu0.b32.cont [13/16] 0.0, 128
    %1126 = vxpose.xlu0.b32.cont [14/16] 0.0, 128
    %1127 = vxpose.xlu0.b32.cont [15/16] 0.0, 128
    %1128 = vxpose.xlu0.b32.end [16/16] 0.0, 128
    %v1129 = vpop.trf.xlu0
    %v1130 = vpop.trf.xlu0
    %v1131 = vpop.trf.xlu0
    %v1132 = vpop.trf.xlu0
    %v1133 = vpop.trf.xlu0
    %v1134 = vpop.trf.xlu0
    %v1135 = vpop.trf.xlu0
    %v1136 = vpop.trf.xlu0
    %v1137 = vpop.trf.xlu0
    %v1138 = vpop.trf.xlu0
    %v1139 = vpop.trf.xlu0
    %v1140 = vpop.trf.xlu0
    %v1141 = vpop.trf.xlu0
    %v1142 = vpop.trf.xlu0
    %v1143 = vpop.trf.xlu0
    %v1144 = vpop.trf.xlu0
    %1145 = vxpose.xlu0.b32.start [1/16] %v725, 128
    %1146 = vxpose.xlu0.b32.cont [2/16] %v730, 128
    %1147 = vxpose.xlu0.b32.cont [3/16] 0.0, 128
    %1148 = vxpose.xlu0.b32.cont [4/16] 0.0, 128
    %1149 = vxpose.xlu0.b32.cont [5/16] 0.0, 128
    %1150 = vxpose.xlu0.b32.cont [6/16] 0.0, 128
    %1151 = vxpose.xlu0.b32.cont [7/16] 0.0, 128
    %1152 = vxpose.xlu0.b32.cont [8/16] 0.0, 128
    %1153 = vxpose.xlu0.b32.cont [9/16] 0.0, 128
    %1154 = vxpose.xlu0.b32.cont [10/16] 0.0, 128
    %1155 = vxpose.xlu0.b32.cont [11/16] 0.0, 128
    %1156 = vxpose.xlu0.b32.cont [12/16] 0.0, 128
    %1157 = vxpose.xlu0.b32.cont [13/16] 0.0, 128
    %1158 = vxpose.xlu0.b32.cont [14/16] 0.0, 128
    %1159 = vxpose.xlu0.b32.cont [15/16] 0.0, 128
    %1160 = vxpose.xlu0.b32.end [16/16] 0.0, 128
    %v1161 = vpop.trf.xlu0
    %v1162 = vpop.trf.xlu0
    %v1163 = vpop.trf.xlu0
    %v1164 = vpop.trf.xlu0
    %v1165 = vpop.trf.xlu0
    %v1166 = vpop.trf.xlu0
    %v1167 = vpop.trf.xlu0
    %v1168 = vpop.trf.xlu0
    %v1169 = vpop.trf.xlu0
    %v1170 = vpop.trf.xlu0
    %v1171 = vpop.trf.xlu0
    %v1172 = vpop.trf.xlu0
    %v1173 = vpop.trf.xlu0
    %v1174 = vpop.trf.xlu0
    %v1175 = vpop.trf.xlu0
    %v1176 = vpop.trf.xlu0
    %1177 = vxpose.xlu0.b32.start [1/16] %v735, 128
    %1178 = vxpose.xlu0.b32.cont [2/16] %v740, 128
    %1179 = vxpose.xlu0.b32.cont [3/16] 0.0, 128
    %1180 = vxpose.xlu0.b32.cont [4/16] 0.0, 128
    %1181 = vxpose.xlu0.b32.cont [5/16] 0.0, 128
    %1182 = vxpose.xlu0.b32.cont [6/16] 0.0, 128
    %1183 = vxpose.xlu0.b32.cont [7/16] 0.0, 128
    %1184 = vxpose.xlu0.b32.cont [8/16] 0.0, 128
    %1185 = vxpose.xlu0.b32.cont [9/16] 0.0, 128
    %1186 = vxpose.xlu0.b32.cont [10/16] 0.0, 128
    %1187 = vxpose.xlu0.b32.cont [11/16] 0.0, 128
    %1188 = vxpose.xlu0.b32.cont [12/16] 0.0, 128
    %1189 = vxpose.xlu0.b32.cont [13/16] 0.0, 128
    %1190 = vxpose.xlu0.b32.cont [14/16] 0.0, 128
    %1191 = vxpose.xlu0.b32.cont [15/16] 0.0, 128
    %1192 = vxpose.xlu0.b32.end [16/16] 0.0, 128
    %v1193 = vpop.trf.xlu0
    %v1194 = vpop.trf.xlu0
    %v1195 = vpop.trf.xlu0
    %v1196 = vpop.trf.xlu0
    %v1197 = vpop.trf.xlu0
    %v1198 = vpop.trf.xlu0
    %v1199 = vpop.trf.xlu0
    %v1200 = vpop.trf.xlu0
    %v1201 = vpop.trf.xlu0
    %v1202 = vpop.trf.xlu0
    %v1203 = vpop.trf.xlu0
    %v1204 = vpop.trf.xlu0
    %v1205 = vpop.trf.xlu0
    %v1206 = vpop.trf.xlu0
    %v1207 = vpop.trf.xlu0
    %v1208 = vpop.trf.xlu0
    %1209 = vxpose.xlu0.b32.start [1/16] %v745, 128
    %1210 = vxpose.xlu0.b32.cont [2/16] %v750, 128
    %1211 = vxpose.xlu0.b32.cont [3/16] 0.0, 128
    %1212 = vxpose.xlu0.b32.cont [4/16] 0.0, 128
    %1213 = vxpose.xlu0.b32.cont [5/16] 0.0, 128
    %1214 = vxpose.xlu0.b32.cont [6/16] 0.0, 128
    %1215 = vxpose.xlu0.b32.cont [7/16] 0.0, 128
    %1216 = vxpose.xlu0.b32.cont [8/16] 0.0, 128
    %1217 = vxpose.xlu0.b32.cont [9/16] 0.0, 128
    %1218 = vxpose.xlu0.b32.cont [10/16] 0.0, 128
    %1219 = vxpose.xlu0.b32.cont [11/16] 0.0, 128
    %1220 = vxpose.xlu0.b32.cont [12/16] 0.0, 128
    %1221 = vxpose.xlu0.b32.cont [13/16] 0.0, 128
    %1222 = vxpose.xlu0.b32.cont [14/16] 0.0, 128
    %1223 = vxpose.xlu0.b32.cont [15/16] 0.0, 128
    %1224 = vxpose.xlu0.b32.end [16/16] 0.0, 128
    %v1225 = vpop.trf.xlu0
    %v1226 = vpop.trf.xlu0
    %v1227 = vpop.trf.xlu0
    %v1228 = vpop.trf.xlu0
    %v1229 = vpop.trf.xlu0
    %v1230 = vpop.trf.xlu0
    %v1231 = vpop.trf.xlu0
    %v1232 = vpop.trf.xlu0
    %v1233 = vpop.trf.xlu0
    %v1234 = vpop.trf.xlu0
    %v1235 = vpop.trf.xlu0
    %v1236 = vpop.trf.xlu0
    %v1237 = vpop.trf.xlu0
    %v1238 = vpop.trf.xlu0
    %v1239 = vpop.trf.xlu0
    %v1240 = vpop.trf.xlu0
    %1241 = vxpose.xlu0.b32.start [1/16] %v755, 128
    %1242 = vxpose.xlu0.b32.cont [2/16] %v760, 128
    %1243 = vxpose.xlu0.b32.cont [3/16] 0.0, 128
    %1244 = vxpose.xlu0.b32.cont [4/16] 0.0, 128
    %1245 = vxpose.xlu0.b32.cont [5/16] 0.0, 128
    %1246 = vxpose.xlu0.b32.cont [6/16] 0.0, 128
    %1247 = vxpose.xlu0.b32.cont [7/16] 0.0, 128
    %1248 = vxpose.xlu0.b32.cont [8/16] 0.0, 128
    %1249 = vxpose.xlu0.b32.cont [9/16] 0.0, 128
    %1250 = vxpose.xlu0.b32.cont [10/16] 0.0, 128
    %1251 = vxpose.xlu0.b32.cont [11/16] 0.0, 128
    %1252 = vxpose.xlu0.b32.cont [12/16] 0.0, 128
    %1253 = vxpose.xlu0.b32.cont [13/16] 0.0, 128
    %1254 = vxpose.xlu0.b32.cont [14/16] 0.0, 128
    %1255 = vxpose.xlu0.b32.cont [15/16] 0.0, 128
    %1256 = vxpose.xlu0.b32.end [16/16] 0.0, 128
    %v1257 = vpop.trf.xlu0
    %v1258 = vpop.trf.xlu0
    %v1259 = vpop.trf.xlu0
    %v1260 = vpop.trf.xlu0
    %v1261 = vpop.trf.xlu0
    %v1262 = vpop.trf.xlu0
    %v1263 = vpop.trf.xlu0
    %v1264 = vpop.trf.xlu0
    %v1265 = vpop.trf.xlu0
    %v1266 = vpop.trf.xlu0
    %v1267 = vpop.trf.xlu0
    %v1268 = vpop.trf.xlu0
    %v1269 = vpop.trf.xlu0
    %v1270 = vpop.trf.xlu0
    %v1271 = vpop.trf.xlu0
    %v1272 = vpop.trf.xlu0
    %1273 = vxpose.xlu0.b32.start [1/16] %v765, 128
    %1274 = vxpose.xlu0.b32.cont [2/16] %v770, 128
    %1275 = vxpose.xlu0.b32.cont [3/16] 0.0, 128
    %1276 = vxpose.xlu0.b32.cont [4/16] 0.0, 128
    %1277 = vxpose.xlu0.b32.cont [5/16] 0.0, 128
    %1278 = vxpose.xlu0.b32.cont [6/16] 0.0, 128
    %1279 = vxpose.xlu0.b32.cont [7/16] 0.0, 128
    %1280 = vxpose.xlu0.b32.cont [8/16] 0.0, 128
    %1281 = vxpose.xlu0.b32.cont [9/16] 0.0, 128
    %1282 = vxpose.xlu0.b32.cont [10/16] 0.0, 128
    %1283 = vxpose.xlu0.b32.cont [11/16] 0.0, 128
    %1284 = vxpose.xlu0.b32.cont [12/16] 0.0, 128
    %1285 = vxpose.xlu0.b32.cont [13/16] 0.0, 128
    %1286 = vxpose.xlu0.b32.cont [14/16] 0.0, 128
    %1287 = vxpose.xlu0.b32.cont [15/16] 0.0, 128
    %1288 = vxpose.xlu0.b32.end [16/16] 0.0, 128
    %v1289 = vpop.trf.xlu0
    %v1290 = vpop.trf.xlu0
    %v1291 = vpop.trf.xlu0
    %v1292 = vpop.trf.xlu0
    %v1293 = vpop.trf.xlu0
    %v1294 = vpop.trf.xlu0
    %v1295 = vpop.trf.xlu0
    %v1296 = vpop.trf.xlu0
    %v1297 = vpop.trf.xlu0
    %v1298 = vpop.trf.xlu0
    %v1299 = vpop.trf.xlu0
    %v1300 = vpop.trf.xlu0
    %v1301 = vpop.trf.xlu0
    %v1302 = vpop.trf.xlu0
    %v1303 = vpop.trf.xlu0
    %v1304 = vpop.trf.xlu0
    %1305 = vxpose.xlu0.b32.start [1/16] %v775, 128
    %1306 = vxpose.xlu0.b32.cont [2/16] %v780, 128
    %1307 = vxpose.xlu0.b32.cont [3/16] 0.0, 128
    %1308 = vxpose.xlu0.b32.cont [4/16] 0.0, 128
    %1309 = vxpose.xlu0.b32.cont [5/16] 0.0, 128
    %1310 = vxpose.xlu0.b32.cont [6/16] 0.0, 128
    %1311 = vxpose.xlu0.b32.cont [7/16] 0.0, 128
    %1312 = vxpose.xlu0.b32.cont [8/16] 0.0, 128
    %1313 = vxpose.xlu0.b32.cont [9/16] 0.0, 128
    %1314 = vxpose.xlu0.b32.cont [10/16] 0.0, 128
    %1315 = vxpose.xlu0.b32.cont [11/16] 0.0, 128
    %1316 = vxpose.xlu0.b32.cont [12/16] 0.0, 128
    %1317 = vxpose.xlu0.b32.cont [13/16] 0.0, 128
    %1318 = vxpose.xlu0.b32.cont [14/16] 0.0, 128
    %1319 = vxpose.xlu0.b32.cont [15/16] 0.0, 128
    %1320 = vxpose.xlu0.b32.end [16/16] 0.0, 128
    %v1321 = vpop.trf.xlu0
    %v1322 = vpop.trf.xlu0
    %v1323 = vpop.trf.xlu0
    %v1324 = vpop.trf.xlu0
    %v1325 = vpop.trf.xlu0
    %v1326 = vpop.trf.xlu0
    %v1327 = vpop.trf.xlu0
    %v1328 = vpop.trf.xlu0
    %v1329 = vpop.trf.xlu0
    %v1330 = vpop.trf.xlu0
    %v1331 = vpop.trf.xlu0
    %v1332 = vpop.trf.xlu0
    %v1333 = vpop.trf.xlu0
    %v1334 = vpop.trf.xlu0
    %v1335 = vpop.trf.xlu0
    %v1336 = vpop.trf.xlu0
    %1337 = vxpose.xlu0.b32.start [1/16] %v785, 128
    %1338 = vxpose.xlu0.b32.cont [2/16] %v790, 128
    %1339 = vxpose.xlu0.b32.cont [3/16] 0.0, 128
    %1340 = vxpose.xlu0.b32.cont [4/16] 0.0, 128
    %1341 = vxpose.xlu0.b32.cont [5/16] 0.0, 128
    %1342 = vxpose.xlu0.b32.cont [6/16] 0.0, 128
    %1343 = vxpose.xlu0.b32.cont [7/16] 0.0, 128
    %1344 = vxpose.xlu0.b32.cont [8/16] 0.0, 128
    %1345 = vxpose.xlu0.b32.cont [9/16] 0.0, 128
    %1346 = vxpose.xlu0.b32.cont [10/16] 0.0, 128
    %1347 = vxpose.xlu0.b32.cont [11/16] 0.0, 128
    %1348 = vxpose.xlu0.b32.cont [12/16] 0.0, 128
    %1349 = vxpose.xlu0.b32.cont [13/16] 0.0, 128
    %1350 = vxpose.xlu0.b32.cont [14/16] 0.0, 128
    %1351 = vxpose.xlu0.b32.cont [15/16] 0.0, 128
    %1352 = vxpose.xlu0.b32.end [16/16] 0.0, 128
    %v1353 = vpop.trf.xlu0
    %v1354 = vpop.trf.xlu0
    %v1355 = vpop.trf.xlu0
    %v1356 = vpop.trf.xlu0
    %v1357 = vpop.trf.xlu0
    %v1358 = vpop.trf.xlu0
    %v1359 = vpop.trf.xlu0
    %v1360 = vpop.trf.xlu0
    %v1361 = vpop.trf.xlu0
    %v1362 = vpop.trf.xlu0
    %v1363 = vpop.trf.xlu0
    %v1364 = vpop.trf.xlu0
    %v1365 = vpop.trf.xlu0
    %v1366 = vpop.trf.xlu0
    %v1367 = vpop.trf.xlu0
    %v1368 = vpop.trf.xlu0
    %1369 = vxpose.xlu0.b32.start [1/16] %v795, 128
    %1370 = vxpose.xlu0.b32.cont [2/16] %v800, 128
    %1371 = vxpose.xlu0.b32.cont [3/16] 0.0, 128
    %1372 = vxpose.xlu0.b32.cont [4/16] 0.0, 128
    %1373 = vxpose.xlu0.b32.cont [5/16] 0.0, 128
    %1374 = vxpose.xlu0.b32.cont [6/16] 0.0, 128
    %1375 = vxpose.xlu0.b32.cont [7/16] 0.0, 128
    %1376 = vxpose.xlu0.b32.cont [8/16] 0.0, 128
    %1377 = vxpose.xlu0.b32.cont [9/16] 0.0, 128
    %1378 = vxpose.xlu0.b32.cont [10/16] 0.0, 128
    %1379 = vxpose.xlu0.b32.cont [11/16] 0.0, 128
    %1380 = vxpose.xlu0.b32.cont [12/16] 0.0, 128
    %1381 = vxpose.xlu0.b32.cont [13/16] 0.0, 128
    %1382 = vxpose.xlu0.b32.cont [14/16] 0.0, 128
    %1383 = vxpose.xlu0.b32.cont [15/16] 0.0, 128
    %1384 = vxpose.xlu0.b32.end [16/16] 0.0, 128
    %v1385 = vpop.trf.xlu0
    %v1386 = vpop.trf.xlu0
    %v1387 = vpop.trf.xlu0
    %v1388 = vpop.trf.xlu0
    %v1389 = vpop.trf.xlu0
    %v1390 = vpop.trf.xlu0
    %v1391 = vpop.trf.xlu0
    %v1392 = vpop.trf.xlu0
    %v1393 = vpop.trf.xlu0
    %v1394 = vpop.trf.xlu0
    %v1395 = vpop.trf.xlu0
    %v1396 = vpop.trf.xlu0
    %v1397 = vpop.trf.xlu0
    %v1398 = vpop.trf.xlu0
    %v1399 = vpop.trf.xlu0
    %v1400 = vpop.trf.xlu0
    %1401 = vxpose.xlu0.b32.start [1/16] %v805, 128
    %1402 = vxpose.xlu0.b32.cont [2/16] %v810, 128
    %1403 = vxpose.xlu0.b32.cont [3/16] 0.0, 128
    %1404 = vxpose.xlu0.b32.cont [4/16] 0.0, 128
    %1405 = vxpose.xlu0.b32.cont [5/16] 0.0, 128
    %1406 = vxpose.xlu0.b32.cont [6/16] 0.0, 128
    %1407 = vxpose.xlu0.b32.cont [7/16] 0.0, 128
    %1408 = vxpose.xlu0.b32.cont [8/16] 0.0, 128
    %1409 = vxpose.xlu0.b32.cont [9/16] 0.0, 128
    %1410 = vxpose.xlu0.b32.cont [10/16] 0.0, 128
    %1411 = vxpose.xlu0.b32.cont [11/16] 0.0, 128
    %1412 = vxpose.xlu0.b32.cont [12/16] 0.0, 128
    %1413 = vxpose.xlu0.b32.cont [13/16] 0.0, 128
    %1414 = vxpose.xlu0.b32.cont [14/16] 0.0, 128
    %1415 = vxpose.xlu0.b32.cont [15/16] 0.0, 128
    %1416 = vxpose.xlu0.b32.end [16/16] 0.0, 128
    %v1417 = vpop.trf.xlu0
    %v1418 = vpop.trf.xlu0
    %v1419 = vpop.trf.xlu0
    %v1420 = vpop.trf.xlu0
    %v1421 = vpop.trf.xlu0
    %v1422 = vpop.trf.xlu0
    %v1423 = vpop.trf.xlu0
    %v1424 = vpop.trf.xlu0
    %v1425 = vpop.trf.xlu0
    %v1426 = vpop.trf.xlu0
    %v1427 = vpop.trf.xlu0
    %v1428 = vpop.trf.xlu0
    %v1429 = vpop.trf.xlu0
    %v1430 = vpop.trf.xlu0
    %v1431 = vpop.trf.xlu0
    %v1432 = vpop.trf.xlu0
    %1433 = vxpose.xlu0.b32.start [1/16] %v815, 128
    %1434 = vxpose.xlu0.b32.cont [2/16] %v820, 128
    %1435 = vxpose.xlu0.b32.cont [3/16] 0.0, 128
    %1436 = vxpose.xlu0.b32.cont [4/16] 0.0, 128
    %1437 = vxpose.xlu0.b32.cont [5/16] 0.0, 128
    %1438 = vxpose.xlu0.b32.cont [6/16] 0.0, 128
    %1439 = vxpose.xlu0.b32.cont [7/16] 0.0, 128
    %1440 = vxpose.xlu0.b32.cont [8/16] 0.0, 128
    %1441 = vxpose.xlu0.b32.cont [9/16] 0.0, 128
    %1442 = vxpose.xlu0.b32.cont [10/16] 0.0, 128
    %1443 = vxpose.xlu0.b32.cont [11/16] 0.0, 128
    %1444 = vxpose.xlu0.b32.cont [12/16] 0.0, 128
    %1445 = vxpose.xlu0.b32.cont [13/16] 0.0, 128
    %1446 = vxpose.xlu0.b32.cont [14/16] 0.0, 128
    %1447 = vxpose.xlu0.b32.cont [15/16] 0.0, 128
    %1448 = vxpose.xlu0.b32.end [16/16] 0.0, 128
    %v1449 = vpop.trf.xlu0
    %v1450 = vpop.trf.xlu0
    %v1451 = vpop.trf.xlu0
    %v1452 = vpop.trf.xlu0
    %v1453 = vpop.trf.xlu0
    %v1454 = vpop.trf.xlu0
    %v1455 = vpop.trf.xlu0
    %v1456 = vpop.trf.xlu0
    %v1457 = vpop.trf.xlu0
    %v1458 = vpop.trf.xlu0
    %v1459 = vpop.trf.xlu0
    %v1460 = vpop.trf.xlu0
    %v1461 = vpop.trf.xlu0
    %v1462 = vpop.trf.xlu0
    %v1463 = vpop.trf.xlu0
    %v1464 = vpop.trf.xlu0
    %1465 = vxpose.xlu0.b32.start [1/16] %v825, 128
    %1466 = vxpose.xlu0.b32.cont [2/16] %v830, 128
    %1467 = vxpose.xlu0.b32.cont [3/16] 0.0, 128
    %1468 = vxpose.xlu0.b32.cont [4/16] 0.0, 128
    %1469 = vxpose.xlu0.b32.cont [5/16] 0.0, 128
    %1470 = vxpose.xlu0.b32.cont [6/16] 0.0, 128
    %1471 = vxpose.xlu0.b32.cont [7/16] 0.0, 128
    %1472 = vxpose.xlu0.b32.cont [8/16] 0.0, 128
    %1473 = vxpose.xlu0.b32.cont [9/16] 0.0, 128
    %1474 = vxpose.xlu0.b32.cont [10/16] 0.0, 128
    %1475 = vxpose.xlu0.b32.cont [11/16] 0.0, 128
    %1476 = vxpose.xlu0.b32.cont [12/16] 0.0, 128
    %1477 = vxpose.xlu0.b32.cont [13/16] 0.0, 128
    %1478 = vxpose.xlu0.b32.cont [14/16] 0.0, 128
    %1479 = vxpose.xlu0.b32.cont [15/16] 0.0, 128
    %1480 = vxpose.xlu0.b32.end [16/16] 0.0, 128
    %v1481 = vpop.trf.xlu0
    %v1482 = vpop.trf.xlu0
    %v1483 = vpop.trf.xlu0
    %v1484 = vpop.trf.xlu0
    %v1485 = vpop.trf.xlu0
    %v1486 = vpop.trf.xlu0
    %v1487 = vpop.trf.xlu0
    %v1488 = vpop.trf.xlu0
    %v1489 = vpop.trf.xlu0
    %v1490 = vpop.trf.xlu0
    %v1491 = vpop.trf.xlu0
    %v1492 = vpop.trf.xlu0
    %v1493 = vpop.trf.xlu0
    %v1494 = vpop.trf.xlu0
    %v1495 = vpop.trf.xlu0
    %v1496 = vpop.trf.xlu0
    %1497 = vxpose.xlu0.b32.start [1/16] %v835, 128
    %1498 = vxpose.xlu0.b32.cont [2/16] %v840, 128
    %1499 = vxpose.xlu0.b32.cont [3/16] 0.0, 128
    %1500 = vxpose.xlu0.b32.cont [4/16] 0.0, 128
    %1501 = vxpose.xlu0.b32.cont [5/16] 0.0, 128
    %1502 = vxpose.xlu0.b32.cont [6/16] 0.0, 128
    %1503 = vxpose.xlu0.b32.cont [7/16] 0.0, 128
    %1504 = vxpose.xlu0.b32.cont [8/16] 0.0, 128
    %1505 = vxpose.xlu0.b32.cont [9/16] 0.0, 128
    %1506 = vxpose.xlu0.b32.cont [10/16] 0.0, 128
    %1507 = vxpose.xlu0.b32.cont [11/16] 0.0, 128
    %1508 = vxpose.xlu0.b32.cont [12/16] 0.0, 128
    %1509 = vxpose.xlu0.b32.cont [13/16] 0.0, 128
    %1510 = vxpose.xlu0.b32.cont [14/16] 0.0, 128
    %1511 = vxpose.xlu0.b32.cont [15/16] 0.0, 128
    %1512 = vxpose.xlu0.b32.end [16/16] 0.0, 128
    %v1513 = vpop.trf.xlu0
    %v1514 = vpop.trf.xlu0
    %v1515 = vpop.trf.xlu0
    %v1516 = vpop.trf.xlu0
    %v1517 = vpop.trf.xlu0
    %v1518 = vpop.trf.xlu0
    %v1519 = vpop.trf.xlu0
    %v1520 = vpop.trf.xlu0
    %v1521 = vpop.trf.xlu0
    %v1522 = vpop.trf.xlu0
    %v1523 = vpop.trf.xlu0
    %v1524 = vpop.trf.xlu0
    %v1525 = vpop.trf.xlu0
    %v1526 = vpop.trf.xlu0
    %v1527 = vpop.trf.xlu0
    %v1528 = vpop.trf.xlu0
    %1529 = vxpose.xlu0.b32.start [1/16] %v845, 128
    %1530 = vxpose.xlu0.b32.cont [2/16] %v850, 128
    %1531 = vxpose.xlu0.b32.cont [3/16] 0.0, 128
    %1532 = vxpose.xlu0.b32.cont [4/16] 0.0, 128
    %1533 = vxpose.xlu0.b32.cont [5/16] 0.0, 128
    %1534 = vxpose.xlu0.b32.cont [6/16] 0.0, 128
    %1535 = vxpose.xlu0.b32.cont [7/16] 0.0, 128
    %1536 = vxpose.xlu0.b32.cont [8/16] 0.0, 128
    %1537 = vxpose.xlu0.b32.cont [9/16] 0.0, 128
    %1538 = vxpose.xlu0.b32.cont [10/16] 0.0, 128
    %1539 = vxpose.xlu0.b32.cont [11/16] 0.0, 128
    %1540 = vxpose.xlu0.b32.cont [12/16] 0.0, 128
    %1541 = vxpose.xlu0.b32.cont [13/16] 0.0, 128
    %1542 = vxpose.xlu0.b32.cont [14/16] 0.0, 128
    %1543 = vxpose.xlu0.b32.cont [15/16] 0.0, 128
    %1544 = vxpose.xlu0.b32.end [16/16] 0.0, 128
    %v1545 = vpop.trf.xlu0
    %v1546 = vpop.trf.xlu0
    %v1547 = vpop.trf.xlu0
    %v1548 = vpop.trf.xlu0
    %v1549 = vpop.trf.xlu0
    %v1550 = vpop.trf.xlu0
    %v1551 = vpop.trf.xlu0
    %v1552 = vpop.trf.xlu0
    %v1553 = vpop.trf.xlu0
    %v1554 = vpop.trf.xlu0
    %v1555 = vpop.trf.xlu0
    %v1556 = vpop.trf.xlu0
    %v1557 = vpop.trf.xlu0
    %v1558 = vpop.trf.xlu0
    %v1559 = vpop.trf.xlu0
    %v1560 = vpop.trf.xlu0
    %1561 = vxpose.xlu0.b32.start [1/16] %v855, 128
    %1562 = vxpose.xlu0.b32.cont [2/16] %v860, 128
    %1563 = vxpose.xlu0.b32.cont [3/16] 0.0, 128
    %1564 = vxpose.xlu0.b32.cont [4/16] 0.0, 128
    %1565 = vxpose.xlu0.b32.cont [5/16] 0.0, 128
    %1566 = vxpose.xlu0.b32.cont [6/16] 0.0, 128
    %1567 = vxpose.xlu0.b32.cont [7/16] 0.0, 128
    %1568 = vxpose.xlu0.b32.cont [8/16] 0.0, 128
    %1569 = vxpose.xlu0.b32.cont [9/16] 0.0, 128
    %1570 = vxpose.xlu0.b32.cont [10/16] 0.0, 128
    %1571 = vxpose.xlu0.b32.cont [11/16] 0.0, 128
    %1572 = vxpose.xlu0.b32.cont [12/16] 0.0, 128
    %1573 = vxpose.xlu0.b32.cont [13/16] 0.0, 128
    %1574 = vxpose.xlu0.b32.cont [14/16] 0.0, 128
    %1575 = vxpose.xlu0.b32.cont [15/16] 0.0, 128
    %1576 = vxpose.xlu0.b32.end [16/16] 0.0, 128
    %v1577 = vpop.trf.xlu0
    %v1578 = vpop.trf.xlu0
    %v1579 = vpop.trf.xlu0
    %v1580 = vpop.trf.xlu0
    %v1581 = vpop.trf.xlu0
    %v1582 = vpop.trf.xlu0
    %v1583 = vpop.trf.xlu0
    %v1584 = vpop.trf.xlu0
    %v1585 = vpop.trf.xlu0
    %v1586 = vpop.trf.xlu0
    %v1587 = vpop.trf.xlu0
    %v1588 = vpop.trf.xlu0
    %v1589 = vpop.trf.xlu0
    %v1590 = vpop.trf.xlu0
    %v1591 = vpop.trf.xlu0
    %v1592 = vpop.trf.xlu0
    %1593 = vxpose.xlu0.b32.start [1/16] %v865, 128
    %1594 = vxpose.xlu0.b32.cont [2/16] %v870, 128
    %1595 = vxpose.xlu0.b32.cont [3/16] 0.0, 128
    %1596 = vxpose.xlu0.b32.cont [4/16] 0.0, 128
    %1597 = vxpose.xlu0.b32.cont [5/16] 0.0, 128
    %1598 = vxpose.xlu0.b32.cont [6/16] 0.0, 128
    %1599 = vxpose.xlu0.b32.cont [7/16] 0.0, 128
    %1600 = vxpose.xlu0.b32.cont [8/16] 0.0, 128
    %1601 = vxpose.xlu0.b32.cont [9/16] 0.0, 128
    %1602 = vxpose.xlu0.b32.cont [10/16] 0.0, 128
    %1603 = vxpose.xlu0.b32.cont [11/16] 0.0, 128
    %1604 = vxpose.xlu0.b32.cont [12/16] 0.0, 128
    %1605 = vxpose.xlu0.b32.cont [13/16] 0.0, 128
    %1606 = vxpose.xlu0.b32.cont [14/16] 0.0, 128
    %1607 = vxpose.xlu0.b32.cont [15/16] 0.0, 128
    %1608 = vxpose.xlu0.b32.end [16/16] 0.0, 128
    %v1609 = vpop.trf.xlu0
    %v1610 = vpop.trf.xlu0
    %v1611 = vpop.trf.xlu0
    %v1612 = vpop.trf.xlu0
    %v1613 = vpop.trf.xlu0
    %v1614 = vpop.trf.xlu0
    %v1615 = vpop.trf.xlu0
    %v1616 = vpop.trf.xlu0
    %v1617 = vpop.trf.xlu0
    %v1618 = vpop.trf.xlu0
    %v1619 = vpop.trf.xlu0
    %v1620 = vpop.trf.xlu0
    %v1621 = vpop.trf.xlu0
    %v1622 = vpop.trf.xlu0
    %v1623 = vpop.trf.xlu0
    %v1624 = vpop.trf.xlu0
    %1625 = vxpose.xlu0.b32.start [1/16] %v875, 128
    %1626 = vxpose.xlu0.b32.cont [2/16] %v880, 128
    %1627 = vxpose.xlu0.b32.cont [3/16] 0.0, 128
    %1628 = vxpose.xlu0.b32.cont [4/16] 0.0, 128
    %1629 = vxpose.xlu0.b32.cont [5/16] 0.0, 128
    %1630 = vxpose.xlu0.b32.cont [6/16] 0.0, 128
    %1631 = vxpose.xlu0.b32.cont [7/16] 0.0, 128
    %1632 = vxpose.xlu0.b32.cont [8/16] 0.0, 128
    %1633 = vxpose.xlu0.b32.cont [9/16] 0.0, 128
    %1634 = vxpose.xlu0.b32.cont [10/16] 0.0, 128
    %1635 = vxpose.xlu0.b32.cont [11/16] 0.0, 128
    %1636 = vxpose.xlu0.b32.cont [12/16] 0.0, 128
    %1637 = vxpose.xlu0.b32.cont [13/16] 0.0, 128
    %1638 = vxpose.xlu0.b32.cont [14/16] 0.0, 128
    %1639 = vxpose.xlu0.b32.cont [15/16] 0.0, 128
    %1640 = vxpose.xlu0.b32.end [16/16] 0.0, 128
    %v1641 = vpop.trf.xlu0
    %v1642 = vpop.trf.xlu0
    %v1643 = vpop.trf.xlu0
    %v1644 = vpop.trf.xlu0
    %v1645 = vpop.trf.xlu0
    %v1646 = vpop.trf.xlu0
    %v1647 = vpop.trf.xlu0
    %v1648 = vpop.trf.xlu0
    %v1649 = vpop.trf.xlu0
    %v1650 = vpop.trf.xlu0
    %v1651 = vpop.trf.xlu0
    %v1652 = vpop.trf.xlu0
    %v1653 = vpop.trf.xlu0
    %v1654 = vpop.trf.xlu0
    %v1655 = vpop.trf.xlu0
    %v1656 = vpop.trf.xlu0
    %1657 = vxpose.xlu0.b32.start [1/16] %v885, 128
    %1658 = vxpose.xlu0.b32.cont [2/16] %v890, 128
    %1659 = vxpose.xlu0.b32.cont [3/16] 0.0, 128
    %1660 = vxpose.xlu0.b32.cont [4/16] 0.0, 128
    %1661 = vxpose.xlu0.b32.cont [5/16] 0.0, 128
    %1662 = vxpose.xlu0.b32.cont [6/16] 0.0, 128
    %1663 = vxpose.xlu0.b32.cont [7/16] 0.0, 128
    %1664 = vxpose.xlu0.b32.cont [8/16] 0.0, 128
    %1665 = vxpose.xlu0.b32.cont [9/16] 0.0, 128
    %1666 = vxpose.xlu0.b32.cont [10/16] 0.0, 128
    %1667 = vxpose.xlu0.b32.cont [11/16] 0.0, 128
    %1668 = vxpose.xlu0.b32.cont [12/16] 0.0, 128
    %1669 = vxpose.xlu0.b32.cont [13/16] 0.0, 128
    %1670 = vxpose.xlu0.b32.cont [14/16] 0.0, 128
    %1671 = vxpose.xlu0.b32.cont [15/16] 0.0, 128
    %1672 = vxpose.xlu0.b32.end [16/16] 0.0, 128
    %v1673 = vpop.trf.xlu0
    %v1674 = vpop.trf.xlu0
    %v1675 = vpop.trf.xlu0
    %v1676 = vpop.trf.xlu0
    %v1677 = vpop.trf.xlu0
    %v1678 = vpop.trf.xlu0
    %v1679 = vpop.trf.xlu0
    %v1680 = vpop.trf.xlu0
    %v1681 = vpop.trf.xlu0
    %v1682 = vpop.trf.xlu0
    %v1683 = vpop.trf.xlu0
    %v1684 = vpop.trf.xlu0
    %v1685 = vpop.trf.xlu0
    %v1686 = vpop.trf.xlu0
    %v1687 = vpop.trf.xlu0
    %v1688 = vpop.trf.xlu0
    %1689 = vxpose.xlu0.b32.start [1/16] %v895, 128
    %1690 = vxpose.xlu0.b32.cont [2/16] %v900, 128
    %1691 = vxpose.xlu0.b32.cont [3/16] 0.0, 128
    %1692 = vxpose.xlu0.b32.cont [4/16] 0.0, 128
    %1693 = vxpose.xlu0.b32.cont [5/16] 0.0, 128
    %1694 = vxpose.xlu0.b32.cont [6/16] 0.0, 128
    %1695 = vxpose.xlu0.b32.cont [7/16] 0.0, 128
    %1696 = vxpose.xlu0.b32.cont [8/16] 0.0, 128
    %1697 = vxpose.xlu0.b32.cont [9/16] 0.0, 128
    %1698 = vxpose.xlu0.b32.cont [10/16] 0.0, 128
    %1699 = vxpose.xlu0.b32.cont [11/16] 0.0, 128
    %1700 = vxpose.xlu0.b32.cont [12/16] 0.0, 128
    %1701 = vxpose.xlu0.b32.cont [13/16] 0.0, 128
    %1702 = vxpose.xlu0.b32.cont [14/16] 0.0, 128
    %1703 = vxpose.xlu0.b32.cont [15/16] 0.0, 128
    %1704 = vxpose.xlu0.b32.end [16/16] 0.0, 128
    %v1705 = vpop.trf.xlu0
    %v1706 = vpop.trf.xlu0
    %v1707 = vpop.trf.xlu0
    %v1708 = vpop.trf.xlu0
    %v1709 = vpop.trf.xlu0
    %v1710 = vpop.trf.xlu0
    %v1711 = vpop.trf.xlu0
    %v1712 = vpop.trf.xlu0
    %v1713 = vpop.trf.xlu0
    %v1714 = vpop.trf.xlu0
    %v1715 = vpop.trf.xlu0
    %v1716 = vpop.trf.xlu0
    %v1717 = vpop.trf.xlu0
    %v1718 = vpop.trf.xlu0
    %v1719 = vpop.trf.xlu0
    %v1720 = vpop.trf.xlu0
    %1721 = vxpose.xlu0.b32.start [1/16] %v905, 128
    %1722 = vxpose.xlu0.b32.cont [2/16] %v910, 128
    %1723 = vxpose.xlu0.b32.cont [3/16] 0.0, 128
    %1724 = vxpose.xlu0.b32.cont [4/16] 0.0, 128
    %1725 = vxpose.xlu0.b32.cont [5/16] 0.0, 128
    %1726 = vxpose.xlu0.b32.cont [6/16] 0.0, 128
    %1727 = vxpose.xlu0.b32.cont [7/16] 0.0, 128
    %1728 = vxpose.xlu0.b32.cont [8/16] 0.0, 128
    %1729 = vxpose.xlu0.b32.cont [9/16] 0.0, 128
    %1730 = vxpose.xlu0.b32.cont [10/16] 0.0, 128
    %1731 = vxpose.xlu0.b32.cont [11/16] 0.0, 128
    %1732 = vxpose.xlu0.b32.cont [12/16] 0.0, 128
    %1733 = vxpose.xlu0.b32.cont [13/16] 0.0, 128
    %1734 = vxpose.xlu0.b32.cont [14/16] 0.0, 128
    %1735 = vxpose.xlu0.b32.cont [15/16] 0.0, 128
    %1736 = vxpose.xlu0.b32.end [16/16] 0.0, 128
    %v1737 = vpop.trf.xlu0
    %v1738 = vpop.trf.xlu0
    %v1739 = vpop.trf.xlu0
    %v1740 = vpop.trf.xlu0
    %v1741 = vpop.trf.xlu0
    %v1742 = vpop.trf.xlu0
    %v1743 = vpop.trf.xlu0
    %v1744 = vpop.trf.xlu0
    %v1745 = vpop.trf.xlu0
    %v1746 = vpop.trf.xlu0
    %v1747 = vpop.trf.xlu0
    %v1748 = vpop.trf.xlu0
    %v1749 = vpop.trf.xlu0
    %v1750 = vpop.trf.xlu0
    %v1751 = vpop.trf.xlu0
    %v1752 = vpop.trf.xlu0
    %1753 = vxpose.xlu0.b32.start [1/16] %v915, 128
    %1754 = vxpose.xlu0.b32.cont [2/16] %v920, 128
    %1755 = vxpose.xlu0.b32.cont [3/16] 0.0, 128
    %1756 = vxpose.xlu0.b32.cont [4/16] 0.0, 128
    %1757 = vxpose.xlu0.b32.cont [5/16] 0.0, 128
    %1758 = vxpose.xlu0.b32.cont [6/16] 0.0, 128
    %1759 = vxpose.xlu0.b32.cont [7/16] 0.0, 128
    %1760 = vxpose.xlu0.b32.cont [8/16] 0.0, 128
    %1761 = vxpose.xlu0.b32.cont [9/16] 0.0, 128
    %1762 = vxpose.xlu0.b32.cont [10/16] 0.0, 128
    %1763 = vxpose.xlu0.b32.cont [11/16] 0.0, 128
    %1764 = vxpose.xlu0.b32.cont [12/16] 0.0, 128
    %1765 = vxpose.xlu0.b32.cont [13/16] 0.0, 128
    %1766 = vxpose.xlu0.b32.cont [14/16] 0.0, 128
    %1767 = vxpose.xlu0.b32.cont [15/16] 0.0, 128
    %1768 = vxpose.xlu0.b32.end [16/16] 0.0, 128
    %v1769 = vpop.trf.xlu0
    %v1770 = vpop.trf.xlu0
    %v1771 = vpop.trf.xlu0
    %v1772 = vpop.trf.xlu0
    %v1773 = vpop.trf.xlu0
    %v1774 = vpop.trf.xlu0
    %v1775 = vpop.trf.xlu0
    %v1776 = vpop.trf.xlu0
    %v1777 = vpop.trf.xlu0
    %v1778 = vpop.trf.xlu0
    %v1779 = vpop.trf.xlu0
    %v1780 = vpop.trf.xlu0
    %v1781 = vpop.trf.xlu0
    %v1782 = vpop.trf.xlu0
    %v1783 = vpop.trf.xlu0
    %v1784 = vpop.trf.xlu0
    %1785 = vxpose.xlu0.b32.start [1/16] %v925, 128
    %1786 = vxpose.xlu0.b32.cont [2/16] %v930, 128
    %1787 = vxpose.xlu0.b32.cont [3/16] 0.0, 128
    %1788 = vxpose.xlu0.b32.cont [4/16] 0.0, 128
    %1789 = vxpose.xlu0.b32.cont [5/16] 0.0, 128
    %1790 = vxpose.xlu0.b32.cont [6/16] 0.0, 128
    %1791 = vxpose.xlu0.b32.cont [7/16] 0.0, 128
    %1792 = vxpose.xlu0.b32.cont [8/16] 0.0, 128
    %1793 = vxpose.xlu0.b32.cont [9/16] 0.0, 128
    %1794 = vxpose.xlu0.b32.cont [10/16] 0.0, 128
    %1795 = vxpose.xlu0.b32.cont [11/16] 0.0, 128
    %1796 = vxpose.xlu0.b32.cont [12/16] 0.0, 128
    %1797 = vxpose.xlu0.b32.cont [13/16] 0.0, 128
    %1798 = vxpose.xlu0.b32.cont [14/16] 0.0, 128
    %1799 = vxpose.xlu0.b32.cont [15/16] 0.0, 128
    %1800 = vxpose.xlu0.b32.end [16/16] 0.0, 128
    %v1801 = vpop.trf.xlu0
    %v1802 = vpop.trf.xlu0
    %v1803 = vpop.trf.xlu0
    %v1804 = vpop.trf.xlu0
    %v1805 = vpop.trf.xlu0
    %v1806 = vpop.trf.xlu0
    %v1807 = vpop.trf.xlu0
    %v1808 = vpop.trf.xlu0
    %v1809 = vpop.trf.xlu0
    %v1810 = vpop.trf.xlu0
    %v1811 = vpop.trf.xlu0
    %v1812 = vpop.trf.xlu0
    %v1813 = vpop.trf.xlu0
    %v1814 = vpop.trf.xlu0
    %v1815 = vpop.trf.xlu0
    %v1816 = vpop.trf.xlu0
    %1817 = vxpose.xlu0.b32.start [1/16] %v935, 128
    %1818 = vxpose.xlu0.b32.cont [2/16] %v940, 128
    %1819 = vxpose.xlu0.b32.cont [3/16] 0.0, 128
    %1820 = vxpose.xlu0.b32.cont [4/16] 0.0, 128
    %1821 = vxpose.xlu0.b32.cont [5/16] 0.0, 128
    %1822 = vxpose.xlu0.b32.cont [6/16] 0.0, 128
    %1823 = vxpose.xlu0.b32.cont [7/16] 0.0, 128
    %1824 = vxpose.xlu0.b32.cont [8/16] 0.0, 128
    %1825 = vxpose.xlu0.b32.cont [9/16] 0.0, 128
    %1826 = vxpose.xlu0.b32.cont [10/16] 0.0, 128
    %1827 = vxpose.xlu0.b32.cont [11/16] 0.0, 128
    %1828 = vxpose.xlu0.b32.cont [12/16] 0.0, 128
    %1829 = vxpose.xlu0.b32.cont [13/16] 0.0, 128
    %1830 = vxpose.xlu0.b32.cont [14/16] 0.0, 128
    %1831 = vxpose.xlu0.b32.cont [15/16] 0.0, 128
    %1832 = vxpose.xlu0.b32.end [16/16] 0.0, 128
    %v1833 = vpop.trf.xlu0
    %v1834 = vpop.trf.xlu0
    %v1835 = vpop.trf.xlu0
    %v1836 = vpop.trf.xlu0
    %v1837 = vpop.trf.xlu0
    %v1838 = vpop.trf.xlu0
    %v1839 = vpop.trf.xlu0
    %v1840 = vpop.trf.xlu0
    %v1841 = vpop.trf.xlu0
    %v1842 = vpop.trf.xlu0
    %v1843 = vpop.trf.xlu0
    %v1844 = vpop.trf.xlu0
    %v1845 = vpop.trf.xlu0
    %v1846 = vpop.trf.xlu0
    %v1847 = vpop.trf.xlu0
    %v1848 = vpop.trf.xlu0
    %1849 = vxpose.xlu0.b32.start [1/16] %v945, 128
    %1850 = vxpose.xlu0.b32.cont [2/16] %v950, 128
    %1851 = vxpose.xlu0.b32.cont [3/16] 0.0, 128
    %1852 = vxpose.xlu0.b32.cont [4/16] 0.0, 128
    %1853 = vxpose.xlu0.b32.cont [5/16] 0.0, 128
    %1854 = vxpose.xlu0.b32.cont [6/16] 0.0, 128
    %1855 = vxpose.xlu0.b32.cont [7/16] 0.0, 128
    %1856 = vxpose.xlu0.b32.cont [8/16] 0.0, 128
    %1857 = vxpose.xlu0.b32.cont [9/16] 0.0, 128
    %1858 = vxpose.xlu0.b32.cont [10/16] 0.0, 128
    %1859 = vxpose.xlu0.b32.cont [11/16] 0.0, 128
    %1860 = vxpose.xlu0.b32.cont [12/16] 0.0, 128
    %1861 = vxpose.xlu0.b32.cont [13/16] 0.0, 128
    %1862 = vxpose.xlu0.b32.cont [14/16] 0.0, 128
    %1863 = vxpose.xlu0.b32.cont [15/16] 0.0, 128
    %1864 = vxpose.xlu0.b32.end [16/16] 0.0, 128
    %v1865 = vpop.trf.xlu0
    %v1866 = vpop.trf.xlu0
    %v1867 = vpop.trf.xlu0
    %v1868 = vpop.trf.xlu0
    %v1869 = vpop.trf.xlu0
    %v1870 = vpop.trf.xlu0
    %v1871 = vpop.trf.xlu0
    %v1872 = vpop.trf.xlu0
    %v1873 = vpop.trf.xlu0
    %v1874 = vpop.trf.xlu0
    %v1875 = vpop.trf.xlu0
    %v1876 = vpop.trf.xlu0
    %v1877 = vpop.trf.xlu0
    %v1878 = vpop.trf.xlu0
    %v1879 = vpop.trf.xlu0
    %v1880 = vpop.trf.xlu0
    %1881 = vxpose.xlu0.b32.start [1/16] %v955, 128
    %1882 = vxpose.xlu0.b32.cont [2/16] %v960, 128
    %1883 = vxpose.xlu0.b32.cont [3/16] 0.0, 128
    %1884 = vxpose.xlu0.b32.cont [4/16] 0.0, 128
    %1885 = vxpose.xlu0.b32.cont [5/16] 0.0, 128
    %1886 = vxpose.xlu0.b32.cont [6/16] 0.0, 128
    %1887 = vxpose.xlu0.b32.cont [7/16] 0.0, 128
    %1888 = vxpose.xlu0.b32.cont [8/16] 0.0, 128
    %1889 = vxpose.xlu0.b32.cont [9/16] 0.0, 128
    %1890 = vxpose.xlu0.b32.cont [10/16] 0.0, 128
    %1891 = vxpose.xlu0.b32.cont [11/16] 0.0, 128
    %1892 = vxpose.xlu0.b32.cont [12/16] 0.0, 128
    %1893 = vxpose.xlu0.b32.cont [13/16] 0.0, 128
    %1894 = vxpose.xlu0.b32.cont [14/16] 0.0, 128
    %1895 = vxpose.xlu0.b32.cont [15/16] 0.0, 128
    %1896 = vxpose.xlu0.b32.end [16/16] 0.0, 128
    %v1897 = vpop.trf.xlu0
    %v1898 = vpop.trf.xlu0
    %v1899 = vpop.trf.xlu0
    %v1900 = vpop.trf.xlu0
    %v1901 = vpop.trf.xlu0
    %v1902 = vpop.trf.xlu0
    %v1903 = vpop.trf.xlu0
    %v1904 = vpop.trf.xlu0
    %v1905 = vpop.trf.xlu0
    %v1906 = vpop.trf.xlu0
    %v1907 = vpop.trf.xlu0
    %v1908 = vpop.trf.xlu0
    %v1909 = vpop.trf.xlu0
    %v1910 = vpop.trf.xlu0
    %v1911 = vpop.trf.xlu0
    %v1912 = vpop.trf.xlu0
    %1913 = vxpose.xlu0.b32.start [1/16] %v965, 128
    %1914 = vxpose.xlu0.b32.cont [2/16] %v970, 128
    %1915 = vxpose.xlu0.b32.cont [3/16] 0.0, 128
    %1916 = vxpose.xlu0.b32.cont [4/16] 0.0, 128
    %1917 = vxpose.xlu0.b32.cont [5/16] 0.0, 128
    %1918 = vxpose.xlu0.b32.cont [6/16] 0.0, 128
    %1919 = vxpose.xlu0.b32.cont [7/16] 0.0, 128
    %1920 = vxpose.xlu0.b32.cont [8/16] 0.0, 128
    %1921 = vxpose.xlu0.b32.cont [9/16] 0.0, 128
    %1922 = vxpose.xlu0.b32.cont [10/16] 0.0, 128
    %1923 = vxpose.xlu0.b32.cont [11/16] 0.0, 128
    %1924 = vxpose.xlu0.b32.cont [12/16] 0.0, 128
    %1925 = vxpose.xlu0.b32.cont [13/16] 0.0, 128
    %1926 = vxpose.xlu0.b32.cont [14/16] 0.0, 128
    %1927 = vxpose.xlu0.b32.cont [15/16] 0.0, 128
    %1928 = vxpose.xlu0.b32.end [16/16] 0.0, 128
    %v1929 = vpop.trf.xlu0
    %v1930 = vpop.trf.xlu0
    %v1931 = vpop.trf.xlu0
    %v1932 = vpop.trf.xlu0
    %v1933 = vpop.trf.xlu0
    %v1934 = vpop.trf.xlu0
    %v1935 = vpop.trf.xlu0
    %v1936 = vpop.trf.xlu0
    %v1937 = vpop.trf.xlu0
    %v1938 = vpop.trf.xlu0
    %v1939 = vpop.trf.xlu0
    %v1940 = vpop.trf.xlu0
    %v1941 = vpop.trf.xlu0
    %v1942 = vpop.trf.xlu0
    %v1943 = vpop.trf.xlu0
    %v1944 = vpop.trf.xlu0
    %1945 = vxpose.xlu0.b32.start [1/16] %v975, 128
    %1946 = vxpose.xlu0.b32.cont [2/16] %v980, 128
    %1947 = vxpose.xlu0.b32.cont [3/16] 0.0, 128
    %1948 = vxpose.xlu0.b32.cont [4/16] 0.0, 128
    %1949 = vxpose.xlu0.b32.cont [5/16] 0.0, 128
    %1950 = vxpose.xlu0.b32.cont [6/16] 0.0, 128
    %1951 = vxpose.xlu0.b32.cont [7/16] 0.0, 128
    %1952 = vxpose.xlu0.b32.cont [8/16] 0.0, 128
    %1953 = vxpose.xlu0.b32.cont [9/16] 0.0, 128
    %1954 = vxpose.xlu0.b32.cont [10/16] 0.0, 128
    %1955 = vxpose.xlu0.b32.cont [11/16] 0.0, 128
    %1956 = vxpose.xlu0.b32.cont [12/16] 0.0, 128
    %1957 = vxpose.xlu0.b32.cont [13/16] 0.0, 128
    %1958 = vxpose.xlu0.b32.cont [14/16] 0.0, 128
    %1959 = vxpose.xlu0.b32.cont [15/16] 0.0, 128
    %1960 = vxpose.xlu0.b32.end [16/16] 0.0, 128
    %v1961 = vpop.trf.xlu0
    %v1962 = vpop.trf.xlu0
    %v1963 = vpop.trf.xlu0
    %v1964 = vpop.trf.xlu0
    %v1965 = vpop.trf.xlu0
    %v1966 = vpop.trf.xlu0
    %v1967 = vpop.trf.xlu0
    %v1968 = vpop.trf.xlu0
    %v1969 = vpop.trf.xlu0
    %v1970 = vpop.trf.xlu0
    %v1971 = vpop.trf.xlu0
    %v1972 = vpop.trf.xlu0
    %v1973 = vpop.trf.xlu0
    %v1974 = vpop.trf.xlu0
    %v1975 = vpop.trf.xlu0
    %v1976 = vpop.trf.xlu0
    %1977 = vxpose.xlu0.b32.start [1/16] %v985, 128
    %1978 = vxpose.xlu0.b32.cont [2/16] %v990, 128
    %1979 = vxpose.xlu0.b32.cont [3/16] 0.0, 128
    %1980 = vxpose.xlu0.b32.cont [4/16] 0.0, 128
    %1981 = vxpose.xlu0.b32.cont [5/16] 0.0, 128
    %1982 = vxpose.xlu0.b32.cont [6/16] 0.0, 128
    %1983 = vxpose.xlu0.b32.cont [7/16] 0.0, 128
    %1984 = vxpose.xlu0.b32.cont [8/16] 0.0, 128
    %1985 = vxpose.xlu0.b32.cont [9/16] 0.0, 128
    %1986 = vxpose.xlu0.b32.cont [10/16] 0.0, 128
    %1987 = vxpose.xlu0.b32.cont [11/16] 0.0, 128
    %1988 = vxpose.xlu0.b32.cont [12/16] 0.0, 128
    %1989 = vxpose.xlu0.b32.cont [13/16] 0.0, 128
    %1990 = vxpose.xlu0.b32.cont [14/16] 0.0, 128
    %1991 = vxpose.xlu0.b32.cont [15/16] 0.0, 128
    %1992 = vxpose.xlu0.b32.end [16/16] 0.0, 128
    %v1993 = vpop.trf.xlu0
    %v1994 = vpop.trf.xlu0
    %v1995 = vpop.trf.xlu0
    %v1996 = vpop.trf.xlu0
    %v1997 = vpop.trf.xlu0
    %v1998 = vpop.trf.xlu0
    %v1999 = vpop.trf.xlu0
    %v2000 = vpop.trf.xlu0
    %v2001 = vpop.trf.xlu0
    %v2002 = vpop.trf.xlu0
    %v2003 = vpop.trf.xlu0
    %v2004 = vpop.trf.xlu0
    %v2005 = vpop.trf.xlu0
    %v2006 = vpop.trf.xlu0
    %v2007 = vpop.trf.xlu0
    %v2008 = vpop.trf.xlu0
    %2009 = vxpose.xlu0.b32.start [1/16] %v995, 128
    %2010 = vxpose.xlu0.b32.cont [2/16] %v1000, 128
    %2011 = vxpose.xlu0.b32.cont [3/16] 0.0, 128
    %2012 = vxpose.xlu0.b32.cont [4/16] 0.0, 128
    %2013 = vxpose.xlu0.b32.cont [5/16] 0.0, 128
    %2014 = vxpose.xlu0.b32.cont [6/16] 0.0, 128
    %2015 = vxpose.xlu0.b32.cont [7/16] 0.0, 128
    %2016 = vxpose.xlu0.b32.cont [8/16] 0.0, 128
    %2017 = vxpose.xlu0.b32.cont [9/16] 0.0, 128
    %2018 = vxpose.xlu0.b32.cont [10/16] 0.0, 128
    %2019 = vxpose.xlu0.b32.cont [11/16] 0.0, 128
    %2020 = vxpose.xlu0.b32.cont [12/16] 0.0, 128
    %2021 = vxpose.xlu0.b32.cont [13/16] 0.0, 128
    %2022 = vxpose.xlu0.b32.cont [14/16] 0.0, 128
    %2023 = vxpose.xlu0.b32.cont [15/16] 0.0, 128
    %2024 = vxpose.xlu0.b32.end [16/16] 0.0, 128
    %v2025 = vpop.trf.xlu0
    %v2026 = vpop.trf.xlu0
    %v2027 = vpop.trf.xlu0
    %v2028 = vpop.trf.xlu0
    %v2029 = vpop.trf.xlu0
    %v2030 = vpop.trf.xlu0
    %v2031 = vpop.trf.xlu0
    %v2032 = vpop.trf.xlu0
    %v2033 = vpop.trf.xlu0
    %v2034 = vpop.trf.xlu0
    %v2035 = vpop.trf.xlu0
    %v2036 = vpop.trf.xlu0
    %v2037 = vpop.trf.xlu0
    %v2038 = vpop.trf.xlu0
    %v2039 = vpop.trf.xlu0
    %v2040 = vpop.trf.xlu0
    %2041 = vxpose.xlu0.b32.start [1/16] %v1005, 128
    %2042 = vxpose.xlu0.b32.cont [2/16] %v1010, 128
    %2043 = vxpose.xlu0.b32.cont [3/16] 0.0, 128
    %2044 = vxpose.xlu0.b32.cont [4/16] 0.0, 128
    %2045 = vxpose.xlu0.b32.cont [5/16] 0.0, 128
    %2046 = vxpose.xlu0.b32.cont [6/16] 0.0, 128
    %2047 = vxpose.xlu0.b32.cont [7/16] 0.0, 128
    %2048 = vxpose.xlu0.b32.cont [8/16] 0.0, 128
    %2049 = vxpose.xlu0.b32.cont [9/16] 0.0, 128
    %2050 = vxpose.xlu0.b32.cont [10/16] 0.0, 128
    %2051 = vxpose.xlu0.b32.cont [11/16] 0.0, 128
    %2052 = vxpose.xlu0.b32.cont [12/16] 0.0, 128
    %2053 = vxpose.xlu0.b32.cont [13/16] 0.0, 128
    %2054 = vxpose.xlu0.b32.cont [14/16] 0.0, 128
    %2055 = vxpose.xlu0.b32.cont [15/16] 0.0, 128
    %2056 = vxpose.xlu0.b32.end [16/16] 0.0, 128
    %v2057 = vpop.trf.xlu0
    %v2058 = vpop.trf.xlu0
    %v2059 = vpop.trf.xlu0
    %v2060 = vpop.trf.xlu0
    %v2061 = vpop.trf.xlu0
    %v2062 = vpop.trf.xlu0
    %v2063 = vpop.trf.xlu0
    %v2064 = vpop.trf.xlu0
    %v2065 = vpop.trf.xlu0
    %v2066 = vpop.trf.xlu0
    %v2067 = vpop.trf.xlu0
    %v2068 = vpop.trf.xlu0
    %v2069 = vpop.trf.xlu0
    %v2070 = vpop.trf.xlu0
    %v2071 = vpop.trf.xlu0
    %v2072 = vpop.trf.xlu0
    %2073 = vxpose.xlu0.b32.start [1/16] %v1015, 128
    %2074 = vxpose.xlu0.b32.cont [2/16] %v1020, 128
    %2075 = vxpose.xlu0.b32.cont [3/16] 0.0, 128
    %2076 = vxpose.xlu0.b32.cont [4/16] 0.0, 128
    %2077 = vxpose.xlu0.b32.cont [5/16] 0.0, 128
    %2078 = vxpose.xlu0.b32.cont [6/16] 0.0, 128
    %2079 = vxpose.xlu0.b32.cont [7/16] 0.0, 128
    %2080 = vxpose.xlu0.b32.cont [8/16] 0.0, 128
    %2081 = vxpose.xlu0.b32.cont [9/16] 0.0, 128
    %2082 = vxpose.xlu0.b32.cont [10/16] 0.0, 128
    %2083 = vxpose.xlu0.b32.cont [11/16] 0.0, 128
    %2084 = vxpose.xlu0.b32.cont [12/16] 0.0, 128
    %2085 = vxpose.xlu0.b32.cont [13/16] 0.0, 128
    %2086 = vxpose.xlu0.b32.cont [14/16] 0.0, 128
    %2087 = vxpose.xlu0.b32.cont [15/16] 0.0, 128
    %2088 = vxpose.xlu0.b32.end [16/16] 0.0, 128
    %v2089 = vpop.trf.xlu0
    %v2090 = vpop.trf.xlu0
    %v2091 = vpop.trf.xlu0
    %v2092 = vpop.trf.xlu0
    %v2093 = vpop.trf.xlu0
    %v2094 = vpop.trf.xlu0
    %v2095 = vpop.trf.xlu0
    %v2096 = vpop.trf.xlu0
    %v2097 = vpop.trf.xlu0
    %v2098 = vpop.trf.xlu0
    %v2099 = vpop.trf.xlu0
    %v2100 = vpop.trf.xlu0
    %v2101 = vpop.trf.xlu0
    %v2102 = vpop.trf.xlu0
    %v2103 = vpop.trf.xlu0
    %v2104 = vpop.trf.xlu0
    %2105 = vxpose.xlu0.b32.start [1/16] %v1025, 128
    %2106 = vxpose.xlu0.b32.cont [2/16] %v1030, 128
    %2107 = vxpose.xlu0.b32.cont [3/16] 0.0, 128
    %2108 = vxpose.xlu0.b32.cont [4/16] 0.0, 128
    %2109 = vxpose.xlu0.b32.cont [5/16] 0.0, 128
    %2110 = vxpose.xlu0.b32.cont [6/16] 0.0, 128
    %2111 = vxpose.xlu0.b32.cont [7/16] 0.0, 128
    %2112 = vxpose.xlu0.b32.cont [8/16] 0.0, 128
    %2113 = vxpose.xlu0.b32.cont [9/16] 0.0, 128
    %2114 = vxpose.xlu0.b32.cont [10/16] 0.0, 128
    %2115 = vxpose.xlu0.b32.cont [11/16] 0.0, 128
    %2116 = vxpose.xlu0.b32.cont [12/16] 0.0, 128
    %2117 = vxpose.xlu0.b32.cont [13/16] 0.0, 128
    %2118 = vxpose.xlu0.b32.cont [14/16] 0.0, 128
    %2119 = vxpose.xlu0.b32.cont [15/16] 0.0, 128
    %2120 = vxpose.xlu0.b32.end [16/16] 0.0, 128
    %v2121 = vpop.trf.xlu0
    %v2122 = vpop.trf.xlu0
    %v2123 = vpop.trf.xlu0
    %v2124 = vpop.trf.xlu0
    %v2125 = vpop.trf.xlu0
    %v2126 = vpop.trf.xlu0
    %v2127 = vpop.trf.xlu0
    %v2128 = vpop.trf.xlu0
    %v2129 = vpop.trf.xlu0
    %v2130 = vpop.trf.xlu0
    %v2131 = vpop.trf.xlu0
    %v2132 = vpop.trf.xlu0
    %v2133 = vpop.trf.xlu0
    %v2134 = vpop.trf.xlu0
    %v2135 = vpop.trf.xlu0
    %v2136 = vpop.trf.xlu0
    %2137 = vxpose.xlu0.b32.start [1/16] %v1035, 128
    %2138 = vxpose.xlu0.b32.cont [2/16] %v1040, 128
    %2139 = vxpose.xlu0.b32.cont [3/16] 0.0, 128
    %2140 = vxpose.xlu0.b32.cont [4/16] 0.0, 128
    %2141 = vxpose.xlu0.b32.cont [5/16] 0.0, 128
    %2142 = vxpose.xlu0.b32.cont [6/16] 0.0, 128
    %2143 = vxpose.xlu0.b32.cont [7/16] 0.0, 128
    %2144 = vxpose.xlu0.b32.cont [8/16] 0.0, 128
    %2145 = vxpose.xlu0.b32.cont [9/16] 0.0, 128
    %2146 = vxpose.xlu0.b32.cont [10/16] 0.0, 128
    %2147 = vxpose.xlu0.b32.cont [11/16] 0.0, 128
    %2148 = vxpose.xlu0.b32.cont [12/16] 0.0, 128
    %2149 = vxpose.xlu0.b32.cont [13/16] 0.0, 128
    %2150 = vxpose.xlu0.b32.cont [14/16] 0.0, 128
    %2151 = vxpose.xlu0.b32.cont [15/16] 0.0, 128
    %2152 = vxpose.xlu0.b32.end [16/16] 0.0, 128
    %v2153 = vpop.trf.xlu0
    %v2154 = vpop.trf.xlu0
    %v2155 = vpop.trf.xlu0
    %v2156 = vpop.trf.xlu0
    %v2157 = vpop.trf.xlu0
    %v2158 = vpop.trf.xlu0
    %v2159 = vpop.trf.xlu0
    %v2160 = vpop.trf.xlu0
    %v2161 = vpop.trf.xlu0
    %v2162 = vpop.trf.xlu0
    %v2163 = vpop.trf.xlu0
    %v2164 = vpop.trf.xlu0
    %v2165 = vpop.trf.xlu0
    %v2166 = vpop.trf.xlu0
    %v2167 = vpop.trf.xlu0
    %v2168 = vpop.trf.xlu0
    %2169 = vxpose.xlu0.b32.start [1/16] %v1045, 128
    %2170 = vxpose.xlu0.b32.cont [2/16] %v1050, 128
    %2171 = vxpose.xlu0.b32.cont [3/16] 0.0, 128
    %2172 = vxpose.xlu0.b32.cont [4/16] 0.0, 128
    %2173 = vxpose.xlu0.b32.cont [5/16] 0.0, 128
    %2174 = vxpose.xlu0.b32.cont [6/16] 0.0, 128
    %2175 = vxpose.xlu0.b32.cont [7/16] 0.0, 128
    %2176 = vxpose.xlu0.b32.cont [8/16] 0.0, 128
    %2177 = vxpose.xlu0.b32.cont [9/16] 0.0, 128
    %2178 = vxpose.xlu0.b32.cont [10/16] 0.0, 128
    %2179 = vxpose.xlu0.b32.cont [11/16] 0.0, 128
    %2180 = vxpose.xlu0.b32.cont [12/16] 0.0, 128
    %2181 = vxpose.xlu0.b32.cont [13/16] 0.0, 128
    %2182 = vxpose.xlu0.b32.cont [14/16] 0.0, 128
    %2183 = vxpose.xlu0.b32.cont [15/16] 0.0, 128
    %2184 = vxpose.xlu0.b32.end [16/16] 0.0, 128
    %v2185 = vpop.trf.xlu0
    %v2186 = vpop.trf.xlu0
    %v2187 = vpop.trf.xlu0
    %v2188 = vpop.trf.xlu0
    %v2189 = vpop.trf.xlu0
    %v2190 = vpop.trf.xlu0
    %v2191 = vpop.trf.xlu0
    %v2192 = vpop.trf.xlu0
    %v2193 = vpop.trf.xlu0
    %v2194 = vpop.trf.xlu0
    %v2195 = vpop.trf.xlu0
    %v2196 = vpop.trf.xlu0
    %v2197 = vpop.trf.xlu0
    %v2198 = vpop.trf.xlu0
    %v2199 = vpop.trf.xlu0
    %v2200 = vpop.trf.xlu0
    %2201 = vxpose.xlu0.b32.start [1/16] %v1055, 128
    %2202 = vxpose.xlu0.b32.cont [2/16] %v1060, 128
    %2203 = vxpose.xlu0.b32.cont [3/16] 0.0, 128
    %2204 = vxpose.xlu0.b32.cont [4/16] 0.0, 128
    %2205 = vxpose.xlu0.b32.cont [5/16] 0.0, 128
    %2206 = vxpose.xlu0.b32.cont [6/16] 0.0, 128
    %2207 = vxpose.xlu0.b32.cont [7/16] 0.0, 128
    %2208 = vxpose.xlu0.b32.cont [8/16] 0.0, 128
    %2209 = vxpose.xlu0.b32.cont [9/16] 0.0, 128
    %2210 = vxpose.xlu0.b32.cont [10/16] 0.0, 128
    %2211 = vxpose.xlu0.b32.cont [11/16] 0.0, 128
    %2212 = vxpose.xlu0.b32.cont [12/16] 0.0, 128
    %2213 = vxpose.xlu0.b32.cont [13/16] 0.0, 128
    %2214 = vxpose.xlu0.b32.cont [14/16] 0.0, 128
    %2215 = vxpose.xlu0.b32.cont [15/16] 0.0, 128
    %2216 = vxpose.xlu0.b32.end [16/16] 0.0, 128
    %v2217 = vpop.trf.xlu0
    %v2218 = vpop.trf.xlu0
    %v2219 = vpop.trf.xlu0
    %v2220 = vpop.trf.xlu0
    %v2221 = vpop.trf.xlu0
    %v2222 = vpop.trf.xlu0
    %v2223 = vpop.trf.xlu0
    %v2224 = vpop.trf.xlu0
    %v2225 = vpop.trf.xlu0
    %v2226 = vpop.trf.xlu0
    %v2227 = vpop.trf.xlu0
    %v2228 = vpop.trf.xlu0
    %v2229 = vpop.trf.xlu0
    %v2230 = vpop.trf.xlu0
    %v2231 = vpop.trf.xlu0
    %v2232 = vpop.trf.xlu0
    %2233 = vxpose.xlu0.b32.start [1/16] %v1065, 128
    %2234 = vxpose.xlu0.b32.cont [2/16] %v1070, 128
    %2235 = vxpose.xlu0.b32.cont [3/16] 0.0, 128
    %2236 = vxpose.xlu0.b32.cont [4/16] 0.0, 128
    %2237 = vxpose.xlu0.b32.cont [5/16] 0.0, 128
    %2238 = vxpose.xlu0.b32.cont [6/16] 0.0, 128
    %2239 = vxpose.xlu0.b32.cont [7/16] 0.0, 128
    %2240 = vxpose.xlu0.b32.cont [8/16] 0.0, 128
    %2241 = vxpose.xlu0.b32.cont [9/16] 0.0, 128
    %2242 = vxpose.xlu0.b32.cont [10/16] 0.0, 128
    %2243 = vxpose.xlu0.b32.cont [11/16] 0.0, 128
    %2244 = vxpose.xlu0.b32.cont [12/16] 0.0, 128
    %2245 = vxpose.xlu0.b32.cont [13/16] 0.0, 128
    %2246 = vxpose.xlu0.b32.cont [14/16] 0.0, 128
    %2247 = vxpose.xlu0.b32.cont [15/16] 0.0, 128
    %2248 = vxpose.xlu0.b32.end [16/16] 0.0, 128
    %v2249 = vpop.trf.xlu0
    %v2250 = vpop.trf.xlu0
    %v2251 = vpop.trf.xlu0
    %v2252 = vpop.trf.xlu0
    %v2253 = vpop.trf.xlu0
    %v2254 = vpop.trf.xlu0
    %v2255 = vpop.trf.xlu0
    %v2256 = vpop.trf.xlu0
    %v2257 = vpop.trf.xlu0
    %v2258 = vpop.trf.xlu0
    %v2259 = vpop.trf.xlu0
    %v2260 = vpop.trf.xlu0
    %v2261 = vpop.trf.xlu0
    %v2262 = vpop.trf.xlu0
    %v2263 = vpop.trf.xlu0
    %v2264 = vpop.trf.xlu0
    %2265 = vxpose.xlu0.b32.start [1/16] %v1075, 128
    %2266 = vxpose.xlu0.b32.cont [2/16] %v1080, 128
    %2267 = vxpose.xlu0.b32.cont [3/16] 0.0, 128
    %2268 = vxpose.xlu0.b32.cont [4/16] 0.0, 128
    %2269 = vxpose.xlu0.b32.cont [5/16] 0.0, 128
    %2270 = vxpose.xlu0.b32.cont [6/16] 0.0, 128
    %2271 = vxpose.xlu0.b32.cont [7/16] 0.0, 128
    %2272 = vxpose.xlu0.b32.cont [8/16] 0.0, 128
    %2273 = vxpose.xlu0.b32.cont [9/16] 0.0, 128
    %2274 = vxpose.xlu0.b32.cont [10/16] 0.0, 128
    %2275 = vxpose.xlu0.b32.cont [11/16] 0.0, 128
    %2276 = vxpose.xlu0.b32.cont [12/16] 0.0, 128
    %2277 = vxpose.xlu0.b32.cont [13/16] 0.0, 128
    %2278 = vxpose.xlu0.b32.cont [14/16] 0.0, 128
    %2279 = vxpose.xlu0.b32.cont [15/16] 0.0, 128
    %2280 = vxpose.xlu0.b32.end [16/16] 0.0, 128
    %v2281 = vpop.trf.xlu0
    %v2282 = vpop.trf.xlu0
    %v2283 = vpop.trf.xlu0
    %v2284 = vpop.trf.xlu0
    %v2285 = vpop.trf.xlu0
    %v2286 = vpop.trf.xlu0
    %v2287 = vpop.trf.xlu0
    %v2288 = vpop.trf.xlu0
    %v2289 = vpop.trf.xlu0
    %v2290 = vpop.trf.xlu0
    %v2291 = vpop.trf.xlu0
    %v2292 = vpop.trf.xlu0
    %v2293 = vpop.trf.xlu0
    %v2294 = vpop.trf.xlu0
    %v2295 = vpop.trf.xlu0
    %v2296 = vpop.trf.xlu0
    %2297 = vxpose.xlu0.b32.start [1/16] %v1085, 128
    %2298 = vxpose.xlu0.b32.cont [2/16] %v1090, 128
    %2299 = vxpose.xlu0.b32.cont [3/16] 0.0, 128
    %2300 = vxpose.xlu0.b32.cont [4/16] 0.0, 128
    %2301 = vxpose.xlu0.b32.cont [5/16] 0.0, 128
    %2302 = vxpose.xlu0.b32.cont [6/16] 0.0, 128
    %2303 = vxpose.xlu0.b32.cont [7/16] 0.0, 128
    %2304 = vxpose.xlu0.b32.cont [8/16] 0.0, 128
    %2305 = vxpose.xlu0.b32.cont [9/16] 0.0, 128
    %2306 = vxpose.xlu0.b32.cont [10/16] 0.0, 128
    %2307 = vxpose.xlu0.b32.cont [11/16] 0.0, 128
    %2308 = vxpose.xlu0.b32.cont [12/16] 0.0, 128
    %2309 = vxpose.xlu0.b32.cont [13/16] 0.0, 128
    %2310 = vxpose.xlu0.b32.cont [14/16] 0.0, 128
    %2311 = vxpose.xlu0.b32.cont [15/16] 0.0, 128
    %2312 = vxpose.xlu0.b32.end [16/16] 0.0, 128
    %v2313 = vpop.trf.xlu0
    %v2314 = vpop.trf.xlu0
    %v2315 = vpop.trf.xlu0
    %v2316 = vpop.trf.xlu0
    %v2317 = vpop.trf.xlu0
    %v2318 = vpop.trf.xlu0
    %v2319 = vpop.trf.xlu0
    %v2320 = vpop.trf.xlu0
    %v2321 = vpop.trf.xlu0
    %v2322 = vpop.trf.xlu0
    %v2323 = vpop.trf.xlu0
    %v2324 = vpop.trf.xlu0
    %v2325 = vpop.trf.xlu0
    %v2326 = vpop.trf.xlu0
    %v2327 = vpop.trf.xlu0
    %v2328 = vpop.trf.xlu0
    %2329 = vxpose.xlu0.b32.start [1/16] %v1095, 128
    %2330 = vxpose.xlu0.b32.cont [2/16] %v1100, 128
    %2331 = vxpose.xlu0.b32.cont [3/16] 0.0, 128
    %2332 = vxpose.xlu0.b32.cont [4/16] 0.0, 128
    %2333 = vxpose.xlu0.b32.cont [5/16] 0.0, 128
    %2334 = vxpose.xlu0.b32.cont [6/16] 0.0, 128
    %2335 = vxpose.xlu0.b32.cont [7/16] 0.0, 128
    %2336 = vxpose.xlu0.b32.cont [8/16] 0.0, 128
    %2337 = vxpose.xlu0.b32.cont [9/16] 0.0, 128
    %2338 = vxpose.xlu0.b32.cont [10/16] 0.0, 128
    %2339 = vxpose.xlu0.b32.cont [11/16] 0.0, 128
    %2340 = vxpose.xlu0.b32.cont [12/16] 0.0, 128
    %2341 = vxpose.xlu0.b32.cont [13/16] 0.0, 128
    %2342 = vxpose.xlu0.b32.cont [14/16] 0.0, 128
    %2343 = vxpose.xlu0.b32.cont [15/16] 0.0, 128
    %2344 = vxpose.xlu0.b32.end [16/16] 0.0, 128
    %v2345 = vpop.trf.xlu0
    %v2346 = vpop.trf.xlu0
    %v2347 = vpop.trf.xlu0
    %v2348 = vpop.trf.xlu0
    %v2349 = vpop.trf.xlu0
    %v2350 = vpop.trf.xlu0
    %v2351 = vpop.trf.xlu0
    %v2352 = vpop.trf.xlu0
    %v2353 = vpop.trf.xlu0
    %v2354 = vpop.trf.xlu0
    %v2355 = vpop.trf.xlu0
    %v2356 = vpop.trf.xlu0
    %v2357 = vpop.trf.xlu0
    %v2358 = vpop.trf.xlu0
    %v2359 = vpop.trf.xlu0
    %v2360 = vpop.trf.xlu0
    %2361 = vxpose.xlu0.b32.start [1/16] %v1105, 128
    %2362 = vxpose.xlu0.b32.cont [2/16] %v1110, 128
    %2363 = vxpose.xlu0.b32.cont [3/16] 0.0, 128
    %2364 = vxpose.xlu0.b32.cont [4/16] 0.0, 128
    %2365 = vxpose.xlu0.b32.cont [5/16] 0.0, 128
    %2366 = vxpose.xlu0.b32.cont [6/16] 0.0, 128
    %2367 = vxpose.xlu0.b32.cont [7/16] 0.0, 128
    %2368 = vxpose.xlu0.b32.cont [8/16] 0.0, 128
    %2369 = vxpose.xlu0.b32.cont [9/16] 0.0, 128
    %2370 = vxpose.xlu0.b32.cont [10/16] 0.0, 128
    %2371 = vxpose.xlu0.b32.cont [11/16] 0.0, 128
    %2372 = vxpose.xlu0.b32.cont [12/16] 0.0, 128
    %2373 = vxpose.xlu0.b32.cont [13/16] 0.0, 128
    %2374 = vxpose.xlu0.b32.cont [14/16] 0.0, 128
    %2375 = vxpose.xlu0.b32.cont [15/16] 0.0, 128
    %2376 = vxpose.xlu0.b32.end [16/16] 0.0, 128
    %v2377 = vpop.trf.xlu0
    %v2378 = vpop.trf.xlu0
    %v2379 = vpop.trf.xlu0
    %v2380 = vpop.trf.xlu0
    %v2381 = vpop.trf.xlu0
    %v2382 = vpop.trf.xlu0
    %v2383 = vpop.trf.xlu0
    %v2384 = vpop.trf.xlu0
    %v2385 = vpop.trf.xlu0
    %v2386 = vpop.trf.xlu0
    %v2387 = vpop.trf.xlu0
    %v2388 = vpop.trf.xlu0
    %v2389 = vpop.trf.xlu0
    %v2390 = vpop.trf.xlu0
    %v2391 = vpop.trf.xlu0
    %v2392 = vpop.trf.xlu0
    %v2394 = vsel %vm149, %v1129, 0
    %v2397 = vsel %vm149, %v1130, 0
    %v2400 = vsel %vm149, %v1161, 0
    %v2403 = vsel %vm149, %v1162, 0
    %v2406 = vsel %vm149, %v1193, 0
    %v2409 = vsel %vm149, %v1194, 0
    %v2412 = vsel %vm149, %v1225, 0
    %v2415 = vsel %vm149, %v1226, 0
    %v2418 = vsel %vm149, %v1257, 0
    %v2421 = vsel %vm149, %v1258, 0
    %v2424 = vsel %vm149, %v1289, 0
    %v2427 = vsel %vm149, %v1290, 0
    %v2430 = vsel %vm149, %v1321, 0
    %v2433 = vsel %vm149, %v1322, 0
    %v2436 = vsel %vm149, %v1353, 0
    %v2439 = vsel %vm149, %v1354, 0
    %v2442 = vsel %vm149, %v1385, 0
    %v2445 = vsel %vm149, %v1386, 0
    %v2448 = vsel %vm149, %v1417, 0
    %v2451 = vsel %vm149, %v1418, 0
    %v2454 = vsel %vm149, %v1449, 0
    %v2457 = vsel %vm149, %v1450, 0
    %v2460 = vsel %vm149, %v1481, 0
    %v2463 = vsel %vm149, %v1482, 0
    %v2466 = vsel %vm149, %v1513, 0
    %v2469 = vsel %vm149, %v1514, 0
    %v2472 = vsel %vm149, %v1545, 0
    %v2475 = vsel %vm149, %v1546, 0
    %v2478 = vsel %vm149, %v1577, 0
    %v2481 = vsel %vm149, %v1578, 0
    %v2484 = vsel %vm149, %v1609, 0
    %v2487 = vsel %vm149, %v1610, 0
    %v2490 = vsel %vm149, %v1641, 0
    %v2493 = vsel %vm149, %v1642, 0
    %v2496 = vsel %vm149, %v1673, 0
    %v2499 = vsel %vm149, %v1674, 0
    %v2502 = vsel %vm149, %v1705, 0
    %v2505 = vsel %vm149, %v1706, 0
    %v2508 = vsel %vm149, %v1737, 0
    %v2511 = vsel %vm149, %v1738, 0
    %v2514 = vsel %vm149, %v1769, 0
    %v2517 = vsel %vm149, %v1770, 0
    %v2520 = vsel %vm149, %v1801, 0
    %v2523 = vsel %vm149, %v1802, 0
    %v2526 = vsel %vm149, %v1833, 0
    %v2529 = vsel %vm149, %v1834, 0
    %v2532 = vsel %vm149, %v1865, 0
    %v2535 = vsel %vm149, %v1866, 0
    %v2538 = vsel %vm149, %v1897, 0
    %v2541 = vsel %vm149, %v1898, 0
    %v2544 = vsel %vm149, %v1929, 0
    %v2547 = vsel %vm149, %v1930, 0
    %v2550 = vsel %vm149, %v1961, 0
    %v2553 = vsel %vm149, %v1962, 0
    %v2556 = vsel %vm149, %v1993, 0
    %v2559 = vsel %vm149, %v1994, 0
    %v2562 = vsel %vm149, %v2025, 0
    %v2565 = vsel %vm149, %v2026, 0
    %v2568 = vsel %vm149, %v2057, 0
    %v2571 = vsel %vm149, %v2058, 0
    %v2574 = vsel %vm149, %v2089, 0
    %v2577 = vsel %vm149, %v2090, 0
    %v2580 = vsel %vm149, %v2121, 0
    %v2583 = vsel %vm149, %v2122, 0
    %v2586 = vsel %vm149, %v2153, 0
    %v2589 = vsel %vm149, %v2154, 0
    %v2592 = vsel %vm149, %v2185, 0
    %v2595 = vsel %vm149, %v2186, 0
    %v2598 = vsel %vm149, %v2217, 0
    %v2601 = vsel %vm149, %v2218, 0
    %v2604 = vsel %vm149, %v2249, 0
    %v2607 = vsel %vm149, %v2250, 0
    %v2610 = vsel %vm149, %v2281, 0
    %v2613 = vsel %vm149, %v2282, 0
    %v2616 = vsel %vm149, %v2313, 0
    %v2619 = vsel %vm149, %v2314, 0
    %v2622 = vsel %vm149, %v2345, 0
    %v2625 = vsel %vm149, %v2346, 0
    %v2628 = vsel %vm149, %v2377, 0
    %v2631 = vsel %vm149, %v2378, 0
    %v2634 = vsel %vm149, %v113, 0
    %v2637 = vsel %vm149, %v114, 0
    %2639 = vmatprep.subr.mxu0 0.0
    %2640 = vmatpush1.xpose.msra.mxu0 %v2634
    %2641 = vmatprep.subr.mxu0 0.0
    %2642 = vmatpush1.xpose.msra.mxu0 %v2637
    %2643 = vmatprep.subr.mxu0 0.0
    %2644 = vmatpush1.xpose.msra.mxu0 0.0
    %2645 = vmatprep.subr.mxu0 0.0
    %2646 = vmatpush1.xpose.msra.mxu0 0.0
    %2647 = vmatprep.subr.mxu0 0.0
    %2648 = vmatpush1.xpose.msra.mxu0 0.0
    %2649 = vmatprep.subr.mxu0 0.0
    %2650 = vmatpush1.xpose.msra.mxu0 0.0
    %2651 = vmatprep.subr.mxu0 0.0
    %2652 = vmatpush1.xpose.msra.mxu0 0.0
    %2653 = vmatprep.subr.mxu0 0.0
    %2654 = vmatpush1.xpose.msra.mxu0 0.0
    %2655 = vmatprep.subr.mxu0 0.0
    %2656 = vmatpush1.xpose.msra.mxu0 0.0
    %2657 = vmatprep.subr.mxu0 0.0
    %2658 = vmatpush1.xpose.msra.mxu0 0.0
    %2659 = vmatprep.subr.mxu0 0.0
    %2660 = vmatpush1.xpose.msra.mxu0 0.0
    %2661 = vmatprep.subr.mxu0 0.0
    %2662 = vmatpush1.xpose.msra.mxu0 0.0
    %2663 = vmatprep.subr.mxu0 0.0
    %2664 = vmatpush1.xpose.msra.mxu0 0.0
    %2665 = vmatprep.subr.mxu0 0.0
    %2666 = vmatpush1.xpose.msra.mxu0 0.0
    %2667 = vmatprep.subr.mxu0 0.0
    %2668 = vmatpush1.xpose.msra.mxu0 0.0
    %2669 = vmatprep.subr.mxu0 0.0
    %2670 = vmatpush1.xpose.msra.mxu0 0.0
    %2671 = vmatprep.subr.mxu0 0.0
    %2672 = vmatpush1.xpose.msra.mxu0 0.0
    %2673 = vmatprep.subr.mxu0 0.0
    %2674 = vmatpush1.xpose.msra.mxu0 0.0
    %2675 = vmatprep.subr.mxu0 0.0
    %2676 = vmatpush1.xpose.msra.mxu0 0.0
    %2677 = vmatprep.subr.mxu0 0.0
    %2678 = vmatpush1.xpose.msra.mxu0 0.0
    %2679 = vmatprep.subr.mxu0 0.0
    %2680 = vmatpush1.xpose.msra.mxu0 0.0
    %2681 = vmatprep.subr.mxu0 0.0
    %2682 = vmatpush1.xpose.msra.mxu0 0.0
    %2683 = vmatprep.subr.mxu0 0.0
    %2684 = vmatpush1.xpose.msra.mxu0 0.0
    %2685 = vmatprep.subr.mxu0 0.0
    %2686 = vmatpush1.xpose.msra.mxu0 0.0
    %2687 = vmatprep.subr.mxu0 0.0
    %2688 = vmatpush1.xpose.msra.mxu0 0.0
    %2689 = vmatprep.subr.mxu0 0.0
    %2690 = vmatpush1.xpose.msra.mxu0 0.0
    %2691 = vmatprep.subr.mxu0 0.0
    %2692 = vmatpush1.xpose.msra.mxu0 0.0
    %2693 = vmatprep.subr.mxu0 0.0
    %2694 = vmatpush1.xpose.msra.mxu0 0.0
    %2695 = vmatprep.subr.mxu0 0.0
    %2696 = vmatpush1.xpose.msra.mxu0 0.0
    %2697 = vmatprep.subr.mxu0 0.0
    %2698 = vmatpush1.xpose.msra.mxu0 0.0
    %2699 = vmatprep.subr.mxu0 0.0
    %2700 = vmatpush1.xpose.msra.mxu0 0.0
    %2701 = vmatprep.subr.mxu0 0.0
    %2702 = vmatpush1.xpose.msra.mxu0 0.0
    %2703 = vmatprep.mubr.f32.mxu0 0.0
    %2704 = vmatmul.mubr.f32.gmra.mrb[0].mxu0 %v2394
    %v2705 = vpop.f32.mrb[0].mxu0
    %v2706 = vadd.f32 0.0, %v2705
    %v2707 = vpop.f32.mrb[0].mxu0
    %2708 = vmatprep.mubr.f32.mxu0 0.0
    %2709 = vmatmul.mubr.f32.gmra.mrb[0].mxu0 %v2397
    %v2710 = vpop.f32.mrb[0].mxu0
    %v2711 = vadd.f32 0.0, %v2710
    %v2712 = vpop.f32.mrb[0].mxu0
    %2713 = vmatprep.mubr.f32.mxu0 0.0
    %2714 = vmatmul.mubr.f32.gmra.mrb[0].mxu0 %v2400
    %v2715 = vpop.f32.mrb[0].mxu0
    %v2716 = vadd.f32 0.0, %v2715
    %v2717 = vpop.f32.mrb[0].mxu0
    %2718 = vmatprep.mubr.f32.mxu0 0.0
    %2719 = vmatmul.mubr.f32.gmra.mrb[0].mxu0 %v2403
    %v2720 = vpop.f32.mrb[0].mxu0
    %v2721 = vadd.f32 0.0, %v2720
    %v2722 = vpop.f32.mrb[0].mxu0
    %2723 = vmatprep.mubr.f32.mxu0 0.0
    %2724 = vmatmul.mubr.f32.gmra.mrb[0].mxu0 %v2406
    %v2725 = vpop.f32.mrb[0].mxu0
    %v2726 = vadd.f32 0.0, %v2725
    %v2727 = vpop.f32.mrb[0].mxu0
    %2728 = vmatprep.mubr.f32.mxu0 0.0
    %2729 = vmatmul.mubr.f32.gmra.mrb[0].mxu0 %v2409
    %v2730 = vpop.f32.mrb[0].mxu0
    %v2731 = vadd.f32 0.0, %v2730
    %v2732 = vpop.f32.mrb[0].mxu0
    %2733 = vmatprep.mubr.f32.mxu0 0.0
    %2734 = vmatmul.mubr.f32.gmra.mrb[0].mxu0 %v2412
    %v2735 = vpop.f32.mrb[0].mxu0
    %v2736 = vadd.f32 0.0, %v2735
    %v2737 = vpop.f32.mrb[0].mxu0
    %2738 = vmatprep.mubr.f32.mxu0 0.0
    %2739 = vmatmul.mubr.f32.gmra.mrb[0].mxu0 %v2415
    %v2740 = vpop.f32.mrb[0].mxu0
    %v2741 = vadd.f32 0.0, %v2740
    %v2742 = vpop.f32.mrb[0].mxu0
    %2743 = vmatprep.mubr.f32.mxu0 0.0
    %2744 = vmatmul.mubr.f32.gmra.mrb[0].mxu0 %v2418
    %v2745 = vpop.f32.mrb[0].mxu0
    %v2746 = vadd.f32 0.0, %v2745
    %v2747 = vpop.f32.mrb[0].mxu0
    %2748 = vmatprep.mubr.f32.mxu0 0.0
    %2749 = vmatmul.mubr.f32.gmra.mrb[0].mxu0 %v2421
    %v2750 = vpop.f32.mrb[0].mxu0
    %v2751 = vadd.f32 0.0, %v2750
    %v2752 = vpop.f32.mrb[0].mxu0
    %2753 = vmatprep.mubr.f32.mxu0 0.0
    %2754 = vmatmul.mubr.f32.gmra.mrb[0].mxu0 %v2424
    %v2755 = vpop.f32.mrb[0].mxu0
    %v2756 = vadd.f32 0.0, %v2755
    %v2757 = vpop.f32.mrb[0].mxu0
    %2758 = vmatprep.mubr.f32.mxu0 0.0
    %2759 = vmatmul.mubr.f32.gmra.mrb[0].mxu0 %v2427
    %v2760 = vpop.f32.mrb[0].mxu0
    %v2761 = vadd.f32 0.0, %v2760
    %v2762 = vpop.f32.mrb[0].mxu0
    %2763 = vmatprep.mubr.f32.mxu0 0.0
    %2764 = vmatmul.mubr.f32.gmra.mrb[0].mxu0 %v2430
    %v2765 = vpop.f32.mrb[0].mxu0
    %v2766 = vadd.f32 0.0, %v2765
    %v2767 = vpop.f32.mrb[0].mxu0
    %2768 = vmatprep.mubr.f32.mxu0 0.0
    %2769 = vmatmul.mubr.f32.gmra.mrb[0].mxu0 %v2433
    %v2770 = vpop.f32.mrb[0].mxu0
    %v2771 = vadd.f32 0.0, %v2770
    %v2772 = vpop.f32.mrb[0].mxu0
    %2773 = vmatprep.mubr.f32.mxu0 0.0
    %2774 = vmatmul.mubr.f32.gmra.mrb[0].mxu0 %v2436
    %v2775 = vpop.f32.mrb[0].mxu0
    %v2776 = vadd.f32 0.0, %v2775
    %v2777 = vpop.f32.mrb[0].mxu0
    %2778 = vmatprep.mubr.f32.mxu0 0.0
    %2779 = vmatmul.mubr.f32.gmra.mrb[0].mxu0 %v2439
    %v2780 = vpop.f32.mrb[0].mxu0
    %v2781 = vadd.f32 0.0, %v2780
    %v2782 = vpop.f32.mrb[0].mxu0
    %2783 = vmatprep.mubr.f32.mxu0 0.0
    %2784 = vmatmul.mubr.f32.gmra.mrb[0].mxu0 %v2442
    %v2785 = vpop.f32.mrb[0].mxu0
    %v2786 = vadd.f32 0.0, %v2785
    %v2787 = vpop.f32.mrb[0].mxu0
    %2788 = vmatprep.mubr.f32.mxu0 0.0
    %2789 = vmatmul.mubr.f32.gmra.mrb[0].mxu0 %v2445
    %v2790 = vpop.f32.mrb[0].mxu0
    %v2791 = vadd.f32 0.0, %v2790
    %v2792 = vpop.f32.mrb[0].mxu0
    %2793 = vmatprep.mubr.f32.mxu0 0.0
    %2794 = vmatmul.mubr.f32.gmra.mrb[0].mxu0 %v2448
    %v2795 = vpop.f32.mrb[0].mxu0
    %v2796 = vadd.f32 0.0, %v2795
    %v2797 = vpop.f32.mrb[0].mxu0
    %2798 = vmatprep.mubr.f32.mxu0 0.0
    %2799 = vmatmul.mubr.f32.gmra.mrb[0].mxu0 %v2451
    %v2800 = vpop.f32.mrb[0].mxu0
    %v2801 = vadd.f32 0.0, %v2800
    %v2802 = vpop.f32.mrb[0].mxu0
    %2803 = vmatprep.mubr.f32.mxu0 0.0
    %2804 = vmatmul.mubr.f32.gmra.mrb[0].mxu0 %v2454
    %v2805 = vpop.f32.mrb[0].mxu0
    %v2806 = vadd.f32 0.0, %v2805
    %v2807 = vpop.f32.mrb[0].mxu0
    %2808 = vmatprep.mubr.f32.mxu0 0.0
    %2809 = vmatmul.mubr.f32.gmra.mrb[0].mxu0 %v2457
    %v2810 = vpop.f32.mrb[0].mxu0
    %v2811 = vadd.f32 0.0, %v2810
    %v2812 = vpop.f32.mrb[0].mxu0
    %2813 = vmatprep.mubr.f32.mxu0 0.0
    %2814 = vmatmul.mubr.f32.gmra.mrb[0].mxu0 %v2460
    %v2815 = vpop.f32.mrb[0].mxu0
    %v2816 = vadd.f32 0.0, %v2815
    %v2817 = vpop.f32.mrb[0].mxu0
    %2818 = vmatprep.mubr.f32.mxu0 0.0
    %2819 = vmatmul.mubr.f32.gmra.mrb[0].mxu0 %v2463
    %v2820 = vpop.f32.mrb[0].mxu0
    %v2821 = vadd.f32 0.0, %v2820
    %v2822 = vpop.f32.mrb[0].mxu0
    %2823 = vmatprep.mubr.f32.mxu0 0.0
    %2824 = vmatmul.mubr.f32.gmra.mrb[0].mxu0 %v2466
    %v2825 = vpop.f32.mrb[0].mxu0
    %v2826 = vadd.f32 0.0, %v2825
    %v2827 = vpop.f32.mrb[0].mxu0
    %2828 = vmatprep.mubr.f32.mxu0 0.0
    %2829 = vmatmul.mubr.f32.gmra.mrb[0].mxu0 %v2469
    %v2830 = vpop.f32.mrb[0].mxu0
    %v2831 = vadd.f32 0.0, %v2830
    %v2832 = vpop.f32.mrb[0].mxu0
    %2833 = vmatprep.mubr.f32.mxu0 0.0
    %2834 = vmatmul.mubr.f32.gmra.mrb[0].mxu0 %v2472
    %v2835 = vpop.f32.mrb[0].mxu0
    %v2836 = vadd.f32 0.0, %v2835
    %v2837 = vpop.f32.mrb[0].mxu0
    %2838 = vmatprep.mubr.f32.mxu0 0.0
    %2839 = vmatmul.mubr.f32.gmra.mrb[0].mxu0 %v2475
    %v2840 = vpop.f32.mrb[0].mxu0
    %v2841 = vadd.f32 0.0, %v2840
    %v2842 = vpop.f32.mrb[0].mxu0
    %2843 = vmatprep.mubr.f32.mxu0 0.0
    %2844 = vmatmul.mubr.f32.gmra.mrb[0].mxu0 %v2478
    %v2845 = vpop.f32.mrb[0].mxu0
    %v2846 = vadd.f32 0.0, %v2845
    %v2847 = vpop.f32.mrb[0].mxu0
    %2848 = vmatprep.mubr.f32.mxu0 0.0
    %2849 = vmatmul.mubr.f32.gmra.mrb[0].mxu0 %v2481
    %v2850 = vpop.f32.mrb[0].mxu0
    %v2851 = vadd.f32 0.0, %v2850
    %v2852 = vpop.f32.mrb[0].mxu0
    %2853 = vmatprep.mubr.f32.mxu0 0.0
    %2854 = vmatmul.mubr.f32.gmra.mrb[0].mxu0 %v2484
    %v2855 = vpop.f32.mrb[0].mxu0
    %v2856 = vadd.f32 0.0, %v2855
    %v2857 = vpop.f32.mrb[0].mxu0
    %2858 = vmatprep.mubr.f32.mxu0 0.0
    %2859 = vmatmul.mubr.f32.gmra.mrb[0].mxu0 %v2487
    %v2860 = vpop.f32.mrb[0].mxu0
    %v2861 = vadd.f32 0.0, %v2860
    %v2862 = vpop.f32.mrb[0].mxu0
    %2863 = vmatprep.mubr.f32.mxu0 0.0
    %2864 = vmatmul.mubr.f32.gmra.mrb[0].mxu0 %v2490
    %v2865 = vpop.f32.mrb[0].mxu0
    %v2866 = vadd.f32 0.0, %v2865
    %v2867 = vpop.f32.mrb[0].mxu0
    %2868 = vmatprep.mubr.f32.mxu0 0.0
    %2869 = vmatmul.mubr.f32.gmra.mrb[0].mxu0 %v2493
    %v2870 = vpop.f32.mrb[0].mxu0
    %v2871 = vadd.f32 0.0, %v2870
    %v2872 = vpop.f32.mrb[0].mxu0
    %2873 = vmatprep.mubr.f32.mxu0 0.0
    %2874 = vmatmul.mubr.f32.gmra.mrb[0].mxu0 %v2496
    %v2875 = vpop.f32.mrb[0].mxu0
    %v2876 = vadd.f32 0.0, %v2875
    %v2877 = vpop.f32.mrb[0].mxu0
    %2878 = vmatprep.mubr.f32.mxu0 0.0
    %2879 = vmatmul.mubr.f32.gmra.mrb[0].mxu0 %v2499
    %v2880 = vpop.f32.mrb[0].mxu0
    %v2881 = vadd.f32 0.0, %v2880
    %v2882 = vpop.f32.mrb[0].mxu0
    %2883 = vmatprep.mubr.f32.mxu0 0.0
    %2884 = vmatmul.mubr.f32.gmra.mrb[0].mxu0 %v2502
    %v2885 = vpop.f32.mrb[0].mxu0
    %v2886 = vadd.f32 0.0, %v2885
    %v2887 = vpop.f32.mrb[0].mxu0
    %2888 = vmatprep.mubr.f32.mxu0 0.0
    %2889 = vmatmul.mubr.f32.gmra.mrb[0].mxu0 %v2505
    %v2890 = vpop.f32.mrb[0].mxu0
    %v2891 = vadd.f32 0.0, %v2890
    %v2892 = vpop.f32.mrb[0].mxu0
    %2893 = vmatprep.mubr.f32.mxu0 0.0
    %2894 = vmatmul.mubr.f32.gmra.mrb[0].mxu0 %v2508
    %v2895 = vpop.f32.mrb[0].mxu0
    %v2896 = vadd.f32 0.0, %v2895
    %v2897 = vpop.f32.mrb[0].mxu0
    %2898 = vmatprep.mubr.f32.mxu0 0.0
    %2899 = vmatmul.mubr.f32.gmra.mrb[0].mxu0 %v2511
    %v2900 = vpop.f32.mrb[0].mxu0
    %v2901 = vadd.f32 0.0, %v2900
    %v2902 = vpop.f32.mrb[0].mxu0
    %2903 = vmatprep.mubr.f32.mxu0 0.0
    %2904 = vmatmul.mubr.f32.gmra.mrb[0].mxu0 %v2514
    %v2905 = vpop.f32.mrb[0].mxu0
    %v2906 = vadd.f32 0.0, %v2905
    %v2907 = vpop.f32.mrb[0].mxu0
    %2908 = vmatprep.mubr.f32.mxu0 0.0
    %2909 = vmatmul.mubr.f32.gmra.mrb[0].mxu0 %v2517
    %v2910 = vpop.f32.mrb[0].mxu0
    %v2911 = vadd.f32 0.0, %v2910
    %v2912 = vpop.f32.mrb[0].mxu0
    %2913 = vmatprep.mubr.f32.mxu0 0.0
    %2914 = vmatmul.mubr.f32.gmra.mrb[0].mxu0 %v2520
    %v2915 = vpop.f32.mrb[0].mxu0
    %v2916 = vadd.f32 0.0, %v2915
    %v2917 = vpop.f32.mrb[0].mxu0
    %2918 = vmatprep.mubr.f32.mxu0 0.0
    %2919 = vmatmul.mubr.f32.gmra.mrb[0].mxu0 %v2523
    %v2920 = vpop.f32.mrb[0].mxu0
    %v2921 = vadd.f32 0.0, %v2920
    %v2922 = vpop.f32.mrb[0].mxu0
    %2923 = vmatprep.mubr.f32.mxu0 0.0
    %2924 = vmatmul.mubr.f32.gmra.mrb[0].mxu0 %v2526
    %v2925 = vpop.f32.mrb[0].mxu0
    %v2926 = vadd.f32 0.0, %v2925
    %v2927 = vpop.f32.mrb[0].mxu0
    %2928 = vmatprep.mubr.f32.mxu0 0.0
    %2929 = vmatmul.mubr.f32.gmra.mrb[0].mxu0 %v2529
    %v2930 = vpop.f32.mrb[0].mxu0
    %v2931 = vadd.f32 0.0, %v2930
    %v2932 = vpop.f32.mrb[0].mxu0
    %2933 = vmatprep.mubr.f32.mxu0 0.0
    %2934 = vmatmul.mubr.f32.gmra.mrb[0].mxu0 %v2532
    %v2935 = vpop.f32.mrb[0].mxu0
    %v2936 = vadd.f32 0.0, %v2935
    %v2937 = vpop.f32.mrb[0].mxu0
    %2938 = vmatprep.mubr.f32.mxu0 0.0
    %2939 = vmatmul.mubr.f32.gmra.mrb[0].mxu0 %v2535
    %v2940 = vpop.f32.mrb[0].mxu0
    %v2941 = vadd.f32 0.0, %v2940
    %v2942 = vpop.f32.mrb[0].mxu0
    %2943 = vmatprep.mubr.f32.mxu0 0.0
    %2944 = vmatmul.mubr.f32.gmra.mrb[0].mxu0 %v2538
    %v2945 = vpop.f32.mrb[0].mxu0
    %v2946 = vadd.f32 0.0, %v2945
    %v2947 = vpop.f32.mrb[0].mxu0
    %2948 = vmatprep.mubr.f32.mxu0 0.0
    %2949 = vmatmul.mubr.f32.gmra.mrb[0].mxu0 %v2541
    %v2950 = vpop.f32.mrb[0].mxu0
    %v2951 = vadd.f32 0.0, %v2950
    %v2952 = vpop.f32.mrb[0].mxu0
    %2953 = vmatprep.mubr.f32.mxu0 0.0
    %2954 = vmatmul.mubr.f32.gmra.mrb[0].mxu0 %v2544
    %v2955 = vpop.f32.mrb[0].mxu0
    %v2956 = vadd.f32 0.0, %v2955
    %v2957 = vpop.f32.mrb[0].mxu0
    %2958 = vmatprep.mubr.f32.mxu0 0.0
    %2959 = vmatmul.mubr.f32.gmra.mrb[0].mxu0 %v2547
    %v2960 = vpop.f32.mrb[0].mxu0
    %v2961 = vadd.f32 0.0, %v2960
    %v2962 = vpop.f32.mrb[0].mxu0
    %2963 = vmatprep.mubr.f32.mxu0 0.0
    %2964 = vmatmul.mubr.f32.gmra.mrb[0].mxu0 %v2550
    %v2965 = vpop.f32.mrb[0].mxu0
    %v2966 = vadd.f32 0.0, %v2965
    %v2967 = vpop.f32.mrb[0].mxu0
    %2968 = vmatprep.mubr.f32.mxu0 0.0
    %2969 = vmatmul.mubr.f32.gmra.mrb[0].mxu0 %v2553
    %v2970 = vpop.f32.mrb[0].mxu0
    %v2971 = vadd.f32 0.0, %v2970
    %v2972 = vpop.f32.mrb[0].mxu0
    %2973 = vmatprep.mubr.f32.mxu0 0.0
    %2974 = vmatmul.mubr.f32.gmra.mrb[0].mxu0 %v2556
    %v2975 = vpop.f32.mrb[0].mxu0
    %v2976 = vadd.f32 0.0, %v2975
    %v2977 = vpop.f32.mrb[0].mxu0
    %2978 = vmatprep.mubr.f32.mxu0 0.0
    %2979 = vmatmul.mubr.f32.gmra.mrb[0].mxu0 %v2559
    %v2980 = vpop.f32.mrb[0].mxu0
    %v2981 = vadd.f32 0.0, %v2980
    %v2982 = vpop.f32.mrb[0].mxu0
    %2983 = vmatprep.mubr.f32.mxu0 0.0
    %2984 = vmatmul.mubr.f32.gmra.mrb[0].mxu0 %v2562
    %v2985 = vpop.f32.mrb[0].mxu0
    %v2986 = vadd.f32 0.0, %v2985
    %v2987 = vpop.f32.mrb[0].mxu0
    %2988 = vmatprep.mubr.f32.mxu0 0.0
    %2989 = vmatmul.mubr.f32.gmra.mrb[0].mxu0 %v2565
    %v2990 = vpop.f32.mrb[0].mxu0
    %v2991 = vadd.f32 0.0, %v2990
    %v2992 = vpop.f32.mrb[0].mxu0
    %2993 = vmatprep.mubr.f32.mxu0 0.0
    %2994 = vmatmul.mubr.f32.gmra.mrb[0].mxu0 %v2568
    %v2995 = vpop.f32.mrb[0].mxu0
    %v2996 = vadd.f32 0.0, %v2995
    %v2997 = vpop.f32.mrb[0].mxu0
    %2998 = vmatprep.mubr.f32.mxu0 0.0
    %2999 = vmatmul.mubr.f32.gmra.mrb[0].mxu0 %v2571
    %v3000 = vpop.f32.mrb[0].mxu0
    %v3001 = vadd.f32 0.0, %v3000
    %v3002 = vpop.f32.mrb[0].mxu0
    %3003 = vmatprep.mubr.f32.mxu0 0.0
    %3004 = vmatmul.mubr.f32.gmra.mrb[0].mxu0 %v2574
    %v3005 = vpop.f32.mrb[0].mxu0
    %v3006 = vadd.f32 0.0, %v3005
    %v3007 = vpop.f32.mrb[0].mxu0
    %3008 = vmatprep.mubr.f32.mxu0 0.0
    %3009 = vmatmul.mubr.f32.gmra.mrb[0].mxu0 %v2577
    %v3010 = vpop.f32.mrb[0].mxu0
    %v3011 = vadd.f32 0.0, %v3010
    %v3012 = vpop.f32.mrb[0].mxu0
    %3013 = vmatprep.mubr.f32.mxu0 0.0
    %3014 = vmatmul.mubr.f32.gmra.mrb[0].mxu0 %v2580
    %v3015 = vpop.f32.mrb[0].mxu0
    %v3016 = vadd.f32 0.0, %v3015
    %v3017 = vpop.f32.mrb[0].mxu0
    %3018 = vmatprep.mubr.f32.mxu0 0.0
    %3019 = vmatmul.mubr.f32.gmra.mrb[0].mxu0 %v2583
    %v3020 = vpop.f32.mrb[0].mxu0
    %v3021 = vadd.f32 0.0, %v3020
    %v3022 = vpop.f32.mrb[0].mxu0
    %3023 = vmatprep.mubr.f32.mxu0 0.0
    %3024 = vmatmul.mubr.f32.gmra.mrb[0].mxu0 %v2586
    %v3025 = vpop.f32.mrb[0].mxu0
    %v3026 = vadd.f32 0.0, %v3025
    %v3027 = vpop.f32.mrb[0].mxu0
    %3028 = vmatprep.mubr.f32.mxu0 0.0
    %3029 = vmatmul.mubr.f32.gmra.mrb[0].mxu0 %v2589
    %v3030 = vpop.f32.mrb[0].mxu0
    %v3031 = vadd.f32 0.0, %v3030
    %v3032 = vpop.f32.mrb[0].mxu0
    %3033 = vmatprep.mubr.f32.mxu0 0.0
    %3034 = vmatmul.mubr.f32.gmra.mrb[0].mxu0 %v2592
    %v3035 = vpop.f32.mrb[0].mxu0
    %v3036 = vadd.f32 0.0, %v3035
    %v3037 = vpop.f32.mrb[0].mxu0
    %3038 = vmatprep.mubr.f32.mxu0 0.0
    %3039 = vmatmul.mubr.f32.gmra.mrb[0].mxu0 %v2595
    %v3040 = vpop.f32.mrb[0].mxu0
    %v3041 = vadd.f32 0.0, %v3040
    %v3042 = vpop.f32.mrb[0].mxu0
    %3043 = vmatprep.mubr.f32.mxu0 0.0
    %3044 = vmatmul.mubr.f32.gmra.mrb[0].mxu0 %v2598
    %v3045 = vpop.f32.mrb[0].mxu0
    %v3046 = vadd.f32 0.0, %v3045
    %v3047 = vpop.f32.mrb[0].mxu0
    %3048 = vmatprep.mubr.f32.mxu0 0.0
    %3049 = vmatmul.mubr.f32.gmra.mrb[0].mxu0 %v2601
    %v3050 = vpop.f32.mrb[0].mxu0
    %v3051 = vadd.f32 0.0, %v3050
    %v3052 = vpop.f32.mrb[0].mxu0
    %3053 = vmatprep.mubr.f32.mxu0 0.0
    %3054 = vmatmul.mubr.f32.gmra.mrb[0].mxu0 %v2604
    %v3055 = vpop.f32.mrb[0].mxu0
    %v3056 = vadd.f32 0.0, %v3055
    %v3057 = vpop.f32.mrb[0].mxu0
    %3058 = vmatprep.mubr.f32.mxu0 0.0
    %3059 = vmatmul.mubr.f32.gmra.mrb[0].mxu0 %v2607
    %v3060 = vpop.f32.mrb[0].mxu0
    %v3061 = vadd.f32 0.0, %v3060
    %v3062 = vpop.f32.mrb[0].mxu0
    %3063 = vmatprep.mubr.f32.mxu0 0.0
    %3064 = vmatmul.mubr.f32.gmra.mrb[0].mxu0 %v2610
    %v3065 = vpop.f32.mrb[0].mxu0
    %v3066 = vadd.f32 0.0, %v3065
    %v3067 = vpop.f32.mrb[0].mxu0
    %3068 = vmatprep.mubr.f32.mxu0 0.0
    %3069 = vmatmul.mubr.f32.gmra.mrb[0].mxu0 %v2613
    %v3070 = vpop.f32.mrb[0].mxu0
    %v3071 = vadd.f32 0.0, %v3070
    %v3072 = vpop.f32.mrb[0].mxu0
    %3073 = vmatprep.mubr.f32.mxu0 0.0
    %3074 = vmatmul.mubr.f32.gmra.mrb[0].mxu0 %v2616
    %v3075 = vpop.f32.mrb[0].mxu0
    %v3076 = vadd.f32 0.0, %v3075
    %v3077 = vpop.f32.mrb[0].mxu0
    %3078 = vmatprep.mubr.f32.mxu0 0.0
    %3079 = vmatmul.mubr.f32.gmra.mrb[0].mxu0 %v2619
    %v3080 = vpop.f32.mrb[0].mxu0
    %v3081 = vadd.f32 0.0, %v3080
    %v3082 = vpop.f32.mrb[0].mxu0
    %3083 = vmatprep.mubr.f32.mxu0 0.0
    %3084 = vmatmul.mubr.f32.gmra.mrb[0].mxu0 %v2622
    %v3085 = vpop.f32.mrb[0].mxu0
    %v3086 = vadd.f32 0.0, %v3085
    %v3087 = vpop.f32.mrb[0].mxu0
    %3088 = vmatprep.mubr.f32.mxu0 0.0
    %3089 = vmatmul.mubr.f32.gmra.mrb[0].mxu0 %v2625
    %v3090 = vpop.f32.mrb[0].mxu0
    %v3091 = vadd.f32 0.0, %v3090
    %v3092 = vpop.f32.mrb[0].mxu0
    %3093 = vmatprep.mubr.f32.mxu0 0.0
    %3094 = vmatmul.mubr.f32.gmra.mrb[0].mxu0 %v2628
    %v3095 = vpop.f32.mrb[0].mxu0
    %v3096 = vadd.f32 0.0, %v3095
    %v3097 = vpop.f32.mrb[0].mxu0
    %3098 = vmatprep.mubr.f32.mxu0 0.0
    %3099 = vmatmul.mubr.f32.gmra.mrb[0].mxu0 %v2631
    %v3100 = vpop.f32.mrb[0].mxu0
    %v3101 = vadd.f32 0.0, %v3100
    %v3102 = vpop.f32.mrb[0].mxu0
    %3103 = vdwg.mxu0
    %3104 = vxpose.xlu0.b32.start [1/16] %v2706, 128
    %3105 = vxpose.xlu0.b32.cont [2/16] %v2711, 128
    %3106 = vxpose.xlu0.b32.cont [3/16] 0.0, 128
    %3107 = vxpose.xlu0.b32.cont [4/16] 0.0, 128
    %3108 = vxpose.xlu0.b32.cont [5/16] 0.0, 128
    %3109 = vxpose.xlu0.b32.cont [6/16] 0.0, 128
    %3110 = vxpose.xlu0.b32.cont [7/16] 0.0, 128
    %3111 = vxpose.xlu0.b32.cont [8/16] 0.0, 128
    %3112 = vxpose.xlu0.b32.cont [9/16] 0.0, 128
    %3113 = vxpose.xlu0.b32.cont [10/16] 0.0, 128
    %3114 = vxpose.xlu0.b32.cont [11/16] 0.0, 128
    %3115 = vxpose.xlu0.b32.cont [12/16] 0.0, 128
    %3116 = vxpose.xlu0.b32.cont [13/16] 0.0, 128
    %3117 = vxpose.xlu0.b32.cont [14/16] 0.0, 128
    %3118 = vxpose.xlu0.b32.cont [15/16] 0.0, 128
    %3119 = vxpose.xlu0.b32.end [16/16] 0.0, 128
    %v3120 = vpop.trf.xlu0
    %v3121 = vpop.trf.xlu0
    %v3122 = vpop.trf.xlu0
    %v3123 = vpop.trf.xlu0
    %v3124 = vpop.trf.xlu0
    %v3125 = vpop.trf.xlu0
    %v3126 = vpop.trf.xlu0
    %v3127 = vpop.trf.xlu0
    %v3128 = vpop.trf.xlu0
    %v3129 = vpop.trf.xlu0
    %v3130 = vpop.trf.xlu0
    %v3131 = vpop.trf.xlu0
    %v3132 = vpop.trf.xlu0
    %v3133 = vpop.trf.xlu0
    %v3134 = vpop.trf.xlu0
    %v3135 = vpop.trf.xlu0
    %3136 = vxpose.xlu0.b32.start [1/16] %v2716, 128
    %3137 = vxpose.xlu0.b32.cont [2/16] %v2721, 128
    %3138 = vxpose.xlu0.b32.cont [3/16] 0.0, 128
    %3139 = vxpose.xlu0.b32.cont [4/16] 0.0, 128
    %3140 = vxpose.xlu0.b32.cont [5/16] 0.0, 128
    %3141 = vxpose.xlu0.b32.cont [6/16] 0.0, 128
    %3142 = vxpose.xlu0.b32.cont [7/16] 0.0, 128
    %3143 = vxpose.xlu0.b32.cont [8/16] 0.0, 128
    %3144 = vxpose.xlu0.b32.cont [9/16] 0.0, 128
    %3145 = vxpose.xlu0.b32.cont [10/16] 0.0, 128
    %3146 = vxpose.xlu0.b32.cont [11/16] 0.0, 128
    %3147 = vxpose.xlu0.b32.cont [12/16] 0.0, 128
    %3148 = vxpose.xlu0.b32.cont [13/16] 0.0, 128
    %3149 = vxpose.xlu0.b32.cont [14/16] 0.0, 128
    %3150 = vxpose.xlu0.b32.cont [15/16] 0.0, 128
    %3151 = vxpose.xlu0.b32.end [16/16] 0.0, 128
    %v3152 = vpop.trf.xlu0
    %v3153 = vpop.trf.xlu0
    %v3154 = vpop.trf.xlu0
    %v3155 = vpop.trf.xlu0
    %v3156 = vpop.trf.xlu0
    %v3157 = vpop.trf.xlu0
    %v3158 = vpop.trf.xlu0
    %v3159 = vpop.trf.xlu0
    %v3160 = vpop.trf.xlu0
    %v3161 = vpop.trf.xlu0
    %v3162 = vpop.trf.xlu0
    %v3163 = vpop.trf.xlu0
    %v3164 = vpop.trf.xlu0
    %v3165 = vpop.trf.xlu0
    %v3166 = vpop.trf.xlu0
    %v3167 = vpop.trf.xlu0
    %3168 = vxpose.xlu0.b32.start [1/16] %v2726, 128
    %3169 = vxpose.xlu0.b32.cont [2/16] %v2731, 128
    %3170 = vxpose.xlu0.b32.cont [3/16] 0.0, 128
    %3171 = vxpose.xlu0.b32.cont [4/16] 0.0, 128
    %3172 = vxpose.xlu0.b32.cont [5/16] 0.0, 128
    %3173 = vxpose.xlu0.b32.cont [6/16] 0.0, 128
    %3174 = vxpose.xlu0.b32.cont [7/16] 0.0, 128
    %3175 = vxpose.xlu0.b32.cont [8/16] 0.0, 128
    %3176 = vxpose.xlu0.b32.cont [9/16] 0.0, 128
    %3177 = vxpose.xlu0.b32.cont [10/16] 0.0, 128
    %3178 = vxpose.xlu0.b32.cont [11/16] 0.0, 128
    %3179 = vxpose.xlu0.b32.cont [12/16] 0.0, 128
    %3180 = vxpose.xlu0.b32.cont [13/16] 0.0, 128
    %3181 = vxpose.xlu0.b32.cont [14/16] 0.0, 128
    %3182 = vxpose.xlu0.b32.cont [15/16] 0.0, 128
    %3183 = vxpose.xlu0.b32.end [16/16] 0.0, 128
    %v3184 = vpop.trf.xlu0
    %v3185 = vpop.trf.xlu0
    %v3186 = vpop.trf.xlu0
    %v3187 = vpop.trf.xlu0
    %v3188 = vpop.trf.xlu0
    %v3189 = vpop.trf.xlu0
    %v3190 = vpop.trf.xlu0
    %v3191 = vpop.trf.xlu0
    %v3192 = vpop.trf.xlu0
    %v3193 = vpop.trf.xlu0
    %v3194 = vpop.trf.xlu0
    %v3195 = vpop.trf.xlu0
    %v3196 = vpop.trf.xlu0
    %v3197 = vpop.trf.xlu0
    %v3198 = vpop.trf.xlu0
    %v3199 = vpop.trf.xlu0
    %3200 = vxpose.xlu0.b32.start [1/16] %v2736, 128
    %3201 = vxpose.xlu0.b32.cont [2/16] %v2741, 128
    %3202 = vxpose.xlu0.b32.cont [3/16] 0.0, 128
    %3203 = vxpose.xlu0.b32.cont [4/16] 0.0, 128
    %3204 = vxpose.xlu0.b32.cont [5/16] 0.0, 128
    %3205 = vxpose.xlu0.b32.cont [6/16] 0.0, 128
    %3206 = vxpose.xlu0.b32.cont [7/16] 0.0, 128
    %3207 = vxpose.xlu0.b32.cont [8/16] 0.0, 128
    %3208 = vxpose.xlu0.b32.cont [9/16] 0.0, 128
    %3209 = vxpose.xlu0.b32.cont [10/16] 0.0, 128
    %3210 = vxpose.xlu0.b32.cont [11/16] 0.0, 128
    %3211 = vxpose.xlu0.b32.cont [12/16] 0.0, 128
    %3212 = vxpose.xlu0.b32.cont [13/16] 0.0, 128
    %3213 = vxpose.xlu0.b32.cont [14/16] 0.0, 128
    %3214 = vxpose.xlu0.b32.cont [15/16] 0.0, 128
    %3215 = vxpose.xlu0.b32.end [16/16] 0.0, 128
    %v3216 = vpop.trf.xlu0
    %v3217 = vpop.trf.xlu0
    %v3218 = vpop.trf.xlu0
    %v3219 = vpop.trf.xlu0
    %v3220 = vpop.trf.xlu0
    %v3221 = vpop.trf.xlu0
    %v3222 = vpop.trf.xlu0
    %v3223 = vpop.trf.xlu0
    %v3224 = vpop.trf.xlu0
    %v3225 = vpop.trf.xlu0
    %v3226 = vpop.trf.xlu0
    %v3227 = vpop.trf.xlu0
    %v3228 = vpop.trf.xlu0
    %v3229 = vpop.trf.xlu0
    %v3230 = vpop.trf.xlu0
    %v3231 = vpop.trf.xlu0
    %3232 = vxpose.xlu0.b32.start [1/16] %v2746, 128
    %3233 = vxpose.xlu0.b32.cont [2/16] %v2751, 128
    %3234 = vxpose.xlu0.b32.cont [3/16] 0.0, 128
    %3235 = vxpose.xlu0.b32.cont [4/16] 0.0, 128
    %3236 = vxpose.xlu0.b32.cont [5/16] 0.0, 128
    %3237 = vxpose.xlu0.b32.cont [6/16] 0.0, 128
    %3238 = vxpose.xlu0.b32.cont [7/16] 0.0, 128
    %3239 = vxpose.xlu0.b32.cont [8/16] 0.0, 128
    %3240 = vxpose.xlu0.b32.cont [9/16] 0.0, 128
    %3241 = vxpose.xlu0.b32.cont [10/16] 0.0, 128
    %3242 = vxpose.xlu0.b32.cont [11/16] 0.0, 128
    %3243 = vxpose.xlu0.b32.cont [12/16] 0.0, 128
    %3244 = vxpose.xlu0.b32.cont [13/16] 0.0, 128
    %3245 = vxpose.xlu0.b32.cont [14/16] 0.0, 128
    %3246 = vxpose.xlu0.b32.cont [15/16] 0.0, 128
    %3247 = vxpose.xlu0.b32.end [16/16] 0.0, 128
    %v3248 = vpop.trf.xlu0
    %v3249 = vpop.trf.xlu0
    %v3250 = vpop.trf.xlu0
    %v3251 = vpop.trf.xlu0
    %v3252 = vpop.trf.xlu0
    %v3253 = vpop.trf.xlu0
    %v3254 = vpop.trf.xlu0
    %v3255 = vpop.trf.xlu0
    %v3256 = vpop.trf.xlu0
    %v3257 = vpop.trf.xlu0
    %v3258 = vpop.trf.xlu0
    %v3259 = vpop.trf.xlu0
    %v3260 = vpop.trf.xlu0
    %v3261 = vpop.trf.xlu0
    %v3262 = vpop.trf.xlu0
    %v3263 = vpop.trf.xlu0
    %3264 = vxpose.xlu0.b32.start [1/16] %v2756, 128
    %3265 = vxpose.xlu0.b32.cont [2/16] %v2761, 128
    %3266 = vxpose.xlu0.b32.cont [3/16] 0.0, 128
    %3267 = vxpose.xlu0.b32.cont [4/16] 0.0, 128
    %3268 = vxpose.xlu0.b32.cont [5/16] 0.0, 128
    %3269 = vxpose.xlu0.b32.cont [6/16] 0.0, 128
    %3270 = vxpose.xlu0.b32.cont [7/16] 0.0, 128
    %3271 = vxpose.xlu0.b32.cont [8/16] 0.0, 128
    %3272 = vxpose.xlu0.b32.cont [9/16] 0.0, 128
    %3273 = vxpose.xlu0.b32.cont [10/16] 0.0, 128
    %3274 = vxpose.xlu0.b32.cont [11/16] 0.0, 128
    %3275 = vxpose.xlu0.b32.cont [12/16] 0.0, 128
    %3276 = vxpose.xlu0.b32.cont [13/16] 0.0, 128
    %3277 = vxpose.xlu0.b32.cont [14/16] 0.0, 128
    %3278 = vxpose.xlu0.b32.cont [15/16] 0.0, 128
    %3279 = vxpose.xlu0.b32.end [16/16] 0.0, 128
    %v3280 = vpop.trf.xlu0
    %v3281 = vpop.trf.xlu0
    %v3282 = vpop.trf.xlu0
    %v3283 = vpop.trf.xlu0
    %v3284 = vpop.trf.xlu0
    %v3285 = vpop.trf.xlu0
    %v3286 = vpop.trf.xlu0
    %v3287 = vpop.trf.xlu0
    %v3288 = vpop.trf.xlu0
    %v3289 = vpop.trf.xlu0
    %v3290 = vpop.trf.xlu0
    %v3291 = vpop.trf.xlu0
    %v3292 = vpop.trf.xlu0
    %v3293 = vpop.trf.xlu0
    %v3294 = vpop.trf.xlu0
    %v3295 = vpop.trf.xlu0
    %3296 = vxpose.xlu0.b32.start [1/16] %v2766, 128
    %3297 = vxpose.xlu0.b32.cont [2/16] %v2771, 128
    %3298 = vxpose.xlu0.b32.cont [3/16] 0.0, 128
    %3299 = vxpose.xlu0.b32.cont [4/16] 0.0, 128
    %3300 = vxpose.xlu0.b32.cont [5/16] 0.0, 128
    %3301 = vxpose.xlu0.b32.cont [6/16] 0.0, 128
    %3302 = vxpose.xlu0.b32.cont [7/16] 0.0, 128
    %3303 = vxpose.xlu0.b32.cont [8/16] 0.0, 128
    %3304 = vxpose.xlu0.b32.cont [9/16] 0.0, 128
    %3305 = vxpose.xlu0.b32.cont [10/16] 0.0, 128
    %3306 = vxpose.xlu0.b32.cont [11/16] 0.0, 128
    %3307 = vxpose.xlu0.b32.cont [12/16] 0.0, 128
    %3308 = vxpose.xlu0.b32.cont [13/16] 0.0, 128
    %3309 = vxpose.xlu0.b32.cont [14/16] 0.0, 128
    %3310 = vxpose.xlu0.b32.cont [15/16] 0.0, 128
    %3311 = vxpose.xlu0.b32.end [16/16] 0.0, 128
    %v3312 = vpop.trf.xlu0
    %v3313 = vpop.trf.xlu0
    %v3314 = vpop.trf.xlu0
    %v3315 = vpop.trf.xlu0
    %v3316 = vpop.trf.xlu0
    %v3317 = vpop.trf.xlu0
    %v3318 = vpop.trf.xlu0
    %v3319 = vpop.trf.xlu0
    %v3320 = vpop.trf.xlu0
    %v3321 = vpop.trf.xlu0
    %v3322 = vpop.trf.xlu0
    %v3323 = vpop.trf.xlu0
    %v3324 = vpop.trf.xlu0
    %v3325 = vpop.trf.xlu0
    %v3326 = vpop.trf.xlu0
    %v3327 = vpop.trf.xlu0
    %3328 = vxpose.xlu0.b32.start [1/16] %v2776, 128
    %3329 = vxpose.xlu0.b32.cont [2/16] %v2781, 128
    %3330 = vxpose.xlu0.b32.cont [3/16] 0.0, 128
    %3331 = vxpose.xlu0.b32.cont [4/16] 0.0, 128
    %3332 = vxpose.xlu0.b32.cont [5/16] 0.0, 128
    %3333 = vxpose.xlu0.b32.cont [6/16] 0.0, 128
    %3334 = vxpose.xlu0.b32.cont [7/16] 0.0, 128
    %3335 = vxpose.xlu0.b32.cont [8/16] 0.0, 128
    %3336 = vxpose.xlu0.b32.cont [9/16] 0.0, 128
    %3337 = vxpose.xlu0.b32.cont [10/16] 0.0, 128
    %3338 = vxpose.xlu0.b32.cont [11/16] 0.0, 128
    %3339 = vxpose.xlu0.b32.cont [12/16] 0.0, 128
    %3340 = vxpose.xlu0.b32.cont [13/16] 0.0, 128
    %3341 = vxpose.xlu0.b32.cont [14/16] 0.0, 128
    %3342 = vxpose.xlu0.b32.cont [15/16] 0.0, 128
    %3343 = vxpose.xlu0.b32.end [16/16] 0.0, 128
    %v3344 = vpop.trf.xlu0
    %v3345 = vpop.trf.xlu0
    %v3346 = vpop.trf.xlu0
    %v3347 = vpop.trf.xlu0
    %v3348 = vpop.trf.xlu0
    %v3349 = vpop.trf.xlu0
    %v3350 = vpop.trf.xlu0
    %v3351 = vpop.trf.xlu0
    %v3352 = vpop.trf.xlu0
    %v3353 = vpop.trf.xlu0
    %v3354 = vpop.trf.xlu0
    %v3355 = vpop.trf.xlu0
    %v3356 = vpop.trf.xlu0
    %v3357 = vpop.trf.xlu0
    %v3358 = vpop.trf.xlu0
    %v3359 = vpop.trf.xlu0
    %3360 = vxpose.xlu0.b32.start [1/16] %v2786, 128
    %3361 = vxpose.xlu0.b32.cont [2/16] %v2791, 128
    %3362 = vxpose.xlu0.b32.cont [3/16] 0.0, 128
    %3363 = vxpose.xlu0.b32.cont [4/16] 0.0, 128
    %3364 = vxpose.xlu0.b32.cont [5/16] 0.0, 128
    %3365 = vxpose.xlu0.b32.cont [6/16] 0.0, 128
    %3366 = vxpose.xlu0.b32.cont [7/16] 0.0, 128
    %3367 = vxpose.xlu0.b32.cont [8/16] 0.0, 128
    %3368 = vxpose.xlu0.b32.cont [9/16] 0.0, 128
    %3369 = vxpose.xlu0.b32.cont [10/16] 0.0, 128
    %3370 = vxpose.xlu0.b32.cont [11/16] 0.0, 128
    %3371 = vxpose.xlu0.b32.cont [12/16] 0.0, 128
    %3372 = vxpose.xlu0.b32.cont [13/16] 0.0, 128
    %3373 = vxpose.xlu0.b32.cont [14/16] 0.0, 128
    %3374 = vxpose.xlu0.b32.cont [15/16] 0.0, 128
    %3375 = vxpose.xlu0.b32.end [16/16] 0.0, 128
    %v3376 = vpop.trf.xlu0
    %v3377 = vpop.trf.xlu0
    %v3378 = vpop.trf.xlu0
    %v3379 = vpop.trf.xlu0
    %v3380 = vpop.trf.xlu0
    %v3381 = vpop.trf.xlu0
    %v3382 = vpop.trf.xlu0
    %v3383 = vpop.trf.xlu0
    %v3384 = vpop.trf.xlu0
    %v3385 = vpop.trf.xlu0
    %v3386 = vpop.trf.xlu0
    %v3387 = vpop.trf.xlu0
    %v3388 = vpop.trf.xlu0
    %v3389 = vpop.trf.xlu0
    %v3390 = vpop.trf.xlu0
    %v3391 = vpop.trf.xlu0
    %3392 = vxpose.xlu0.b32.start [1/16] %v2796, 128
    %3393 = vxpose.xlu0.b32.cont [2/16] %v2801, 128
    %3394 = vxpose.xlu0.b32.cont [3/16] 0.0, 128
    %3395 = vxpose.xlu0.b32.cont [4/16] 0.0, 128
    %3396 = vxpose.xlu0.b32.cont [5/16] 0.0, 128
    %3397 = vxpose.xlu0.b32.cont [6/16] 0.0, 128
    %3398 = vxpose.xlu0.b32.cont [7/16] 0.0, 128
    %3399 = vxpose.xlu0.b32.cont [8/16] 0.0, 128
    %3400 = vxpose.xlu0.b32.cont [9/16] 0.0, 128
    %3401 = vxpose.xlu0.b32.cont [10/16] 0.0, 128
    %3402 = vxpose.xlu0.b32.cont [11/16] 0.0, 128
    %3403 = vxpose.xlu0.b32.cont [12/16] 0.0, 128
    %3404 = vxpose.xlu0.b32.cont [13/16] 0.0, 128
    %3405 = vxpose.xlu0.b32.cont [14/16] 0.0, 128
    %3406 = vxpose.xlu0.b32.cont [15/16] 0.0, 128
    %3407 = vxpose.xlu0.b32.end [16/16] 0.0, 128
    %v3408 = vpop.trf.xlu0
    %v3409 = vpop.trf.xlu0
    %v3410 = vpop.trf.xlu0
    %v3411 = vpop.trf.xlu0
    %v3412 = vpop.trf.xlu0
    %v3413 = vpop.trf.xlu0
    %v3414 = vpop.trf.xlu0
    %v3415 = vpop.trf.xlu0
    %v3416 = vpop.trf.xlu0
    %v3417 = vpop.trf.xlu0
    %v3418 = vpop.trf.xlu0
    %v3419 = vpop.trf.xlu0
    %v3420 = vpop.trf.xlu0
    %v3421 = vpop.trf.xlu0
    %v3422 = vpop.trf.xlu0
    %v3423 = vpop.trf.xlu0
    %3424 = vxpose.xlu0.b32.start [1/16] %v2806, 128
    %3425 = vxpose.xlu0.b32.cont [2/16] %v2811, 128
    %3426 = vxpose.xlu0.b32.cont [3/16] 0.0, 128
    %3427 = vxpose.xlu0.b32.cont [4/16] 0.0, 128
    %3428 = vxpose.xlu0.b32.cont [5/16] 0.0, 128
    %3429 = vxpose.xlu0.b32.cont [6/16] 0.0, 128
    %3430 = vxpose.xlu0.b32.cont [7/16] 0.0, 128
    %3431 = vxpose.xlu0.b32.cont [8/16] 0.0, 128
    %3432 = vxpose.xlu0.b32.cont [9/16] 0.0, 128
    %3433 = vxpose.xlu0.b32.cont [10/16] 0.0, 128
    %3434 = vxpose.xlu0.b32.cont [11/16] 0.0, 128
    %3435 = vxpose.xlu0.b32.cont [12/16] 0.0, 128
    %3436 = vxpose.xlu0.b32.cont [13/16] 0.0, 128
    %3437 = vxpose.xlu0.b32.cont [14/16] 0.0, 128
    %3438 = vxpose.xlu0.b32.cont [15/16] 0.0, 128
    %3439 = vxpose.xlu0.b32.end [16/16] 0.0, 128
    %v3440 = vpop.trf.xlu0
    %v3441 = vpop.trf.xlu0
    %v3442 = vpop.trf.xlu0
    %v3443 = vpop.trf.xlu0
    %v3444 = vpop.trf.xlu0
    %v3445 = vpop.trf.xlu0
    %v3446 = vpop.trf.xlu0
    %v3447 = vpop.trf.xlu0
    %v3448 = vpop.trf.xlu0
    %v3449 = vpop.trf.xlu0
    %v3450 = vpop.trf.xlu0
    %v3451 = vpop.trf.xlu0
    %v3452 = vpop.trf.xlu0
    %v3453 = vpop.trf.xlu0
    %v3454 = vpop.trf.xlu0
    %v3455 = vpop.trf.xlu0
    %3456 = vxpose.xlu0.b32.start [1/16] %v2816, 128
    %3457 = vxpose.xlu0.b32.cont [2/16] %v2821, 128
    %3458 = vxpose.xlu0.b32.cont [3/16] 0.0, 128
    %3459 = vxpose.xlu0.b32.cont [4/16] 0.0, 128
    %3460 = vxpose.xlu0.b32.cont [5/16] 0.0, 128
    %3461 = vxpose.xlu0.b32.cont [6/16] 0.0, 128
    %3462 = vxpose.xlu0.b32.cont [7/16] 0.0, 128
    %3463 = vxpose.xlu0.b32.cont [8/16] 0.0, 128
    %3464 = vxpose.xlu0.b32.cont [9/16] 0.0, 128
    %3465 = vxpose.xlu0.b32.cont [10/16] 0.0, 128
    %3466 = vxpose.xlu0.b32.cont [11/16] 0.0, 128
    %3467 = vxpose.xlu0.b32.cont [12/16] 0.0, 128
    %3468 = vxpose.xlu0.b32.cont [13/16] 0.0, 128
    %3469 = vxpose.xlu0.b32.cont [14/16] 0.0, 128
    %3470 = vxpose.xlu0.b32.cont [15/16] 0.0, 128
    %3471 = vxpose.xlu0.b32.end [16/16] 0.0, 128
    %v3472 = vpop.trf.xlu0
    %v3473 = vpop.trf.xlu0
    %v3474 = vpop.trf.xlu0
    %v3475 = vpop.trf.xlu0
    %v3476 = vpop.trf.xlu0
    %v3477 = vpop.trf.xlu0
    %v3478 = vpop.trf.xlu0
    %v3479 = vpop.trf.xlu0
    %v3480 = vpop.trf.xlu0
    %v3481 = vpop.trf.xlu0
    %v3482 = vpop.trf.xlu0
    %v3483 = vpop.trf.xlu0
    %v3484 = vpop.trf.xlu0
    %v3485 = vpop.trf.xlu0
    %v3486 = vpop.trf.xlu0
    %v3487 = vpop.trf.xlu0
    %3488 = vxpose.xlu0.b32.start [1/16] %v2826, 128
    %3489 = vxpose.xlu0.b32.cont [2/16] %v2831, 128
    %3490 = vxpose.xlu0.b32.cont [3/16] 0.0, 128
    %3491 = vxpose.xlu0.b32.cont [4/16] 0.0, 128
    %3492 = vxpose.xlu0.b32.cont [5/16] 0.0, 128
    %3493 = vxpose.xlu0.b32.cont [6/16] 0.0, 128
    %3494 = vxpose.xlu0.b32.cont [7/16] 0.0, 128
    %3495 = vxpose.xlu0.b32.cont [8/16] 0.0, 128
    %3496 = vxpose.xlu0.b32.cont [9/16] 0.0, 128
    %3497 = vxpose.xlu0.b32.cont [10/16] 0.0, 128
    %3498 = vxpose.xlu0.b32.cont [11/16] 0.0, 128
    %3499 = vxpose.xlu0.b32.cont [12/16] 0.0, 128
    %3500 = vxpose.xlu0.b32.cont [13/16] 0.0, 128
    %3501 = vxpose.xlu0.b32.cont [14/16] 0.0, 128
    %3502 = vxpose.xlu0.b32.cont [15/16] 0.0, 128
    %3503 = vxpose.xlu0.b32.end [16/16] 0.0, 128
    %v3504 = vpop.trf.xlu0
    %v3505 = vpop.trf.xlu0
    %v3506 = vpop.trf.xlu0
    %v3507 = vpop.trf.xlu0
    %v3508 = vpop.trf.xlu0
    %v3509 = vpop.trf.xlu0
    %v3510 = vpop.trf.xlu0
    %v3511 = vpop.trf.xlu0
    %v3512 = vpop.trf.xlu0
    %v3513 = vpop.trf.xlu0
    %v3514 = vpop.trf.xlu0
    %v3515 = vpop.trf.xlu0
    %v3516 = vpop.trf.xlu0
    %v3517 = vpop.trf.xlu0
    %v3518 = vpop.trf.xlu0
    %v3519 = vpop.trf.xlu0
    %3520 = vxpose.xlu0.b32.start [1/16] %v2836, 128
    %3521 = vxpose.xlu0.b32.cont [2/16] %v2841, 128
    %3522 = vxpose.xlu0.b32.cont [3/16] 0.0, 128
    %3523 = vxpose.xlu0.b32.cont [4/16] 0.0, 128
    %3524 = vxpose.xlu0.b32.cont [5/16] 0.0, 128
    %3525 = vxpose.xlu0.b32.cont [6/16] 0.0, 128
    %3526 = vxpose.xlu0.b32.cont [7/16] 0.0, 128
    %3527 = vxpose.xlu0.b32.cont [8/16] 0.0, 128
    %3528 = vxpose.xlu0.b32.cont [9/16] 0.0, 128
    %3529 = vxpose.xlu0.b32.cont [10/16] 0.0, 128
    %3530 = vxpose.xlu0.b32.cont [11/16] 0.0, 128
    %3531 = vxpose.xlu0.b32.cont [12/16] 0.0, 128
    %3532 = vxpose.xlu0.b32.cont [13/16] 0.0, 128
    %3533 = vxpose.xlu0.b32.cont [14/16] 0.0, 128
    %3534 = vxpose.xlu0.b32.cont [15/16] 0.0, 128
    %3535 = vxpose.xlu0.b32.end [16/16] 0.0, 128
    %v3536 = vpop.trf.xlu0
    %v3537 = vpop.trf.xlu0
    %v3538 = vpop.trf.xlu0
    %v3539 = vpop.trf.xlu0
    %v3540 = vpop.trf.xlu0
    %v3541 = vpop.trf.xlu0
    %v3542 = vpop.trf.xlu0
    %v3543 = vpop.trf.xlu0
    %v3544 = vpop.trf.xlu0
    %v3545 = vpop.trf.xlu0
    %v3546 = vpop.trf.xlu0
    %v3547 = vpop.trf.xlu0
    %v3548 = vpop.trf.xlu0
    %v3549 = vpop.trf.xlu0
    %v3550 = vpop.trf.xlu0
    %v3551 = vpop.trf.xlu0
    %3552 = vxpose.xlu0.b32.start [1/16] %v2846, 128
    %3553 = vxpose.xlu0.b32.cont [2/16] %v2851, 128
    %3554 = vxpose.xlu0.b32.cont [3/16] 0.0, 128
    %3555 = vxpose.xlu0.b32.cont [4/16] 0.0, 128
    %3556 = vxpose.xlu0.b32.cont [5/16] 0.0, 128
    %3557 = vxpose.xlu0.b32.cont [6/16] 0.0, 128
    %3558 = vxpose.xlu0.b32.cont [7/16] 0.0, 128
    %3559 = vxpose.xlu0.b32.cont [8/16] 0.0, 128
    %3560 = vxpose.xlu0.b32.cont [9/16] 0.0, 128
    %3561 = vxpose.xlu0.b32.cont [10/16] 0.0, 128
    %3562 = vxpose.xlu0.b32.cont [11/16] 0.0, 128
    %3563 = vxpose.xlu0.b32.cont [12/16] 0.0, 128
    %3564 = vxpose.xlu0.b32.cont [13/16] 0.0, 128
    %3565 = vxpose.xlu0.b32.cont [14/16] 0.0, 128
    %3566 = vxpose.xlu0.b32.cont [15/16] 0.0, 128
    %3567 = vxpose.xlu0.b32.end [16/16] 0.0, 128
    %v3568 = vpop.trf.xlu0
    %v3569 = vpop.trf.xlu0
    %v3570 = vpop.trf.xlu0
    %v3571 = vpop.trf.xlu0
    %v3572 = vpop.trf.xlu0
    %v3573 = vpop.trf.xlu0
    %v3574 = vpop.trf.xlu0
    %v3575 = vpop.trf.xlu0
    %v3576 = vpop.trf.xlu0
    %v3577 = vpop.trf.xlu0
    %v3578 = vpop.trf.xlu0
    %v3579 = vpop.trf.xlu0
    %v3580 = vpop.trf.xlu0
    %v3581 = vpop.trf.xlu0
    %v3582 = vpop.trf.xlu0
    %v3583 = vpop.trf.xlu0
    %3584 = vxpose.xlu0.b32.start [1/16] %v2856, 128
    %3585 = vxpose.xlu0.b32.cont [2/16] %v2861, 128
    %3586 = vxpose.xlu0.b32.cont [3/16] 0.0, 128
    %3587 = vxpose.xlu0.b32.cont [4/16] 0.0, 128
    %3588 = vxpose.xlu0.b32.cont [5/16] 0.0, 128
    %3589 = vxpose.xlu0.b32.cont [6/16] 0.0, 128
    %3590 = vxpose.xlu0.b32.cont [7/16] 0.0, 128
    %3591 = vxpose.xlu0.b32.cont [8/16] 0.0, 128
    %3592 = vxpose.xlu0.b32.cont [9/16] 0.0, 128
    %3593 = vxpose.xlu0.b32.cont [10/16] 0.0, 128
    %3594 = vxpose.xlu0.b32.cont [11/16] 0.0, 128
    %3595 = vxpose.xlu0.b32.cont [12/16] 0.0, 128
    %3596 = vxpose.xlu0.b32.cont [13/16] 0.0, 128
    %3597 = vxpose.xlu0.b32.cont [14/16] 0.0, 128
    %3598 = vxpose.xlu0.b32.cont [15/16] 0.0, 128
    %3599 = vxpose.xlu0.b32.end [16/16] 0.0, 128
    %v3600 = vpop.trf.xlu0
    %v3601 = vpop.trf.xlu0
    %v3602 = vpop.trf.xlu0
    %v3603 = vpop.trf.xlu0
    %v3604 = vpop.trf.xlu0
    %v3605 = vpop.trf.xlu0
    %v3606 = vpop.trf.xlu0
    %v3607 = vpop.trf.xlu0
    %v3608 = vpop.trf.xlu0
    %v3609 = vpop.trf.xlu0
    %v3610 = vpop.trf.xlu0
    %v3611 = vpop.trf.xlu0
    %v3612 = vpop.trf.xlu0
    %v3613 = vpop.trf.xlu0
    %v3614 = vpop.trf.xlu0
    %v3615 = vpop.trf.xlu0
    %3616 = vxpose.xlu0.b32.start [1/16] %v2866, 128
    %3617 = vxpose.xlu0.b32.cont [2/16] %v2871, 128
    %3618 = vxpose.xlu0.b32.cont [3/16] 0.0, 128
    %3619 = vxpose.xlu0.b32.cont [4/16] 0.0, 128
    %3620 = vxpose.xlu0.b32.cont [5/16] 0.0, 128
    %3621 = vxpose.xlu0.b32.cont [6/16] 0.0, 128
    %3622 = vxpose.xlu0.b32.cont [7/16] 0.0, 128
    %3623 = vxpose.xlu0.b32.cont [8/16] 0.0, 128
    %3624 = vxpose.xlu0.b32.cont [9/16] 0.0, 128
    %3625 = vxpose.xlu0.b32.cont [10/16] 0.0, 128
    %3626 = vxpose.xlu0.b32.cont [11/16] 0.0, 128
    %3627 = vxpose.xlu0.b32.cont [12/16] 0.0, 128
    %3628 = vxpose.xlu0.b32.cont [13/16] 0.0, 128
    %3629 = vxpose.xlu0.b32.cont [14/16] 0.0, 128
    %3630 = vxpose.xlu0.b32.cont [15/16] 0.0, 128
    %3631 = vxpose.xlu0.b32.end [16/16] 0.0, 128
    %v3632 = vpop.trf.xlu0
    %v3633 = vpop.trf.xlu0
    %v3634 = vpop.trf.xlu0
    %v3635 = vpop.trf.xlu0
    %v3636 = vpop.trf.xlu0
    %v3637 = vpop.trf.xlu0
    %v3638 = vpop.trf.xlu0
    %v3639 = vpop.trf.xlu0
    %v3640 = vpop.trf.xlu0
    %v3641 = vpop.trf.xlu0
    %v3642 = vpop.trf.xlu0
    %v3643 = vpop.trf.xlu0
    %v3644 = vpop.trf.xlu0
    %v3645 = vpop.trf.xlu0
    %v3646 = vpop.trf.xlu0
    %v3647 = vpop.trf.xlu0
    %3648 = vxpose.xlu0.b32.start [1/16] %v2876, 128
    %3649 = vxpose.xlu0.b32.cont [2/16] %v2881, 128
    %3650 = vxpose.xlu0.b32.cont [3/16] 0.0, 128
    %3651 = vxpose.xlu0.b32.cont [4/16] 0.0, 128
    %3652 = vxpose.xlu0.b32.cont [5/16] 0.0, 128
    %3653 = vxpose.xlu0.b32.cont [6/16] 0.0, 128
    %3654 = vxpose.xlu0.b32.cont [7/16] 0.0, 128
    %3655 = vxpose.xlu0.b32.cont [8/16] 0.0, 128
    %3656 = vxpose.xlu0.b32.cont [9/16] 0.0, 128
    %3657 = vxpose.xlu0.b32.cont [10/16] 0.0, 128
    %3658 = vxpose.xlu0.b32.cont [11/16] 0.0, 128
    %3659 = vxpose.xlu0.b32.cont [12/16] 0.0, 128
    %3660 = vxpose.xlu0.b32.cont [13/16] 0.0, 128
    %3661 = vxpose.xlu0.b32.cont [14/16] 0.0, 128
    %3662 = vxpose.xlu0.b32.cont [15/16] 0.0, 128
    %3663 = vxpose.xlu0.b32.end [16/16] 0.0, 128
    %v3664 = vpop.trf.xlu0
    %v3665 = vpop.trf.xlu0
    %v3666 = vpop.trf.xlu0
    %v3667 = vpop.trf.xlu0
    %v3668 = vpop.trf.xlu0
    %v3669 = vpop.trf.xlu0
    %v3670 = vpop.trf.xlu0
    %v3671 = vpop.trf.xlu0
    %v3672 = vpop.trf.xlu0
    %v3673 = vpop.trf.xlu0
    %v3674 = vpop.trf.xlu0
    %v3675 = vpop.trf.xlu0
    %v3676 = vpop.trf.xlu0
    %v3677 = vpop.trf.xlu0
    %v3678 = vpop.trf.xlu0
    %v3679 = vpop.trf.xlu0
    %3680 = vxpose.xlu0.b32.start [1/16] %v2886, 128
    %3681 = vxpose.xlu0.b32.cont [2/16] %v2891, 128
    %3682 = vxpose.xlu0.b32.cont [3/16] 0.0, 128
    %3683 = vxpose.xlu0.b32.cont [4/16] 0.0, 128
    %3684 = vxpose.xlu0.b32.cont [5/16] 0.0, 128
    %3685 = vxpose.xlu0.b32.cont [6/16] 0.0, 128
    %3686 = vxpose.xlu0.b32.cont [7/16] 0.0, 128
    %3687 = vxpose.xlu0.b32.cont [8/16] 0.0, 128
    %3688 = vxpose.xlu0.b32.cont [9/16] 0.0, 128
    %3689 = vxpose.xlu0.b32.cont [10/16] 0.0, 128
    %3690 = vxpose.xlu0.b32.cont [11/16] 0.0, 128
    %3691 = vxpose.xlu0.b32.cont [12/16] 0.0, 128
    %3692 = vxpose.xlu0.b32.cont [13/16] 0.0, 128
    %3693 = vxpose.xlu0.b32.cont [14/16] 0.0, 128
    %3694 = vxpose.xlu0.b32.cont [15/16] 0.0, 128
    %3695 = vxpose.xlu0.b32.end [16/16] 0.0, 128
    %v3696 = vpop.trf.xlu0
    %v3697 = vpop.trf.xlu0
    %v3698 = vpop.trf.xlu0
    %v3699 = vpop.trf.xlu0
    %v3700 = vpop.trf.xlu0
    %v3701 = vpop.trf.xlu0
    %v3702 = vpop.trf.xlu0
    %v3703 = vpop.trf.xlu0
    %v3704 = vpop.trf.xlu0
    %v3705 = vpop.trf.xlu0
    %v3706 = vpop.trf.xlu0
    %v3707 = vpop.trf.xlu0
    %v3708 = vpop.trf.xlu0
    %v3709 = vpop.trf.xlu0
    %v3710 = vpop.trf.xlu0
    %v3711 = vpop.trf.xlu0
    %3712 = vxpose.xlu0.b32.start [1/16] %v2896, 128
    %3713 = vxpose.xlu0.b32.cont [2/16] %v2901, 128
    %3714 = vxpose.xlu0.b32.cont [3/16] 0.0, 128
    %3715 = vxpose.xlu0.b32.cont [4/16] 0.0, 128
    %3716 = vxpose.xlu0.b32.cont [5/16] 0.0, 128
    %3717 = vxpose.xlu0.b32.cont [6/16] 0.0, 128
    %3718 = vxpose.xlu0.b32.cont [7/16] 0.0, 128
    %3719 = vxpose.xlu0.b32.cont [8/16] 0.0, 128
    %3720 = vxpose.xlu0.b32.cont [9/16] 0.0, 128
    %3721 = vxpose.xlu0.b32.cont [10/16] 0.0, 128
    %3722 = vxpose.xlu0.b32.cont [11/16] 0.0, 128
    %3723 = vxpose.xlu0.b32.cont [12/16] 0.0, 128
    %3724 = vxpose.xlu0.b32.cont [13/16] 0.0, 128
    %3725 = vxpose.xlu0.b32.cont [14/16] 0.0, 128
    %3726 = vxpose.xlu0.b32.cont [15/16] 0.0, 128
    %3727 = vxpose.xlu0.b32.end [16/16] 0.0, 128
    %v3728 = vpop.trf.xlu0
    %v3729 = vpop.trf.xlu0
    %v3730 = vpop.trf.xlu0
    %v3731 = vpop.trf.xlu0
    %v3732 = vpop.trf.xlu0
    %v3733 = vpop.trf.xlu0
    %v3734 = vpop.trf.xlu0
    %v3735 = vpop.trf.xlu0
    %v3736 = vpop.trf.xlu0
    %v3737 = vpop.trf.xlu0
    %v3738 = vpop.trf.xlu0
    %v3739 = vpop.trf.xlu0
    %v3740 = vpop.trf.xlu0
    %v3741 = vpop.trf.xlu0
    %v3742 = vpop.trf.xlu0
    %v3743 = vpop.trf.xlu0
    %3744 = vxpose.xlu0.b32.start [1/16] %v2906, 128
    %3745 = vxpose.xlu0.b32.cont [2/16] %v2911, 128
    %3746 = vxpose.xlu0.b32.cont [3/16] 0.0, 128
    %3747 = vxpose.xlu0.b32.cont [4/16] 0.0, 128
    %3748 = vxpose.xlu0.b32.cont [5/16] 0.0, 128
    %3749 = vxpose.xlu0.b32.cont [6/16] 0.0, 128
    %3750 = vxpose.xlu0.b32.cont [7/16] 0.0, 128
    %3751 = vxpose.xlu0.b32.cont [8/16] 0.0, 128
    %3752 = vxpose.xlu0.b32.cont [9/16] 0.0, 128
    %3753 = vxpose.xlu0.b32.cont [10/16] 0.0, 128
    %3754 = vxpose.xlu0.b32.cont [11/16] 0.0, 128
    %3755 = vxpose.xlu0.b32.cont [12/16] 0.0, 128
    %3756 = vxpose.xlu0.b32.cont [13/16] 0.0, 128
    %3757 = vxpose.xlu0.b32.cont [14/16] 0.0, 128
    %3758 = vxpose.xlu0.b32.cont [15/16] 0.0, 128
    %3759 = vxpose.xlu0.b32.end [16/16] 0.0, 128
    %v3760 = vpop.trf.xlu0
    %v3761 = vpop.trf.xlu0
    %v3762 = vpop.trf.xlu0
    %v3763 = vpop.trf.xlu0
    %v3764 = vpop.trf.xlu0
    %v3765 = vpop.trf.xlu0
    %v3766 = vpop.trf.xlu0
    %v3767 = vpop.trf.xlu0
    %v3768 = vpop.trf.xlu0
    %v3769 = vpop.trf.xlu0
    %v3770 = vpop.trf.xlu0
    %v3771 = vpop.trf.xlu0
    %v3772 = vpop.trf.xlu0
    %v3773 = vpop.trf.xlu0
    %v3774 = vpop.trf.xlu0
    %v3775 = vpop.trf.xlu0
    %3776 = vxpose.xlu0.b32.start [1/16] %v2916, 128
    %3777 = vxpose.xlu0.b32.cont [2/16] %v2921, 128
    %3778 = vxpose.xlu0.b32.cont [3/16] 0.0, 128
    %3779 = vxpose.xlu0.b32.cont [4/16] 0.0, 128
    %3780 = vxpose.xlu0.b32.cont [5/16] 0.0, 128
    %3781 = vxpose.xlu0.b32.cont [6/16] 0.0, 128
    %3782 = vxpose.xlu0.b32.cont [7/16] 0.0, 128
    %3783 = vxpose.xlu0.b32.cont [8/16] 0.0, 128
    %3784 = vxpose.xlu0.b32.cont [9/16] 0.0, 128
    %3785 = vxpose.xlu0.b32.cont [10/16] 0.0, 128
    %3786 = vxpose.xlu0.b32.cont [11/16] 0.0, 128
    %3787 = vxpose.xlu0.b32.cont [12/16] 0.0, 128
    %3788 = vxpose.xlu0.b32.cont [13/16] 0.0, 128
    %3789 = vxpose.xlu0.b32.cont [14/16] 0.0, 128
    %3790 = vxpose.xlu0.b32.cont [15/16] 0.0, 128
    %3791 = vxpose.xlu0.b32.end [16/16] 0.0, 128
    %v3792 = vpop.trf.xlu0
    %v3793 = vpop.trf.xlu0
    %v3794 = vpop.trf.xlu0
    %v3795 = vpop.trf.xlu0
    %v3796 = vpop.trf.xlu0
    %v3797 = vpop.trf.xlu0
    %v3798 = vpop.trf.xlu0
    %v3799 = vpop.trf.xlu0
    %v3800 = vpop.trf.xlu0
    %v3801 = vpop.trf.xlu0
    %v3802 = vpop.trf.xlu0
    %v3803 = vpop.trf.xlu0
    %v3804 = vpop.trf.xlu0
    %v3805 = vpop.trf.xlu0
    %v3806 = vpop.trf.xlu0
    %v3807 = vpop.trf.xlu0
    %3808 = vxpose.xlu0.b32.start [1/16] %v2926, 128
    %3809 = vxpose.xlu0.b32.cont [2/16] %v2931, 128
    %3810 = vxpose.xlu0.b32.cont [3/16] 0.0, 128
    %3811 = vxpose.xlu0.b32.cont [4/16] 0.0, 128
    %3812 = vxpose.xlu0.b32.cont [5/16] 0.0, 128
    %3813 = vxpose.xlu0.b32.cont [6/16] 0.0, 128
    %3814 = vxpose.xlu0.b32.cont [7/16] 0.0, 128
    %3815 = vxpose.xlu0.b32.cont [8/16] 0.0, 128
    %3816 = vxpose.xlu0.b32.cont [9/16] 0.0, 128
    %3817 = vxpose.xlu0.b32.cont [10/16] 0.0, 128
    %3818 = vxpose.xlu0.b32.cont [11/16] 0.0, 128
    %3819 = vxpose.xlu0.b32.cont [12/16] 0.0, 128
    %3820 = vxpose.xlu0.b32.cont [13/16] 0.0, 128
    %3821 = vxpose.xlu0.b32.cont [14/16] 0.0, 128
    %3822 = vxpose.xlu0.b32.cont [15/16] 0.0, 128
    %3823 = vxpose.xlu0.b32.end [16/16] 0.0, 128
    %v3824 = vpop.trf.xlu0
    %v3825 = vpop.trf.xlu0
    %v3826 = vpop.trf.xlu0
    %v3827 = vpop.trf.xlu0
    %v3828 = vpop.trf.xlu0
    %v3829 = vpop.trf.xlu0
    %v3830 = vpop.trf.xlu0
    %v3831 = vpop.trf.xlu0
    %v3832 = vpop.trf.xlu0
    %v3833 = vpop.trf.xlu0
    %v3834 = vpop.trf.xlu0
    %v3835 = vpop.trf.xlu0
    %v3836 = vpop.trf.xlu0
    %v3837 = vpop.trf.xlu0
    %v3838 = vpop.trf.xlu0
    %v3839 = vpop.trf.xlu0
    %3840 = vxpose.xlu0.b32.start [1/16] %v2936, 128
    %3841 = vxpose.xlu0.b32.cont [2/16] %v2941, 128
    %3842 = vxpose.xlu0.b32.cont [3/16] 0.0, 128
    %3843 = vxpose.xlu0.b32.cont [4/16] 0.0, 128
    %3844 = vxpose.xlu0.b32.cont [5/16] 0.0, 128
    %3845 = vxpose.xlu0.b32.cont [6/16] 0.0, 128
    %3846 = vxpose.xlu0.b32.cont [7/16] 0.0, 128
    %3847 = vxpose.xlu0.b32.cont [8/16] 0.0, 128
    %3848 = vxpose.xlu0.b32.cont [9/16] 0.0, 128
    %3849 = vxpose.xlu0.b32.cont [10/16] 0.0, 128
    %3850 = vxpose.xlu0.b32.cont [11/16] 0.0, 128
    %3851 = vxpose.xlu0.b32.cont [12/16] 0.0, 128
    %3852 = vxpose.xlu0.b32.cont [13/16] 0.0, 128
    %3853 = vxpose.xlu0.b32.cont [14/16] 0.0, 128
    %3854 = vxpose.xlu0.b32.cont [15/16] 0.0, 128
    %3855 = vxpose.xlu0.b32.end [16/16] 0.0, 128
    %v3856 = vpop.trf.xlu0
    %v3857 = vpop.trf.xlu0
    %v3858 = vpop.trf.xlu0
    %v3859 = vpop.trf.xlu0
    %v3860 = vpop.trf.xlu0
    %v3861 = vpop.trf.xlu0
    %v3862 = vpop.trf.xlu0
    %v3863 = vpop.trf.xlu0
    %v3864 = vpop.trf.xlu0
    %v3865 = vpop.trf.xlu0
    %v3866 = vpop.trf.xlu0
    %v3867 = vpop.trf.xlu0
    %v3868 = vpop.trf.xlu0
    %v3869 = vpop.trf.xlu0
    %v3870 = vpop.trf.xlu0
    %v3871 = vpop.trf.xlu0
    %3872 = vxpose.xlu0.b32.start [1/16] %v2946, 128
    %3873 = vxpose.xlu0.b32.cont [2/16] %v2951, 128
    %3874 = vxpose.xlu0.b32.cont [3/16] 0.0, 128
    %3875 = vxpose.xlu0.b32.cont [4/16] 0.0, 128
    %3876 = vxpose.xlu0.b32.cont [5/16] 0.0, 128
    %3877 = vxpose.xlu0.b32.cont [6/16] 0.0, 128
    %3878 = vxpose.xlu0.b32.cont [7/16] 0.0, 128
    %3879 = vxpose.xlu0.b32.cont [8/16] 0.0, 128
    %3880 = vxpose.xlu0.b32.cont [9/16] 0.0, 128
    %3881 = vxpose.xlu0.b32.cont [10/16] 0.0, 128
    %3882 = vxpose.xlu0.b32.cont [11/16] 0.0, 128
    %3883 = vxpose.xlu0.b32.cont [12/16] 0.0, 128
    %3884 = vxpose.xlu0.b32.cont [13/16] 0.0, 128
    %3885 = vxpose.xlu0.b32.cont [14/16] 0.0, 128
    %3886 = vxpose.xlu0.b32.cont [15/16] 0.0, 128
    %3887 = vxpose.xlu0.b32.end [16/16] 0.0, 128
    %v3888 = vpop.trf.xlu0
    %v3889 = vpop.trf.xlu0
    %v3890 = vpop.trf.xlu0
    %v3891 = vpop.trf.xlu0
    %v3892 = vpop.trf.xlu0
    %v3893 = vpop.trf.xlu0
    %v3894 = vpop.trf.xlu0
    %v3895 = vpop.trf.xlu0
    %v3896 = vpop.trf.xlu0
    %v3897 = vpop.trf.xlu0
    %v3898 = vpop.trf.xlu0
    %v3899 = vpop.trf.xlu0
    %v3900 = vpop.trf.xlu0
    %v3901 = vpop.trf.xlu0
    %v3902 = vpop.trf.xlu0
    %v3903 = vpop.trf.xlu0
    %3904 = vxpose.xlu0.b32.start [1/16] %v2956, 128
    %3905 = vxpose.xlu0.b32.cont [2/16] %v2961, 128
    %3906 = vxpose.xlu0.b32.cont [3/16] 0.0, 128
    %3907 = vxpose.xlu0.b32.cont [4/16] 0.0, 128
    %3908 = vxpose.xlu0.b32.cont [5/16] 0.0, 128
    %3909 = vxpose.xlu0.b32.cont [6/16] 0.0, 128
    %3910 = vxpose.xlu0.b32.cont [7/16] 0.0, 128
    %3911 = vxpose.xlu0.b32.cont [8/16] 0.0, 128
    %3912 = vxpose.xlu0.b32.cont [9/16] 0.0, 128
    %3913 = vxpose.xlu0.b32.cont [10/16] 0.0, 128
    %3914 = vxpose.xlu0.b32.cont [11/16] 0.0, 128
    %3915 = vxpose.xlu0.b32.cont [12/16] 0.0, 128
    %3916 = vxpose.xlu0.b32.cont [13/16] 0.0, 128
    %3917 = vxpose.xlu0.b32.cont [14/16] 0.0, 128
    %3918 = vxpose.xlu0.b32.cont [15/16] 0.0, 128
    %3919 = vxpose.xlu0.b32.end [16/16] 0.0, 128
    %v3920 = vpop.trf.xlu0
    %v3921 = vpop.trf.xlu0
    %v3922 = vpop.trf.xlu0
    %v3923 = vpop.trf.xlu0
    %v3924 = vpop.trf.xlu0
    %v3925 = vpop.trf.xlu0
    %v3926 = vpop.trf.xlu0
    %v3927 = vpop.trf.xlu0
    %v3928 = vpop.trf.xlu0
    %v3929 = vpop.trf.xlu0
    %v3930 = vpop.trf.xlu0
    %v3931 = vpop.trf.xlu0
    %v3932 = vpop.trf.xlu0
    %v3933 = vpop.trf.xlu0
    %v3934 = vpop.trf.xlu0
    %v3935 = vpop.trf.xlu0
    %3936 = vxpose.xlu0.b32.start [1/16] %v2966, 128
    %3937 = vxpose.xlu0.b32.cont [2/16] %v2971, 128
    %3938 = vxpose.xlu0.b32.cont [3/16] 0.0, 128
    %3939 = vxpose.xlu0.b32.cont [4/16] 0.0, 128
    %3940 = vxpose.xlu0.b32.cont [5/16] 0.0, 128
    %3941 = vxpose.xlu0.b32.cont [6/16] 0.0, 128
    %3942 = vxpose.xlu0.b32.cont [7/16] 0.0, 128
    %3943 = vxpose.xlu0.b32.cont [8/16] 0.0, 128
    %3944 = vxpose.xlu0.b32.cont [9/16] 0.0, 128
    %3945 = vxpose.xlu0.b32.cont [10/16] 0.0, 128
    %3946 = vxpose.xlu0.b32.cont [11/16] 0.0, 128
    %3947 = vxpose.xlu0.b32.cont [12/16] 0.0, 128
    %3948 = vxpose.xlu0.b32.cont [13/16] 0.0, 128
    %3949 = vxpose.xlu0.b32.cont [14/16] 0.0, 128
    %3950 = vxpose.xlu0.b32.cont [15/16] 0.0, 128
    %3951 = vxpose.xlu0.b32.end [16/16] 0.0, 128
    %v3952 = vpop.trf.xlu0
    %v3953 = vpop.trf.xlu0
    %v3954 = vpop.trf.xlu0
    %v3955 = vpop.trf.xlu0
    %v3956 = vpop.trf.xlu0
    %v3957 = vpop.trf.xlu0
    %v3958 = vpop.trf.xlu0
    %v3959 = vpop.trf.xlu0
    %v3960 = vpop.trf.xlu0
    %v3961 = vpop.trf.xlu0
    %v3962 = vpop.trf.xlu0
    %v3963 = vpop.trf.xlu0
    %v3964 = vpop.trf.xlu0
    %v3965 = vpop.trf.xlu0
    %v3966 = vpop.trf.xlu0
    %v3967 = vpop.trf.xlu0
    %3968 = vxpose.xlu0.b32.start [1/16] %v2976, 128
    %3969 = vxpose.xlu0.b32.cont [2/16] %v2981, 128
    %3970 = vxpose.xlu0.b32.cont [3/16] 0.0, 128
    %3971 = vxpose.xlu0.b32.cont [4/16] 0.0, 128
    %3972 = vxpose.xlu0.b32.cont [5/16] 0.0, 128
    %3973 = vxpose.xlu0.b32.cont [6/16] 0.0, 128
    %3974 = vxpose.xlu0.b32.cont [7/16] 0.0, 128
    %3975 = vxpose.xlu0.b32.cont [8/16] 0.0, 128
    %3976 = vxpose.xlu0.b32.cont [9/16] 0.0, 128
    %3977 = vxpose.xlu0.b32.cont [10/16] 0.0, 128
    %3978 = vxpose.xlu0.b32.cont [11/16] 0.0, 128
    %3979 = vxpose.xlu0.b32.cont [12/16] 0.0, 128
    %3980 = vxpose.xlu0.b32.cont [13/16] 0.0, 128
    %3981 = vxpose.xlu0.b32.cont [14/16] 0.0, 128
    %3982 = vxpose.xlu0.b32.cont [15/16] 0.0, 128
    %3983 = vxpose.xlu0.b32.end [16/16] 0.0, 128
    %v3984 = vpop.trf.xlu0
    %v3985 = vpop.trf.xlu0
    %v3986 = vpop.trf.xlu0
    %v3987 = vpop.trf.xlu0
    %v3988 = vpop.trf.xlu0
    %v3989 = vpop.trf.xlu0
    %v3990 = vpop.trf.xlu0
    %v3991 = vpop.trf.xlu0
    %v3992 = vpop.trf.xlu0
    %v3993 = vpop.trf.xlu0
    %v3994 = vpop.trf.xlu0
    %v3995 = vpop.trf.xlu0
    %v3996 = vpop.trf.xlu0
    %v3997 = vpop.trf.xlu0
    %v3998 = vpop.trf.xlu0
    %v3999 = vpop.trf.xlu0
    %4000 = vxpose.xlu0.b32.start [1/16] %v2986, 128
    %4001 = vxpose.xlu0.b32.cont [2/16] %v2991, 128
    %4002 = vxpose.xlu0.b32.cont [3/16] 0.0, 128
    %4003 = vxpose.xlu0.b32.cont [4/16] 0.0, 128
    %4004 = vxpose.xlu0.b32.cont [5/16] 0.0, 128
    %4005 = vxpose.xlu0.b32.cont [6/16] 0.0, 128
    %4006 = vxpose.xlu0.b32.cont [7/16] 0.0, 128
    %4007 = vxpose.xlu0.b32.cont [8/16] 0.0, 128
    %4008 = vxpose.xlu0.b32.cont [9/16] 0.0, 128
    %4009 = vxpose.xlu0.b32.cont [10/16] 0.0, 128
    %4010 = vxpose.xlu0.b32.cont [11/16] 0.0, 128
    %4011 = vxpose.xlu0.b32.cont [12/16] 0.0, 128
    %4012 = vxpose.xlu0.b32.cont [13/16] 0.0, 128
    %4013 = vxpose.xlu0.b32.cont [14/16] 0.0, 128
    %4014 = vxpose.xlu0.b32.cont [15/16] 0.0, 128
    %4015 = vxpose.xlu0.b32.end [16/16] 0.0, 128
    %v4016 = vpop.trf.xlu0
    %v4017 = vpop.trf.xlu0
    %v4018 = vpop.trf.xlu0
    %v4019 = vpop.trf.xlu0
    %v4020 = vpop.trf.xlu0
    %v4021 = vpop.trf.xlu0
    %v4022 = vpop.trf.xlu0
    %v4023 = vpop.trf.xlu0
    %v4024 = vpop.trf.xlu0
    %v4025 = vpop.trf.xlu0
    %v4026 = vpop.trf.xlu0
    %v4027 = vpop.trf.xlu0
    %v4028 = vpop.trf.xlu0
    %v4029 = vpop.trf.xlu0
    %v4030 = vpop.trf.xlu0
    %v4031 = vpop.trf.xlu0
    %4032 = vxpose.xlu0.b32.start [1/16] %v2996, 128
    %4033 = vxpose.xlu0.b32.cont [2/16] %v3001, 128
    %4034 = vxpose.xlu0.b32.cont [3/16] 0.0, 128
    %4035 = vxpose.xlu0.b32.cont [4/16] 0.0, 128
    %4036 = vxpose.xlu0.b32.cont [5/16] 0.0, 128
    %4037 = vxpose.xlu0.b32.cont [6/16] 0.0, 128
    %4038 = vxpose.xlu0.b32.cont [7/16] 0.0, 128
    %4039 = vxpose.xlu0.b32.cont [8/16] 0.0, 128
    %4040 = vxpose.xlu0.b32.cont [9/16] 0.0, 128
    %4041 = vxpose.xlu0.b32.cont [10/16] 0.0, 128
    %4042 = vxpose.xlu0.b32.cont [11/16] 0.0, 128
    %4043 = vxpose.xlu0.b32.cont [12/16] 0.0, 128
    %4044 = vxpose.xlu0.b32.cont [13/16] 0.0, 128
    %4045 = vxpose.xlu0.b32.cont [14/16] 0.0, 128
    %4046 = vxpose.xlu0.b32.cont [15/16] 0.0, 128
    %4047 = vxpose.xlu0.b32.end [16/16] 0.0, 128
    %v4048 = vpop.trf.xlu0
    %v4049 = vpop.trf.xlu0
    %v4050 = vpop.trf.xlu0
    %v4051 = vpop.trf.xlu0
    %v4052 = vpop.trf.xlu0
    %v4053 = vpop.trf.xlu0
    %v4054 = vpop.trf.xlu0
    %v4055 = vpop.trf.xlu0
    %v4056 = vpop.trf.xlu0
    %v4057 = vpop.trf.xlu0
    %v4058 = vpop.trf.xlu0
    %v4059 = vpop.trf.xlu0
    %v4060 = vpop.trf.xlu0
    %v4061 = vpop.trf.xlu0
    %v4062 = vpop.trf.xlu0
    %v4063 = vpop.trf.xlu0
    %4064 = vxpose.xlu0.b32.start [1/16] %v3006, 128
    %4065 = vxpose.xlu0.b32.cont [2/16] %v3011, 128
    %4066 = vxpose.xlu0.b32.cont [3/16] 0.0, 128
    %4067 = vxpose.xlu0.b32.cont [4/16] 0.0, 128
    %4068 = vxpose.xlu0.b32.cont [5/16] 0.0, 128
    %4069 = vxpose.xlu0.b32.cont [6/16] 0.0, 128
    %4070 = vxpose.xlu0.b32.cont [7/16] 0.0, 128
    %4071 = vxpose.xlu0.b32.cont [8/16] 0.0, 128
    %4072 = vxpose.xlu0.b32.cont [9/16] 0.0, 128
    %4073 = vxpose.xlu0.b32.cont [10/16] 0.0, 128
    %4074 = vxpose.xlu0.b32.cont [11/16] 0.0, 128
    %4075 = vxpose.xlu0.b32.cont [12/16] 0.0, 128
    %4076 = vxpose.xlu0.b32.cont [13/16] 0.0, 128
    %4077 = vxpose.xlu0.b32.cont [14/16] 0.0, 128
    %4078 = vxpose.xlu0.b32.cont [15/16] 0.0, 128
    %4079 = vxpose.xlu0.b32.end [16/16] 0.0, 128
    %v4080 = vpop.trf.xlu0
    %v4081 = vpop.trf.xlu0
    %v4082 = vpop.trf.xlu0
    %v4083 = vpop.trf.xlu0
    %v4084 = vpop.trf.xlu0
    %v4085 = vpop.trf.xlu0
    %v4086 = vpop.trf.xlu0
    %v4087 = vpop.trf.xlu0
    %v4088 = vpop.trf.xlu0
    %v4089 = vpop.trf.xlu0
    %v4090 = vpop.trf.xlu0
    %v4091 = vpop.trf.xlu0
    %v4092 = vpop.trf.xlu0
    %v4093 = vpop.trf.xlu0
    %v4094 = vpop.trf.xlu0
    %v4095 = vpop.trf.xlu0
    %4096 = vxpose.xlu0.b32.start [1/16] %v3016, 128
    %4097 = vxpose.xlu0.b32.cont [2/16] %v3021, 128
    %4098 = vxpose.xlu0.b32.cont [3/16] 0.0, 128
    %4099 = vxpose.xlu0.b32.cont [4/16] 0.0, 128
    %4100 = vxpose.xlu0.b32.cont [5/16] 0.0, 128
    %4101 = vxpose.xlu0.b32.cont [6/16] 0.0, 128
    %4102 = vxpose.xlu0.b32.cont [7/16] 0.0, 128
    %4103 = vxpose.xlu0.b32.cont [8/16] 0.0, 128
    %4104 = vxpose.xlu0.b32.cont [9/16] 0.0, 128
    %4105 = vxpose.xlu0.b32.cont [10/16] 0.0, 128
    %4106 = vxpose.xlu0.b32.cont [11/16] 0.0, 128
    %4107 = vxpose.xlu0.b32.cont [12/16] 0.0, 128
    %4108 = vxpose.xlu0.b32.cont [13/16] 0.0, 128
    %4109 = vxpose.xlu0.b32.cont [14/16] 0.0, 128
    %4110 = vxpose.xlu0.b32.cont [15/16] 0.0, 128
    %4111 = vxpose.xlu0.b32.end [16/16] 0.0, 128
    %v4112 = vpop.trf.xlu0
    %v4113 = vpop.trf.xlu0
    %v4114 = vpop.trf.xlu0
    %v4115 = vpop.trf.xlu0
    %v4116 = vpop.trf.xlu0
    %v4117 = vpop.trf.xlu0
    %v4118 = vpop.trf.xlu0
    %v4119 = vpop.trf.xlu0
    %v4120 = vpop.trf.xlu0
    %v4121 = vpop.trf.xlu0
    %v4122 = vpop.trf.xlu0
    %v4123 = vpop.trf.xlu0
    %v4124 = vpop.trf.xlu0
    %v4125 = vpop.trf.xlu0
    %v4126 = vpop.trf.xlu0
    %v4127 = vpop.trf.xlu0
    %4128 = vxpose.xlu0.b32.start [1/16] %v3026, 128
    %4129 = vxpose.xlu0.b32.cont [2/16] %v3031, 128
    %4130 = vxpose.xlu0.b32.cont [3/16] 0.0, 128
    %4131 = vxpose.xlu0.b32.cont [4/16] 0.0, 128
    %4132 = vxpose.xlu0.b32.cont [5/16] 0.0, 128
    %4133 = vxpose.xlu0.b32.cont [6/16] 0.0, 128
    %4134 = vxpose.xlu0.b32.cont [7/16] 0.0, 128
    %4135 = vxpose.xlu0.b32.cont [8/16] 0.0, 128
    %4136 = vxpose.xlu0.b32.cont [9/16] 0.0, 128
    %4137 = vxpose.xlu0.b32.cont [10/16] 0.0, 128
    %4138 = vxpose.xlu0.b32.cont [11/16] 0.0, 128
    %4139 = vxpose.xlu0.b32.cont [12/16] 0.0, 128
    %4140 = vxpose.xlu0.b32.cont [13/16] 0.0, 128
    %4141 = vxpose.xlu0.b32.cont [14/16] 0.0, 128
    %4142 = vxpose.xlu0.b32.cont [15/16] 0.0, 128
    %4143 = vxpose.xlu0.b32.end [16/16] 0.0, 128
    %v4144 = vpop.trf.xlu0
    %v4145 = vpop.trf.xlu0
    %v4146 = vpop.trf.xlu0
    %v4147 = vpop.trf.xlu0
    %v4148 = vpop.trf.xlu0
    %v4149 = vpop.trf.xlu0
    %v4150 = vpop.trf.xlu0
    %v4151 = vpop.trf.xlu0
    %v4152 = vpop.trf.xlu0
    %v4153 = vpop.trf.xlu0
    %v4154 = vpop.trf.xlu0
    %v4155 = vpop.trf.xlu0
    %v4156 = vpop.trf.xlu0
    %v4157 = vpop.trf.xlu0
    %v4158 = vpop.trf.xlu0
    %v4159 = vpop.trf.xlu0
    %4160 = vxpose.xlu0.b32.start [1/16] %v3036, 128
    %4161 = vxpose.xlu0.b32.cont [2/16] %v3041, 128
    %4162 = vxpose.xlu0.b32.cont [3/16] 0.0, 128
    %4163 = vxpose.xlu0.b32.cont [4/16] 0.0, 128
    %4164 = vxpose.xlu0.b32.cont [5/16] 0.0, 128
    %4165 = vxpose.xlu0.b32.cont [6/16] 0.0, 128
    %4166 = vxpose.xlu0.b32.cont [7/16] 0.0, 128
    %4167 = vxpose.xlu0.b32.cont [8/16] 0.0, 128
    %4168 = vxpose.xlu0.b32.cont [9/16] 0.0, 128
    %4169 = vxpose.xlu0.b32.cont [10/16] 0.0, 128
    %4170 = vxpose.xlu0.b32.cont [11/16] 0.0, 128
    %4171 = vxpose.xlu0.b32.cont [12/16] 0.0, 128
    %4172 = vxpose.xlu0.b32.cont [13/16] 0.0, 128
    %4173 = vxpose.xlu0.b32.cont [14/16] 0.0, 128
    %4174 = vxpose.xlu0.b32.cont [15/16] 0.0, 128
    %4175 = vxpose.xlu0.b32.end [16/16] 0.0, 128
    %v4176 = vpop.trf.xlu0
    %v4177 = vpop.trf.xlu0
    %v4178 = vpop.trf.xlu0
    %v4179 = vpop.trf.xlu0
    %v4180 = vpop.trf.xlu0
    %v4181 = vpop.trf.xlu0
    %v4182 = vpop.trf.xlu0
    %v4183 = vpop.trf.xlu0
    %v4184 = vpop.trf.xlu0
    %v4185 = vpop.trf.xlu0
    %v4186 = vpop.trf.xlu0
    %v4187 = vpop.trf.xlu0
    %v4188 = vpop.trf.xlu0
    %v4189 = vpop.trf.xlu0
    %v4190 = vpop.trf.xlu0
    %v4191 = vpop.trf.xlu0
    %4192 = vxpose.xlu0.b32.start [1/16] %v3046, 128
    %4193 = vxpose.xlu0.b32.cont [2/16] %v3051, 128
    %4194 = vxpose.xlu0.b32.cont [3/16] 0.0, 128
    %4195 = vxpose.xlu0.b32.cont [4/16] 0.0, 128
    %4196 = vxpose.xlu0.b32.cont [5/16] 0.0, 128
    %4197 = vxpose.xlu0.b32.cont [6/16] 0.0, 128
    %4198 = vxpose.xlu0.b32.cont [7/16] 0.0, 128
    %4199 = vxpose.xlu0.b32.cont [8/16] 0.0, 128
    %4200 = vxpose.xlu0.b32.cont [9/16] 0.0, 128
    %4201 = vxpose.xlu0.b32.cont [10/16] 0.0, 128
    %4202 = vxpose.xlu0.b32.cont [11/16] 0.0, 128
    %4203 = vxpose.xlu0.b32.cont [12/16] 0.0, 128
    %4204 = vxpose.xlu0.b32.cont [13/16] 0.0, 128
    %4205 = vxpose.xlu0.b32.cont [14/16] 0.0, 128
    %4206 = vxpose.xlu0.b32.cont [15/16] 0.0, 128
    %4207 = vxpose.xlu0.b32.end [16/16] 0.0, 128
    %v4208 = vpop.trf.xlu0
    %v4209 = vpop.trf.xlu0
    %v4210 = vpop.trf.xlu0
    %v4211 = vpop.trf.xlu0
    %v4212 = vpop.trf.xlu0
    %v4213 = vpop.trf.xlu0
    %v4214 = vpop.trf.xlu0
    %v4215 = vpop.trf.xlu0
    %v4216 = vpop.trf.xlu0
    %v4217 = vpop.trf.xlu0
    %v4218 = vpop.trf.xlu0
    %v4219 = vpop.trf.xlu0
    %v4220 = vpop.trf.xlu0
    %v4221 = vpop.trf.xlu0
    %v4222 = vpop.trf.xlu0
    %v4223 = vpop.trf.xlu0
    %4224 = vxpose.xlu0.b32.start [1/16] %v3056, 128
    %4225 = vxpose.xlu0.b32.cont [2/16] %v3061, 128
    %4226 = vxpose.xlu0.b32.cont [3/16] 0.0, 128
    %4227 = vxpose.xlu0.b32.cont [4/16] 0.0, 128
    %4228 = vxpose.xlu0.b32.cont [5/16] 0.0, 128
    %4229 = vxpose.xlu0.b32.cont [6/16] 0.0, 128
    %4230 = vxpose.xlu0.b32.cont [7/16] 0.0, 128
    %4231 = vxpose.xlu0.b32.cont [8/16] 0.0, 128
    %4232 = vxpose.xlu0.b32.cont [9/16] 0.0, 128
    %4233 = vxpose.xlu0.b32.cont [10/16] 0.0, 128
    %4234 = vxpose.xlu0.b32.cont [11/16] 0.0, 128
    %4235 = vxpose.xlu0.b32.cont [12/16] 0.0, 128
    %4236 = vxpose.xlu0.b32.cont [13/16] 0.0, 128
    %4237 = vxpose.xlu0.b32.cont [14/16] 0.0, 128
    %4238 = vxpose.xlu0.b32.cont [15/16] 0.0, 128
    %4239 = vxpose.xlu0.b32.end [16/16] 0.0, 128
    %v4240 = vpop.trf.xlu0
    %v4241 = vpop.trf.xlu0
    %v4242 = vpop.trf.xlu0
    %v4243 = vpop.trf.xlu0
    %v4244 = vpop.trf.xlu0
    %v4245 = vpop.trf.xlu0
    %v4246 = vpop.trf.xlu0
    %v4247 = vpop.trf.xlu0
    %v4248 = vpop.trf.xlu0
    %v4249 = vpop.trf.xlu0
    %v4250 = vpop.trf.xlu0
    %v4251 = vpop.trf.xlu0
    %v4252 = vpop.trf.xlu0
    %v4253 = vpop.trf.xlu0
    %v4254 = vpop.trf.xlu0
    %v4255 = vpop.trf.xlu0
    %4256 = vxpose.xlu0.b32.start [1/16] %v3066, 128
    %4257 = vxpose.xlu0.b32.cont [2/16] %v3071, 128
    %4258 = vxpose.xlu0.b32.cont [3/16] 0.0, 128
    %4259 = vxpose.xlu0.b32.cont [4/16] 0.0, 128
    %4260 = vxpose.xlu0.b32.cont [5/16] 0.0, 128
    %4261 = vxpose.xlu0.b32.cont [6/16] 0.0, 128
    %4262 = vxpose.xlu0.b32.cont [7/16] 0.0, 128
    %4263 = vxpose.xlu0.b32.cont [8/16] 0.0, 128
    %4264 = vxpose.xlu0.b32.cont [9/16] 0.0, 128
    %4265 = vxpose.xlu0.b32.cont [10/16] 0.0, 128
    %4266 = vxpose.xlu0.b32.cont [11/16] 0.0, 128
    %4267 = vxpose.xlu0.b32.cont [12/16] 0.0, 128
    %4268 = vxpose.xlu0.b32.cont [13/16] 0.0, 128
    %4269 = vxpose.xlu0.b32.cont [14/16] 0.0, 128
    %4270 = vxpose.xlu0.b32.cont [15/16] 0.0, 128
    %4271 = vxpose.xlu0.b32.end [16/16] 0.0, 128
    %v4272 = vpop.trf.xlu0
    %v4273 = vpop.trf.xlu0
    %v4274 = vpop.trf.xlu0
    %v4275 = vpop.trf.xlu0
    %v4276 = vpop.trf.xlu0
    %v4277 = vpop.trf.xlu0
    %v4278 = vpop.trf.xlu0
    %v4279 = vpop.trf.xlu0
    %v4280 = vpop.trf.xlu0
    %v4281 = vpop.trf.xlu0
    %v4282 = vpop.trf.xlu0
    %v4283 = vpop.trf.xlu0
    %v4284 = vpop.trf.xlu0
    %v4285 = vpop.trf.xlu0
    %v4286 = vpop.trf.xlu0
    %v4287 = vpop.trf.xlu0
    %4288 = vxpose.xlu0.b32.start [1/16] %v3076, 128
    %4289 = vxpose.xlu0.b32.cont [2/16] %v3081, 128
    %4290 = vxpose.xlu0.b32.cont [3/16] 0.0, 128
    %4291 = vxpose.xlu0.b32.cont [4/16] 0.0, 128
    %4292 = vxpose.xlu0.b32.cont [5/16] 0.0, 128
    %4293 = vxpose.xlu0.b32.cont [6/16] 0.0, 128
    %4294 = vxpose.xlu0.b32.cont [7/16] 0.0, 128
    %4295 = vxpose.xlu0.b32.cont [8/16] 0.0, 128
    %4296 = vxpose.xlu0.b32.cont [9/16] 0.0, 128
    %4297 = vxpose.xlu0.b32.cont [10/16] 0.0, 128
    %4298 = vxpose.xlu0.b32.cont [11/16] 0.0, 128
    %4299 = vxpose.xlu0.b32.cont [12/16] 0.0, 128
    %4300 = vxpose.xlu0.b32.cont [13/16] 0.0, 128
    %4301 = vxpose.xlu0.b32.cont [14/16] 0.0, 128
    %4302 = vxpose.xlu0.b32.cont [15/16] 0.0, 128
    %4303 = vxpose.xlu0.b32.end [16/16] 0.0, 128
    %v4304 = vpop.trf.xlu0
    %v4305 = vpop.trf.xlu0
    %v4306 = vpop.trf.xlu0
    %v4307 = vpop.trf.xlu0
    %v4308 = vpop.trf.xlu0
    %v4309 = vpop.trf.xlu0
    %v4310 = vpop.trf.xlu0
    %v4311 = vpop.trf.xlu0
    %v4312 = vpop.trf.xlu0
    %v4313 = vpop.trf.xlu0
    %v4314 = vpop.trf.xlu0
    %v4315 = vpop.trf.xlu0
    %v4316 = vpop.trf.xlu0
    %v4317 = vpop.trf.xlu0
    %v4318 = vpop.trf.xlu0
    %v4319 = vpop.trf.xlu0
    %4320 = vxpose.xlu0.b32.start [1/16] %v3086, 128
    %4321 = vxpose.xlu0.b32.cont [2/16] %v3091, 128
    %4322 = vxpose.xlu0.b32.cont [3/16] 0.0, 128
    %4323 = vxpose.xlu0.b32.cont [4/16] 0.0, 128
    %4324 = vxpose.xlu0.b32.cont [5/16] 0.0, 128
    %4325 = vxpose.xlu0.b32.cont [6/16] 0.0, 128
    %4326 = vxpose.xlu0.b32.cont [7/16] 0.0, 128
    %4327 = vxpose.xlu0.b32.cont [8/16] 0.0, 128
    %4328 = vxpose.xlu0.b32.cont [9/16] 0.0, 128
    %4329 = vxpose.xlu0.b32.cont [10/16] 0.0, 128
    %4330 = vxpose.xlu0.b32.cont [11/16] 0.0, 128
    %4331 = vxpose.xlu0.b32.cont [12/16] 0.0, 128
    %4332 = vxpose.xlu0.b32.cont [13/16] 0.0, 128
    %4333 = vxpose.xlu0.b32.cont [14/16] 0.0, 128
    %4334 = vxpose.xlu0.b32.cont [15/16] 0.0, 128
    %4335 = vxpose.xlu0.b32.end [16/16] 0.0, 128
    %v4336 = vpop.trf.xlu0
    %v4337 = vpop.trf.xlu0
    %v4338 = vpop.trf.xlu0
    %v4339 = vpop.trf.xlu0
    %v4340 = vpop.trf.xlu0
    %v4341 = vpop.trf.xlu0
    %v4342 = vpop.trf.xlu0
    %v4343 = vpop.trf.xlu0
    %v4344 = vpop.trf.xlu0
    %v4345 = vpop.trf.xlu0
    %v4346 = vpop.trf.xlu0
    %v4347 = vpop.trf.xlu0
    %v4348 = vpop.trf.xlu0
    %v4349 = vpop.trf.xlu0
    %v4350 = vpop.trf.xlu0
    %v4351 = vpop.trf.xlu0
    %4352 = vxpose.xlu0.b32.start [1/16] %v3096, 128
    %4353 = vxpose.xlu0.b32.cont [2/16] %v3101, 128
    %4354 = vxpose.xlu0.b32.cont [3/16] 0.0, 128
    %4355 = vxpose.xlu0.b32.cont [4/16] 0.0, 128
    %4356 = vxpose.xlu0.b32.cont [5/16] 0.0, 128
    %4357 = vxpose.xlu0.b32.cont [6/16] 0.0, 128
    %4358 = vxpose.xlu0.b32.cont [7/16] 0.0, 128
    %4359 = vxpose.xlu0.b32.cont [8/16] 0.0, 128
    %4360 = vxpose.xlu0.b32.cont [9/16] 0.0, 128
    %4361 = vxpose.xlu0.b32.cont [10/16] 0.0, 128
    %4362 = vxpose.xlu0.b32.cont [11/16] 0.0, 128
    %4363 = vxpose.xlu0.b32.cont [12/16] 0.0, 128
    %4364 = vxpose.xlu0.b32.cont [13/16] 0.0, 128
    %4365 = vxpose.xlu0.b32.cont [14/16] 0.0, 128
    %4366 = vxpose.xlu0.b32.cont [15/16] 0.0, 128
    %4367 = vxpose.xlu0.b32.end [16/16] 0.0, 128
    %v4368 = vpop.trf.xlu0
    %v4369 = vpop.trf.xlu0
    %v4370 = vpop.trf.xlu0
    %v4371 = vpop.trf.xlu0
    %v4372 = vpop.trf.xlu0
    %v4373 = vpop.trf.xlu0
    %v4374 = vpop.trf.xlu0
    %v4375 = vpop.trf.xlu0
    %v4376 = vpop.trf.xlu0
    %v4377 = vpop.trf.xlu0
    %v4378 = vpop.trf.xlu0
    %v4379 = vpop.trf.xlu0
    %v4380 = vpop.trf.xlu0
    %v4381 = vpop.trf.xlu0
    %v4382 = vpop.trf.xlu0
    %v4383 = vpop.trf.xlu0
    %v4384 = vmul.f32 %v3120, %v3376
    %v4385 = vmul.f32 %v3121, %v3377
    %v4386 = vmul.f32 %v3152, %v3408
    %v4387 = vmul.f32 %v3153, %v3409
    %v4388 = vmul.f32 %v3184, %v3440
    %v4389 = vmul.f32 %v3185, %v3441
    %v4390 = vmul.f32 %v3216, %v3472
    %v4391 = vmul.f32 %v3217, %v3473
    %v4392 = vmul.f32 %v3248, %v3504
    %v4393 = vmul.f32 %v3249, %v3505
    %v4394 = vmul.f32 %v3280, %v3536
    %v4395 = vmul.f32 %v3281, %v3537
    %v4396 = vmul.f32 %v3312, %v3568
    %v4397 = vmul.f32 %v3313, %v3569
    %v4398 = vmul.f32 %v3344, %v3600
    %v4399 = vmul.f32 %v3345, %v3601
    %v4400 = vmul.f32 %v3120, %v3120
    %v4401 = vmul.f32 %v3121, %v3121
    %v4402 = vmul.f32 %v3152, %v3152
    %v4403 = vmul.f32 %v3153, %v3153
    %v4404 = vmul.f32 %v3184, %v3184
    %v4405 = vmul.f32 %v3185, %v3185
    %v4406 = vmul.f32 %v3216, %v3216
    %v4407 = vmul.f32 %v3217, %v3217
    %v4408 = vmul.f32 %v3248, %v3248
    %v4409 = vmul.f32 %v3249, %v3249
    %v4410 = vmul.f32 %v3280, %v3280
    %v4411 = vmul.f32 %v3281, %v3281
    %v4412 = vmul.f32 %v3312, %v3312
    %v4413 = vmul.f32 %v3313, %v3313
    %v4414 = vmul.f32 %v3344, %v3344
    %v4415 = vmul.f32 %v3345, %v3345
    %v4416 = vmul.f32 %v3376, %v3376
    %v4417 = vmul.f32 %v3377, %v3377
    %v4418 = vmul.f32 %v3408, %v3408
    %v4419 = vmul.f32 %v3409, %v3409
    %v4420 = vmul.f32 %v3440, %v3440
    %v4421 = vmul.f32 %v3441, %v3441
    %v4422 = vmul.f32 %v3472, %v3472
    %v4423 = vmul.f32 %v3473, %v3473
    %v4424 = vmul.f32 %v3504, %v3504
    %v4425 = vmul.f32 %v3505, %v3505
    %v4426 = vmul.f32 %v3536, %v3536
    %v4427 = vmul.f32 %v3537, %v3537
    %v4428 = vmul.f32 %v3568, %v3568
    %v4429 = vmul.f32 %v3569, %v3569
    %v4430 = vmul.f32 %v3600, %v3600
    %v4431 = vmul.f32 %v3601, %v3601
    %v4432 = vmul.f32 %v4384, 2.0
    %v4433 = vmul.f32 %v4385, 2.0
    %v4434 = vmul.f32 %v4386, 2.0
    %v4435 = vmul.f32 %v4387, 2.0
    %v4436 = vmul.f32 %v4388, 2.0
    %v4437 = vmul.f32 %v4389, 2.0
    %v4438 = vmul.f32 %v4390, 2.0
    %v4439 = vmul.f32 %v4391, 2.0
    %v4440 = vmul.f32 %v4392, 2.0
    %v4441 = vmul.f32 %v4393, 2.0
    %v4442 = vmul.f32 %v4394, 2.0
    %v4443 = vmul.f32 %v4395, 2.0
    %v4444 = vmul.f32 %v4396, 2.0
    %v4445 = vmul.f32 %v4397, 2.0
    %v4446 = vmul.f32 %v4398, 2.0
    %v4447 = vmul.f32 %v4399, 2.0
    %v4448 = vadd.f32 %v4432, 0.0001
    %v4449 = vadd.f32 %v4433, 0.0001
    %v4450 = vadd.f32 %v4434, 0.0001
    %v4451 = vadd.f32 %v4435, 0.0001
    %v4452 = vadd.f32 %v4436, 0.0001
    %v4453 = vadd.f32 %v4437, 0.0001
    %v4454 = vadd.f32 %v4438, 0.0001
    %v4455 = vadd.f32 %v4439, 0.0001
    %v4456 = vadd.f32 %v4440, 0.0001
    %v4457 = vadd.f32 %v4441, 0.0001
    %v4458 = vadd.f32 %v4442, 0.0001
    %v4459 = vadd.f32 %v4443, 0.0001
    %v4460 = vadd.f32 %v4444, 0.0001
    %v4461 = vadd.f32 %v4445, 0.0001
    %v4462 = vadd.f32 %v4446, 0.0001
    %v4463 = vadd.f32 %v4447, 0.0001
    %v4464 = vsub.f32 %v4144, %v4384
    %v4465 = vsub.f32 %v4145, %v4385
    %v4466 = vsub.f32 %v4176, %v4386
    %v4467 = vsub.f32 %v4177, %v4387
    %v4468 = vsub.f32 %v4208, %v4388
    %v4469 = vsub.f32 %v4209, %v4389
    %v4470 = vsub.f32 %v4240, %v4390
    %v4471 = vsub.f32 %v4241, %v4391
    %v4472 = vsub.f32 %v4272, %v4392
    %v4473 = vsub.f32 %v4273, %v4393
    %v4474 = vsub.f32 %v4304, %v4394
    %v4475 = vsub.f32 %v4305, %v4395
    %v4476 = vsub.f32 %v4336, %v4396
    %v4477 = vsub.f32 %v4337, %v4397
    %v4478 = vsub.f32 %v4368, %v4398
    %v4479 = vsub.f32 %v4369, %v4399
    %v4480 = vmul.f32 %v4464, 2.0
    %v4481 = vmul.f32 %v4465, 2.0
    %v4482 = vmul.f32 %v4466, 2.0
    %v4483 = vmul.f32 %v4467, 2.0
    %v4484 = vmul.f32 %v4468, 2.0
    %v4485 = vmul.f32 %v4469, 2.0
    %v4486 = vmul.f32 %v4470, 2.0
    %v4487 = vmul.f32 %v4471, 2.0
    %v4488 = vmul.f32 %v4472, 2.0
    %v4489 = vmul.f32 %v4473, 2.0
    %v4490 = vmul.f32 %v4474, 2.0
    %v4491 = vmul.f32 %v4475, 2.0
    %v4492 = vmul.f32 %v4476, 2.0
    %v4493 = vmul.f32 %v4477, 2.0
    %v4494 = vmul.f32 %v4478, 2.0
    %v4495 = vmul.f32 %v4479, 2.0
    %v4496 = vadd.f32 %v4480, 0.0009
    %v4497 = vadd.f32 %v4481, 0.0009
    %v4498 = vadd.f32 %v4482, 0.0009
    %v4499 = vadd.f32 %v4483, 0.0009
    %v4500 = vadd.f32 %v4484, 0.0009
    %v4501 = vadd.f32 %v4485, 0.0009
    %v4502 = vadd.f32 %v4486, 0.0009
    %v4503 = vadd.f32 %v4487, 0.0009
    %v4504 = vadd.f32 %v4488, 0.0009
    %v4505 = vadd.f32 %v4489, 0.0009
    %v4506 = vadd.f32 %v4490, 0.0009
    %v4507 = vadd.f32 %v4491, 0.0009
    %v4508 = vadd.f32 %v4492, 0.0009
    %v4509 = vadd.f32 %v4493, 0.0009
    %v4510 = vadd.f32 %v4494, 0.0009
    %v4511 = vadd.f32 %v4495, 0.0009
    %v4512 = vmul.f32 %v4448, %v4496
    %v4513 = vmul.f32 %v4449, %v4497
    %v4514 = vmul.f32 %v4450, %v4498
    %v4515 = vmul.f32 %v4451, %v4499
    %v4516 = vmul.f32 %v4452, %v4500
    %v4517 = vmul.f32 %v4453, %v4501
    %v4518 = vmul.f32 %v4454, %v4502
    %v4519 = vmul.f32 %v4455, %v4503
    %v4520 = vmul.f32 %v4456, %v4504
    %v4521 = vmul.f32 %v4457, %v4505
    %v4522 = vmul.f32 %v4458, %v4506
    %v4523 = vmul.f32 %v4459, %v4507
    %v4524 = vmul.f32 %v4460, %v4508
    %v4525 = vmul.f32 %v4461, %v4509
    %v4526 = vmul.f32 %v4462, %v4510
    %v4527 = vmul.f32 %v4463, %v4511
    %v4528 = vadd.f32 %v4400, %v4416
    %v4529 = vadd.f32 %v4401, %v4417
    %v4530 = vadd.f32 %v4402, %v4418
    %v4531 = vadd.f32 %v4403, %v4419
    %v4532 = vadd.f32 %v4404, %v4420
    %v4533 = vadd.f32 %v4405, %v4421
    %v4534 = vadd.f32 %v4406, %v4422
    %v4535 = vadd.f32 %v4407, %v4423
    %v4536 = vadd.f32 %v4408, %v4424
    %v4537 = vadd.f32 %v4409, %v4425
    %v4538 = vadd.f32 %v4410, %v4426
    %v4539 = vadd.f32 %v4411, %v4427
    %v4540 = vadd.f32 %v4412, %v4428
    %v4541 = vadd.f32 %v4413, %v4429
    %v4542 = vadd.f32 %v4414, %v4430
    %v4543 = vadd.f32 %v4415, %v4431
    %v4544 = vadd.f32 %v4528, 0.0001
    %v4545 = vadd.f32 %v4529, 0.0001
    %v4546 = vadd.f32 %v4530, 0.0001
    %v4547 = vadd.f32 %v4531, 0.0001
    %v4548 = vadd.f32 %v4532, 0.0001
    %v4549 = vadd.f32 %v4533, 0.0001
    %v4550 = vadd.f32 %v4534, 0.0001
    %v4551 = vadd.f32 %v4535, 0.0001
    %v4552 = vadd.f32 %v4536, 0.0001
    %v4553 = vadd.f32 %v4537, 0.0001
    %v4554 = vadd.f32 %v4538, 0.0001
    %v4555 = vadd.f32 %v4539, 0.0001
    %v4556 = vadd.f32 %v4540, 0.0001
    %v4557 = vadd.f32 %v4541, 0.0001
    %v4558 = vadd.f32 %v4542, 0.0001
    %v4559 = vadd.f32 %v4543, 0.0001
    %v4560 = vsub.f32 %v3632, %v4400
    %v4561 = vsub.f32 %v3633, %v4401
    %v4562 = vsub.f32 %v3664, %v4402
    %v4563 = vsub.f32 %v3665, %v4403
    %v4564 = vsub.f32 %v3696, %v4404
    %v4565 = vsub.f32 %v3697, %v4405
    %v4566 = vsub.f32 %v3728, %v4406
    %v4567 = vsub.f32 %v3729, %v4407
    %v4568 = vsub.f32 %v3760, %v4408
    %v4569 = vsub.f32 %v3761, %v4409
    %v4570 = vsub.f32 %v3792, %v4410
    %v4571 = vsub.f32 %v3793, %v4411
    %v4572 = vsub.f32 %v3824, %v4412
    %v4573 = vsub.f32 %v3825, %v4413
    %v4574 = vsub.f32 %v3856, %v4414
    %v4575 = vsub.f32 %v3857, %v4415
    %v4576 = vsub.f32 %v3888, %v4416
    %v4577 = vsub.f32 %v3889, %v4417
    %v4578 = vsub.f32 %v3920, %v4418
    %v4579 = vsub.f32 %v3921, %v4419
    %v4580 = vsub.f32 %v3952, %v4420
    %v4581 = vsub.f32 %v3953, %v4421
    %v4582 = vsub.f32 %v3984, %v4422
    %v4583 = vsub.f32 %v3985, %v4423
    %v4584 = vsub.f32 %v4016, %v4424
    %v4585 = vsub.f32 %v4017, %v4425
    %v4586 = vsub.f32 %v4048, %v4426
    %v4587 = vsub.f32 %v4049, %v4427
    %v4588 = vsub.f32 %v4080, %v4428
    %v4589 = vsub.f32 %v4081, %v4429
    %v4590 = vsub.f32 %v4112, %v4430
    %v4591 = vsub.f32 %v4113, %v4431
    %v4592 = vadd.f32 %v4560, %v4576
    %v4593 = vadd.f32 %v4561, %v4577
    %v4594 = vadd.f32 %v4562, %v4578
    %v4595 = vadd.f32 %v4563, %v4579
    %v4596 = vadd.f32 %v4564, %v4580
    %v4597 = vadd.f32 %v4565, %v4581
    %v4598 = vadd.f32 %v4566, %v4582
    %v4599 = vadd.f32 %v4567, %v4583
    %v4600 = vadd.f32 %v4568, %v4584
    %v4601 = vadd.f32 %v4569, %v4585
    %v4602 = vadd.f32 %v4570, %v4586
    %v4603 = vadd.f32 %v4571, %v4587
    %v4604 = vadd.f32 %v4572, %v4588
    %v4605 = vadd.f32 %v4573, %v4589
    %v4606 = vadd.f32 %v4574, %v4590
    %v4607 = vadd.f32 %v4575, %v4591
    %v4608 = vadd.f32 %v4592, 0.0009
    %v4609 = vadd.f32 %v4593, 0.0009
    %v4610 = vadd.f32 %v4594, 0.0009
    %v4611 = vadd.f32 %v4595, 0.0009
    %v4612 = vadd.f32 %v4596, 0.0009
    %v4613 = vadd.f32 %v4597, 0.0009
    %v4614 = vadd.f32 %v4598, 0.0009
    %v4615 = vadd.f32 %v4599, 0.0009
    %v4616 = vadd.f32 %v4600, 0.0009
    %v4617 = vadd.f32 %v4601, 0.0009
    %v4618 = vadd.f32 %v4602, 0.0009
    %v4619 = vadd.f32 %v4603, 0.0009
    %v4620 = vadd.f32 %v4604, 0.0009
    %v4621 = vadd.f32 %v4605, 0.0009
    %v4622 = vadd.f32 %v4606, 0.0009
    %v4623 = vadd.f32 %v4607, 0.0009
    %v4624 = vmul.f32 %v4544, %v4608
    %v4625 = vmul.f32 %v4545, %v4609
    %v4626 = vmul.f32 %v4546, %v4610
    %v4627 = vmul.f32 %v4547, %v4611
    %v4628 = vmul.f32 %v4548, %v4612
    %v4629 = vmul.f32 %v4549, %v4613
    %v4630 = vmul.f32 %v4550, %v4614
    %v4631 = vmul.f32 %v4551, %v4615
    %v4632 = vmul.f32 %v4552, %v4616
    %v4633 = vmul.f32 %v4553, %v4617
    %v4634 = vmul.f32 %v4554, %v4618
    %v4635 = vmul.f32 %v4555, %v4619
    %v4636 = vmul.f32 %v4556, %v4620
    %v4637 = vmul.f32 %v4557, %v4621
    %v4638 = vmul.f32 %v4558, %v4622
    %v4639 = vmul.f32 %v4559, %v4623
    %v4640 = vrcp.pop %v4624
    %v4641 = vrcp.pop %v4625
    %v4642 = vrcp.pop %v4626
    %v4643 = vrcp.pop %v4627
    %v4644 = vrcp.pop %v4628
    %v4645 = vrcp.pop %v4629
    %v4646 = vrcp.pop %v4630
    %v4647 = vrcp.pop %v4631
    %v4648 = vrcp.pop %v4632
    %v4649 = vrcp.pop %v4633
    %v4650 = vrcp.pop %v4634
    %v4651 = vrcp.pop %v4635
    %v4652 = vrcp.pop %v4636
    %v4653 = vrcp.pop %v4637
    %v4654 = vrcp.pop %v4638
    %v4655 = vrcp.pop %v4639
    %v4656 = vmul.f32 %v4512, %v4640
    %v4657 = vmul.f32 %v4513, %v4641
    %v4658 = vmul.f32 %v4514, %v4642
    %v4659 = vmul.f32 %v4515, %v4643
    %v4660 = vmul.f32 %v4516, %v4644
    %v4661 = vmul.f32 %v4517, %v4645
    %v4662 = vmul.f32 %v4518, %v4646
    %v4663 = vmul.f32 %v4519, %v4647
    %v4664 = vmul.f32 %v4520, %v4648
    %v4665 = vmul.f32 %v4521, %v4649
    %v4666 = vmul.f32 %v4522, %v4650
    %v4667 = vmul.f32 %v4523, %v4651
    %v4668 = vmul.f32 %v4524, %v4652
    %v4669 = vmul.f32 %v4525, %v4653
    %v4670 = vmul.f32 %v4526, %v4654
    %v4671 = vmul.f32 %v4527, %v4655
    %v4672 = vsel %vm149, %v4656, 0.0
    %v4673 = vsel %vm149, %v4657, 0.0
    %v4674 = vadd.f32 %v4672, %v4673
    %v4675 = vsel %vm149, %v4658, 0.0
    %v4676 = vadd.f32 %v4674, %v4675
    %v4677 = vsel %vm149, %v4659, 0.0
    %v4678 = vadd.f32 %v4676, %v4677
    %v4679 = vsel %vm149, %v4660, 0.0
    %v4680 = vadd.f32 %v4678, %v4679
    %v4681 = vsel %vm149, %v4661, 0.0
    %v4682 = vadd.f32 %v4680, %v4681
    %v4683 = vsel %vm149, %v4662, 0.0
    %v4684 = vadd.f32 %v4682, %v4683
    %v4685 = vsel %vm149, %v4663, 0.0
    %v4686 = vadd.f32 %v4684, %v4685
    %v4687 = vsel %vm149, %v4664, 0.0
    %v4688 = vadd.f32 %v4686, %v4687
    %v4689 = vsel %vm149, %v4665, 0.0
    %v4690 = vadd.f32 %v4688, %v4689
    %v4691 = vsel %vm149, %v4666, 0.0
    %v4692 = vadd.f32 %v4690, %v4691
    %v4693 = vsel %vm149, %v4667, 0.0
    %v4694 = vadd.f32 %v4692, %v4693
    %v4695 = vsel %vm149, %v4668, 0.0
    %v4696 = vadd.f32 %v4694, %v4695
    %v4697 = vsel %vm149, %v4669, 0.0
    %v4698 = vadd.f32 %v4696, %v4697
    %v4699 = vsel %vm149, %v4670, 0.0
    %v4700 = vadd.f32 %v4698, %v4699
    %v4701 = vsel %vm149, %v4671, 0.0
    %v4702 = vadd.f32 %v4700, %v4701
    %4703 = vadd.xlane.f32.xlu0 %v4702
    %v4704 = vpop.xlane.xlu0 %4703
    %v4705 = vrot.slane %v4704, 4
    %v4706 = vadd.f32 %v4704, %v4705
    %v4707 = vrot.slane %v4706, 2
    %v4708 = vadd.f32 %v4706, %v4707
    %v4709 = vrot.slane %v4708, 1
    %v4710 = vadd.f32 %v4708, %v4709
    %s4711 = vtos %v4710
    %s4712 = sld [smem:[#allocation11]]
    %s4713 = sadd.f32 %s4712, %s189
    %s4714 = scalar_lea.smem [#allocation11], 0
    %4715 = sst [smem:[%s4714]] %s4713
    %s4716 = sld [smem:[#allocation11 + $0x1]]
    %s4717 = sadd.f32 %s4716, %s4711
    %s4718 = scalar_lea.smem [#allocation11], 1
    %4719 = sst [smem:[%s4718]] %s4717
    // Predicated region
    $region38: #{tpu_custom_call.1} parent=1 // pred_check
      %p4720 = pneg %p73
    $region39: #{tpu_custom_call.1} parent=1 // pred_check_branch
      %4722 = sbr.rel (%p4720) target = $region41
    $region40: #{tpu_custom_call.1} parent=1 // pred_region
      %s4723 = sld [smem:[#allocation11]]
      %s4724 = smul.f32 %s4723, 0.00048828125
      %4725 = sst [smem:[%s4714]] %s4724
      %s4726 = sld [smem:[#allocation11 + $0x1]]
      %s4727 = smul.f32 %s4726, 0.00048828125
      %s4728 = ssub.f32 1.0, %s4727
      %4729 = sst [smem:[%s4718]] %s4728
    $region41: #{tpu_custom_call.1} parent=1 // pred_fallthru
      _
    // Predicated region
    $region42: #{tpu_custom_call.1} parent=1 // pred_check
      _
    $region43: #{tpu_custom_call.1} parent=1 // pred_check_branch
      %4731 = sbr.rel (0) target = $region45
    $region44: #{tpu_custom_call.1} parent=1 // pred_region
      %s4733 = ssub.s32 16, 16
      %4734 = vsyncadd [#allocation5], %s4733
      %4737 = dma.smem_to_hbm [#allocation11], 16, %s4, [#allocation5]
    $region45: #{tpu_custom_call.1} parent=1 // pred_fallthru
      _
    // Predicated region
    $region46: #{tpu_custom_call.1} parent=1 // pred_check
      _
    $region47: #{tpu_custom_call.1} parent=1 // pred_check_branch
      %4739 = sbr.rel (0) target = $region49
    $region48: #{tpu_custom_call.1} parent=1 // pred_region
      %4740 = dma.done [#allocation5], 16
    $region49: #{tpu_custom_call.1} parent=1 // pred_fallthru
      _
    %4741 = sfence
    %4742 = vsyncpa [#allocation4], 1
    %4743 = vsyncpa [#allocation7], 1
    %4744 = vsyncpa [#allocation10], 1
    %4745 = vsyncpa [#allocation5], 1

</llo_original>
